<compile_context>
chip_gen: v5e
topology: v5e:2x2
jax: 0.10.0
libtpu: 0.0.40
codegen_flags: <defaults>
</compile_context>

<pallas_src>
import functools

import jax
import jax.numpy as jnp
from jax import lax
from jax.experimental import pallas as pl
from jax.experimental.pallas import tpu as pltpu

EPS = 1e-5
LANE = 128
CDT = jnp.bfloat16              # MXU-native compute dtype (one-hot exact in bf16)
VMEM_LIMIT = 48 * 1024 * 1024   # explicit scoped-VMEM cap, headroom under v7x 64 MiB


def _ceil_to(v, m):
    return ((v + m - 1) // m) * m


def _pad_to(a, axis, size):
    pad = [(0, 0)] * a.ndim
    pad[axis] = (0, size - a.shape[axis])
    return jnp.pad(a, pad)


# -----------------------------------------------------------------------------
# Pass 1: atom path + fused atom->pair projections + global pair-BN statistics.
# Grid: pair tiles ("arbitrary": sum / sum-of-squares accumulate across tiles).
# All tensors are feature-major: [features (padded to 128 lanes? no -> sublane),
# rows-on-lanes].
# -----------------------------------------------------------------------------
def _stats_atom_kernel(
    n_pairs,                                    # static: true number of pairs
    pfT_ref,                                    # [pair_in, tp]  pair-feature tile
    xT_ref,                                     # [atom_in, N]   resident
    waT_ref, baT_ref, gaT_ref, btaT_ref,        # atom_transform params
    wpT_ref, bpT_ref,                           # pair_transform Linear params
    w1T_ref, w2T_ref,                           # atom_to_pair split weights
    atom_outT_ref,                              # [Da_pad, N]
    sprojT_ref, rprojT_ref,                     # [Dp_pad, N]  (bf16)
    mup_ref, rstdp_ref,                         # [Dp_pad, 1]  accumulators/finals
):
    t = pl.program_id(0)
    tp = pfT_ref.shape[1]

    @pl.when(t == 0)
    def _init_and_atom_path():
        xT = xT_ref[...].astype(CDT)
        # atom_transform: BN(ReLU(Linear(x))), train-mode batch statistics.
        ha = jnp.maximum(
            jnp.dot(waT_ref[...].astype(CDT), xT,
                    preferred_element_type=jnp.float32) + baT_ref[...], 0.0)
        mu = jnp.mean(ha, axis=1, keepdims=True)
        var = jnp.mean(ha * ha, axis=1, keepdims=True) - mu * mu
        atom_outT_ref[...] = ((ha - mu) * lax.rsqrt(var + EPS)
                              * gaT_ref[...] + btaT_ref[...])
        # fused atom_to_pair per-atom projections: x @ W1, x @ W2 (once per atom).
        sprojT_ref[...] = jnp.dot(
            w1T_ref[...].astype(CDT), xT,
            preferred_element_type=jnp.float32).astype(sprojT_ref.dtype)
        rprojT_ref[...] = jnp.dot(
            w2T_ref[...].astype(CDT), xT,
            preferred_element_type=jnp.float32).astype(rprojT_ref.dtype)
        # zero the pair-BN accumulators (sum / sum of squares live in the outputs).
        mup_ref[...] = jnp.zeros_like(mup_ref)
        rstdp_ref[...] = jnp.zeros_like(rstdp_ref)

    # pair_transform pre-activation for this tile; mask the padded pair columns
    # so the BatchNorm statistics stay global over the true P rows.
    hp = jnp.maximum(
        jnp.dot(wpT_ref[...].astype(CDT), pfT_ref[...].astype(CDT),
                preferred_element_type=jnp.float32) + bpT_ref[...], 0.0)
    lane = lax.broadcasted_iota(jnp.int32, (1, tp), 1) + t * tp
    hp = jnp.where(lane < n_pairs, hp, 0.0)
    mup_ref[...] += jnp.sum(hp, axis=1, keepdims=True)
    rstdp_ref[...] += jnp.sum(hp * hp, axis=1, keepdims=True)

    @pl.when(t == pl.num_programs(0) - 1)
    def _finalize_stats():
        inv_p = 1.0 / n_pairs
        mu = mup_ref[...] * inv_p
        var = rstdp_ref[...] * inv_p - mu * mu          # biased batch variance
        mup_ref[...] = mu
        rstdp_ref[...] = lax.rsqrt(var + EPS)


# -----------------------------------------------------------------------------
# Pass 2: per-tile pair output (fully parallel over pair tiles).
# -----------------------------------------------------------------------------
def _pair_kernel(
    pfT_ref, pidxT_ref,                          # [pair_in, tp], [2, tp]
    wpT_ref, bpT_ref, gpT_ref, btpT_ref,         # pair_transform params
    sprojT_ref, rprojT_ref, ba2pT_ref,           # fused atom_to_pair inputs
    mup_ref, rstdp_ref,                          # global BN stats from pass 1
    pair_outT_ref,                               # [Dp_pad, tp]
):
    # pair_transform: BN(ReLU(Linear(pair_features))) with the global batch stats.
    hp = jnp.maximum(
        jnp.dot(wpT_ref[...].astype(CDT), pfT_ref[...].astype(CDT),
                preferred_element_type=jnp.float32) + bpT_ref[...], 0.0)
    pt = (hp - mup_ref[...]) * rstdp_ref[...] * gpT_ref[...] + btpT_ref[...]

    # atom_to_pair: gather the per-atom projections with a tile-local bf16
    # one-hot (exact 0/1) on the MXU:  (x @ W1)[send] + (x @ W2)[recv] + b.
    ids = pidxT_ref[...]                                         # [2, tp] int32
    n_atoms = sprojT_ref.shape[1]
    iota_n = lax.broadcasted_iota(jnp.int32, (n_atoms, ids.shape[1]), 0)
    oh_send = jnp.where(iota_n == ids[0:1, :], 1.0, 0.0).astype(CDT)   # [N, tp]
    oh_recv = jnp.where(iota_n == ids[1:2, :], 1.0, 0.0).astype(CDT)
    a2p = (jnp.dot(sprojT_ref[...], oh_send, preferred_element_type=jnp.float32)
           + jnp.dot(rprojT_ref[...], oh_recv, preferred_element_type=jnp.float32)
           + ba2pT_ref[...])

    pair_outT_ref[...] = a2p + pt


# -----------------------------------------------------------------------------
# Wrapper: layout plumbing (pad feature dims to 128 lanes, transpose so pairs
# sit on lanes, split concat weight), then two pipelined pallas_calls.
# -----------------------------------------------------------------------------
def alternate_weave_layer(x, pair_features, pair_index, params, *, tile_pairs=512):
    """x: [N, atom_in], pair_features: [P, pair_in], pair_index: [2, P] int32."""
    n_atoms, atom_in = x.shape
    n_pairs, pair_in = pair_features.shape
    atom_out_dim = params["wa"].shape[1]
    pair_out_dim = params["wp"].shape[1]

    da = _ceil_to(atom_out_dim, LANE)           # lane-dense feature dims
    dp = _ceil_to(pair_out_dim, LANE)
    tp = min(tile_pairs, _ceil_to(n_pairs, LANE))
    p_pad = _ceil_to(n_pairs, tp)
    nt = p_pad // tp
    f32 = jnp.float32

    def col(v, size):                           # [1, D] bias-style -> [size, 1]
        return _pad_to(v.reshape(-1, 1).astype(f32), 0, size)

    def rowsT(w, size):                         # [in, out] weight -> [size, in]
        return _pad_to(jnp.transpose(w).astype(f32), 0, size)

    waT, baT = rowsT(params["wa"], da), col(params["ba"], da)
    gaT, btaT = col(params["ga"], da), col(params["bta"], da)
    wpT, bpT = rowsT(params["wp"], dp), col(params["bp"], dp)
    gpT, btpT = col(params["gp"], dp), col(params["btp"], dp)
    w1T = rowsT(params["wa2p"][:atom_in], dp)   # split the concat weight here
    w2T = rowsT(params["wa2p"][atom_in:], dp)
    ba2pT = col(params["ba2p"], dp)

    xT = jnp.transpose(x).astype(f32)                                   # [atom_in, N]
    pfT = _pad_to(jnp.transpose(pair_features).astype(f32), 1, p_pad)   # [pair_in, P_pad]
    pidxT = _pad_to(pair_index.astype(jnp.int32), 1, p_pad)             # [2, P_pad]

    def resident(arr):
        return pl.BlockSpec(arr.shape, lambda t: (0, 0))

    pf_spec = pl.BlockSpec((pair_in, tp), lambda t: (0, t))
    idx_spec = pl.BlockSpec((2, tp), lambda t: (0, t))

    # ---- pass 1: atom path, fused projections, global pair-BN statistics ----
    atom_outT, sprojT, rprojT, mup, rstdp = pl.pallas_call(
        functools.partial(_stats_atom_kernel, n_pairs),
        grid=(nt,),
        in_specs=[pf_spec, resident(xT), resident(waT), resident(baT),
                  resident(gaT), resident(btaT), resident(wpT), resident(bpT),
                  resident(w1T), resident(w2T)],
        out_specs=(
            pl.BlockSpec((da, n_atoms), lambda t: (0, 0)),
            pl.BlockSpec((dp, n_atoms), lambda t: (0, 0)),
            pl.BlockSpec((dp, n_atoms), lambda t: (0, 0)),
            pl.BlockSpec((dp, 1), lambda t: (0, 0)),
            pl.BlockSpec((dp, 1), lambda t: (0, 0)),
        ),
        out_shape=(
            jax.ShapeDtypeStruct((da, n_atoms), f32),
            jax.ShapeDtypeStruct((dp, n_atoms), CDT),
            jax.ShapeDtypeStruct((dp, n_atoms), CDT),
            jax.ShapeDtypeStruct((dp, 1), f32),
            jax.ShapeDtypeStruct((dp, 1), f32),
        ),
        compiler_params=pltpu.CompilerParams(
            dimension_semantics=("arbitrary",),      # cross-tile BN accumulation
            vmem_limit_bytes=VMEM_LIMIT),
    )(pfT, xT, waT, baT, gaT, btaT, wpT, bpT, w1T, w2T)

    # ---- pass 2: pair output tiles ----
    pair_outT = pl.pallas_call(
        _pair_kernel,
        grid=(nt,),
        in_specs=[pf_spec, idx_spec, resident(wpT), resident(bpT),
                  resident(gpT), resident(btpT), resident(sprojT),
                  resident(rprojT), resident(ba2pT), resident(mup),
                  resident(rstdp)],
        out_specs=pl.BlockSpec((dp, tp), lambda t: (0, t)),
        out_shape=jax.ShapeDtypeStruct((dp, p_pad), f32),
        compiler_params=pltpu.CompilerParams(
            dimension_semantics=("parallel",),       # megacore-shardable on v7x
            vmem_limit_bytes=VMEM_LIMIT),
    )(pfT, pidxT, wpT, bpT, gpT, btpT, sprojT, rprojT, ba2pT, mup, rstdp)

    atom_out = jnp.transpose(atom_outT)[:, :atom_out_dim]
    pair_update = jnp.transpose(pair_outT)[:n_pairs, :pair_out_dim]
    return atom_out, pair_update


# -----------------------------------------------------------------------------
# Plain-JAX reference (train-mode BN) + parameter init, for verification.
# -----------------------------------------------------------------------------
def reference_forward(x, pair_features, pair_index, params):
    def bn(h, gamma, beta):
        mu = jnp.mean(h, axis=0, keepdims=True)
        var = jnp.mean((h - mu) ** 2, axis=0, keepdims=True)
        return (h - mu) / jnp.sqrt(var + EPS) * gamma + beta

    atom_out = bn(jnp.maximum(x @ params["wa"] + params["ba"], 0.0),
                  params["ga"], params["bta"])
    send = x[pair_index[0]]
    recv = x[pair_index[1]]
    pair_input = jnp.concatenate([send, recv], axis=-1)
    pair_update = (pair_input @ params["wa2p"] + params["ba2p"]
                   + bn(jnp.maximum(pair_features @ params["wp"] + params["bp"], 0.0),
                        params["gp"], params["btp"]))
    return atom_out, pair_update


def init_params(key, atom_in_dim, pair_in_dim, atom_out_dim, pair_out_dim):
    ks = jax.random.split(key, 3)

    def lin(k, din, dout):
        bound = 1.0 / jnp.sqrt(din)
        kw, kb = jax.random.split(k)
        w = jax.random.uniform(kw, (din, dout), jnp.float32, -bound, bound)
        b = jax.random.uniform(kb, (1, dout), jnp.float32, -bound, bound)
        return w, b

    wa, ba = lin(ks[0], atom_in_dim, atom_out_dim)
    wp, bp = lin(ks[1], pair_in_dim, pair_out_dim)
    wa2p, ba2p = lin(ks[2], atom_in_dim * 2, pair_out_dim)
    return dict(
        wa=wa, ba=ba,
        ga=jnp.ones((1, atom_out_dim), jnp.float32),    # BN gamma (init=1)
        bta=jnp.zeros((1, atom_out_dim), jnp.float32),  # BN beta  (init=0)
        wp=wp, bp=bp,
        gp=jnp.ones((1, pair_out_dim), jnp.float32),
        btp=jnp.zeros((1, pair_out_dim), jnp.float32),
        wa2p=wa2p, ba2p=ba2p,
    )


if __name__ == "__main__":
    N_ATOMS, ATOM_IN, PAIR_IN = 16, 8, 12
    ATOM_OUT, PAIR_OUT, N_PAIRS = 32, 32, 24

    key = jax.random.PRNGKey(0)
    kx, kpf, kidx, kparam = jax.random.split(key, 4)
    x = jax.random.normal(kx, (N_ATOMS, ATOM_IN), jnp.float32)
    pair_features = jax.random.normal(kpf, (N_PAIRS, PAIR_IN), jnp.float32)
    pair_index = jax.random.randint(kidx, (2, N_PAIRS), 0, N_ATOMS, jnp.int32)
    params = init_params(kparam, ATOM_IN, PAIR_IN, ATOM_OUT, PAIR_OUT)

    atom_out, pair_update = jax.jit(alternate_weave_layer)(
        x, pair_features, pair_index, params)
    jax.block_until_ready((atom_out, pair_update))

    atom_ref, pair_ref = reference_forward(x, pair_features, pair_index, params)
    assert atom_out.shape == (N_ATOMS, ATOM_OUT)
    assert pair_update.shape == (N_PAIRS, PAIR_OUT)
    # bf16 matmul operands (f32 accumulation) -> compare at a bf16-level tolerance.
    assert jnp.allclose(atom_out, atom_ref, atol=5e-2, rtol=5e-2), (
        float(jnp.max(jnp.abs(atom_out - atom_ref))))
    assert jnp.allclose(pair_update, pair_ref, atol=5e-2, rtol=5e-2), (
        float(jnp.max(jnp.abs(pair_update - pair_ref))))

    print("KERNEL_OK")
</pallas_src>

<mosaic_0001>
module attributes {stable_mosaic.version = 11 : i64} {
  func.func @_stats_atom_kernel(%arg0: i32, %arg1: memref<12x128xf32, #tpu.memory_space<vmem>>, %arg2: memref<8x16xf32, #tpu.memory_space<vmem>>, %arg3: memref<128x8xf32, #tpu.memory_space<vmem>>, %arg4: memref<128x1xf32, #tpu.memory_space<vmem>>, %arg5: memref<128x1xf32, #tpu.memory_space<vmem>>, %arg6: memref<128x1xf32, #tpu.memory_space<vmem>>, %arg7: memref<128x12xf32, #tpu.memory_space<vmem>>, %arg8: memref<128x1xf32, #tpu.memory_space<vmem>>, %arg9: memref<128x8xf32, #tpu.memory_space<vmem>>, %arg10: memref<128x8xf32, #tpu.memory_space<vmem>>, %arg11: memref<128x16xf32, #tpu.memory_space<vmem>>, %arg12: memref<128x16xbf16, #tpu.memory_space<vmem>>, %arg13: memref<128x16xbf16, #tpu.memory_space<vmem>>, %arg14: memref<128x1xf32, #tpu.memory_space<vmem>>, %arg15: memref<128x1xf32, #tpu.memory_space<vmem>>) attributes {dimension_semantics = [#tpu.dimension_semantics<arbitrary>], iteration_bounds = array<i64: 1>, scalar_prefetch = 0 : i64, scratch_operands = 0 : i64, tpu.core_type = #tpu.core_type<tc>, window_params = [{transform_indices = @transform_0, window_bounds = array<i64: 12, 128>}, {pipeline_mode = #tpu.pipeline_mode<synchronous>, transform_indices = @transform_1, window_bounds = array<i64: 8, 16>}, {pipeline_mode = #tpu.pipeline_mode<synchronous>, transform_indices = @transform_2, window_bounds = array<i64: 128, 8>}, {pipeline_mode = #tpu.pipeline_mode<synchronous>, transform_indices = @transform_3, window_bounds = array<i64: 128, 1>}, {pipeline_mode = #tpu.pipeline_mode<synchronous>, transform_indices = @transform_4, window_bounds = array<i64: 128, 1>}, {pipeline_mode = #tpu.pipeline_mode<synchronous>, transform_indices = @transform_5, window_bounds = array<i64: 128, 1>}, {pipeline_mode = #tpu.pipeline_mode<synchronous>, transform_indices = @transform_6, window_bounds = array<i64: 128, 12>}, {pipeline_mode = #tpu.pipeline_mode<synchronous>, transform_indices = @transform_7, window_bounds = array<i64: 128, 1>}, {pipeline_mode = #tpu.pipeline_mode<synchronous>, transform_indices = @transform_8, window_bounds = array<i64: 128, 8>}, {pipeline_mode = #tpu.pipeline_mode<synchronous>, transform_indices = @transform_9, window_bounds = array<i64: 128, 8>}, {pipeline_mode = #tpu.pipeline_mode<synchronous>, transform_indices = @transform_10, window_bounds = array<i64: 128, 16>}, {pipeline_mode = #tpu.pipeline_mode<synchronous>, transform_indices = @transform_11, window_bounds = array<i64: 128, 16>}, {pipeline_mode = #tpu.pipeline_mode<synchronous>, transform_indices = @transform_12, window_bounds = array<i64: 128, 16>}, {pipeline_mode = #tpu.pipeline_mode<synchronous>, transform_indices = @transform_13, window_bounds = array<i64: 128, 1>}, {pipeline_mode = #tpu.pipeline_mode<synchronous>, transform_indices = @transform_14, window_bounds = array<i64: 128, 1>}]} {
    %c0_i32 = arith.constant 0 : i32
    %0 = arith.cmpi eq, %arg0, %c0_i32 : i32
    %1 = arith.extui %0 : i1 to i32
    %c0_i32_0 = arith.constant 0 : i32
    %2 = arith.cmpi ne, %1, %c0_i32_0 : i32
    scf.if %2 {
      %c0_20 = arith.constant 0 : index
      %c0_21 = arith.constant 0 : index
      %37 = vector.load %arg2[%c0_20, %c0_21] : memref<8x16xf32, #tpu.memory_space<vmem>>, vector<8x16xf32>
      %38 = arith.truncf %37 : vector<8x16xf32> to vector<8x16xbf16>
      %c0_22 = arith.constant 0 : index
      %c0_23 = arith.constant 0 : index
      %39 = vector.load %arg3[%c0_22, %c0_23] : memref<128x8xf32, #tpu.memory_space<vmem>>, vector<128x8xf32>
      %40 = arith.truncf %39 : vector<128x8xf32> to vector<128x8xbf16>
      %cst_24 = arith.constant dense<0.000000e+00> : vector<128x16xf32>
      %41 = tpu.matmul %40, %38, %cst_24 {dimension_numbers = #tpu.dot_dimension_numbers<[1], [0], [0], [1], [0, 0, 1, 1], [], []>} : vector<128x8xbf16>, vector<8x16xbf16>, vector<128x16xf32> -> vector<128x16xf32>
      %c0_25 = arith.constant 0 : index
      %c0_26 = arith.constant 0 : index
      %42 = vector.load %arg4[%c0_25, %c0_26] : memref<128x1xf32, #tpu.memory_space<vmem>>, vector<128x1xf32>
      %43 = vector.broadcast %42 : vector<128x1xf32> to vector<128x16xf32>
      %44 = arith.addf %41, %43 : vector<128x16xf32>
      %cst_27 = arith.constant 0.000000e+00 : f32
      %45 = vector.broadcast %cst_27 : f32 to vector<128x16xf32>
      %46 = arith.maximumf %44, %45 : vector<128x16xf32>
      %cst_28 = arith.constant dense<0.000000e+00> : vector<128xf32>
      %47 = vector.multi_reduction <add>, %46, %cst_28 [1] : vector<128x16xf32> to vector<128xf32>
      %48 = vector.shape_cast %47 : vector<128xf32> to vector<128x1xf32>
      %cst_29 = arith.constant 1.600000e+01 : f32
      %49 = vector.broadcast %cst_29 : f32 to vector<128x1xf32>
      %50 = arith.divf %48, %49 : vector<128x1xf32>
      %51 = arith.mulf %46, %46 : vector<128x16xf32>
      %cst_30 = arith.constant dense<0.000000e+00> : vector<128xf32>
      %52 = vector.multi_reduction <add>, %51, %cst_30 [1] : vector<128x16xf32> to vector<128xf32>
      %53 = vector.shape_cast %52 : vector<128xf32> to vector<128x1xf32>
      %cst_31 = arith.constant 1.600000e+01 : f32
      %54 = vector.broadcast %cst_31 : f32 to vector<128x1xf32>
      %55 = arith.divf %53, %54 : vector<128x1xf32>
      %56 = arith.mulf %50, %50 : vector<128x1xf32>
      %57 = arith.subf %55, %56 : vector<128x1xf32>
      %58 = vector.broadcast %50 : vector<128x1xf32> to vector<128x16xf32>
      %59 = arith.subf %46, %58 : vector<128x16xf32>
      %cst_32 = arith.constant 9.99999974E-6 : f32
      %60 = vector.broadcast %cst_32 : f32 to vector<128x1xf32>
      %61 = arith.addf %57, %60 : vector<128x1xf32>
      %62 = math.rsqrt %61 : vector<128x1xf32>
      %63 = vector.broadcast %62 : vector<128x1xf32> to vector<128x16xf32>
      %64 = arith.mulf %59, %63 : vector<128x16xf32>
      %c0_33 = arith.constant 0 : index
      %c0_34 = arith.constant 0 : index
      %65 = vector.load %arg5[%c0_33, %c0_34] : memref<128x1xf32, #tpu.memory_space<vmem>>, vector<128x1xf32>
      %66 = vector.broadcast %65 : vector<128x1xf32> to vector<128x16xf32>
      %67 = arith.mulf %64, %66 : vector<128x16xf32>
      %c0_35 = arith.constant 0 : index
      %c0_36 = arith.constant 0 : index
      %68 = vector.load %arg6[%c0_35, %c0_36] : memref<128x1xf32, #tpu.memory_space<vmem>>, vector<128x1xf32>
      %69 = vector.broadcast %68 : vector<128x1xf32> to vector<128x16xf32>
      %70 = arith.addf %67, %69 : vector<128x16xf32>
      %c0_37 = arith.constant 0 : index
      %c0_38 = arith.constant 0 : index
      %71 = vector.load %arg11[%c0_37, %c0_38] : memref<128x16xf32, #tpu.memory_space<vmem>>, vector<128x16xf32>
      tpu.vector_store %arg11[%c0_37, %c0_38], %70 {strides = array<i32>} : memref<128x16xf32, #tpu.memory_space<vmem>>, vector<128x16xf32>,
      %c0_39 = arith.constant 0 : index
      %c0_40 = arith.constant 0 : index
      %72 = vector.load %arg9[%c0_39, %c0_40] : memref<128x8xf32, #tpu.memory_space<vmem>>, vector<128x8xf32>
      %73 = arith.truncf %72 : vector<128x8xf32> to vector<128x8xbf16>
      %cst_41 = arith.constant dense<0.000000e+00> : vector<128x16xf32>
      %74 = tpu.matmul %73, %38, %cst_41 {dimension_numbers = #tpu.dot_dimension_numbers<[1], [0], [0], [1], [0, 0, 1, 1], [], []>} : vector<128x8xbf16>, vector<8x16xbf16>, vector<128x16xf32> -> vector<128x16xf32>
      %75 = arith.truncf %74 : vector<128x16xf32> to vector<128x16xbf16>
      %c0_42 = arith.constant 0 : index
      %c0_43 = arith.constant 0 : index
      %76 = vector.load %arg12[%c0_42, %c0_43] : memref<128x16xbf16, #tpu.memory_space<vmem>>, vector<128x16xbf16>
      tpu.vector_store %arg12[%c0_42, %c0_43], %75 {strides = array<i32>} : memref<128x16xbf16, #tpu.memory_space<vmem>>, vector<128x16xbf16>,
      %c0_44 = arith.constant 0 : index
      %c0_45 = arith.constant 0 : index
      %77 = vector.load %arg10[%c0_44, %c0_45] : memref<128x8xf32, #tpu.memory_space<vmem>>, vector<128x8xf32>
      %78 = arith.truncf %77 : vector<128x8xf32> to vector<128x8xbf16>
      %cst_46 = arith.constant dense<0.000000e+00> : vector<128x16xf32>
      %79 = tpu.matmul %78, %38, %cst_46 {dimension_numbers = #tpu.dot_dimension_numbers<[1], [0], [0], [1], [0, 0, 1, 1], [], []>} : vector<128x8xbf16>, vector<8x16xbf16>, vector<128x16xf32> -> vector<128x16xf32>
      %80 = arith.truncf %79 : vector<128x16xf32> to vector<128x16xbf16>
      %c0_47 = arith.constant 0 : index
      %c0_48 = arith.constant 0 : index
      %81 = vector.load %arg13[%c0_47, %c0_48] : memref<128x16xbf16, #tpu.memory_space<vmem>>, vector<128x16xbf16>
      tpu.vector_store %arg13[%c0_47, %c0_48], %80 {strides = array<i32>} : memref<128x16xbf16, #tpu.memory_space<vmem>>, vector<128x16xbf16>,
      %cst_49 = arith.constant 0.000000e+00 : f32
      %82 = vector.broadcast %cst_49 : f32 to vector<128x1xf32>
      %c0_50 = arith.constant 0 : index
      %c0_51 = arith.constant 0 : index
      %83 = vector.load %arg14[%c0_50, %c0_51] : memref<128x1xf32, #tpu.memory_space<vmem>>, vector<128x1xf32>
      tpu.vector_store %arg14[%c0_50, %c0_51], %82 {strides = array<i32>} : memref<128x1xf32, #tpu.memory_space<vmem>>, vector<128x1xf32>,
      %cst_52 = arith.constant 0.000000e+00 : f32
      %84 = vector.broadcast %cst_52 : f32 to vector<128x1xf32>
      %c0_53 = arith.constant 0 : index
      %c0_54 = arith.constant 0 : index
      %85 = vector.load %arg15[%c0_53, %c0_54] : memref<128x1xf32, #tpu.memory_space<vmem>>, vector<128x1xf32>
      tpu.vector_store %arg15[%c0_53, %c0_54], %84 {strides = array<i32>} : memref<128x1xf32, #tpu.memory_space<vmem>>, vector<128x1xf32>,
    } else {
    }
    %c0 = arith.constant 0 : index
    %c0_1 = arith.constant 0 : index
    %3 = vector.load %arg7[%c0, %c0_1] : memref<128x12xf32, #tpu.memory_space<vmem>>, vector<128x12xf32>
    %4 = arith.truncf %3 : vector<128x12xf32> to vector<128x12xbf16>
    %c0_2 = arith.constant 0 : index
    %c0_3 = arith.constant 0 : index
    %5 = vector.load %arg1[%c0_2, %c0_3] : memref<12x128xf32, #tpu.memory_space<vmem>>, vector<12x128xf32>
    %6 = arith.truncf %5 : vector<12x128xf32> to vector<12x128xbf16>
    %cst = arith.constant dense<0.000000e+00> : vector<128x128xf32>
    %7 = tpu.matmul %4, %6, %cst {dimension_numbers = #tpu.dot_dimension_numbers<[1], [0], [0], [1], [0, 0, 1, 1], [], []>} : vector<128x12xbf16>, vector<12x128xbf16>, vector<128x128xf32> -> vector<128x128xf32>
    %c0_4 = arith.constant 0 : index
    %c0_5 = arith.constant 0 : index
    %8 = vector.load %arg8[%c0_4, %c0_5] : memref<128x1xf32, #tpu.memory_space<vmem>>, vector<128x1xf32>
    %9 = vector.broadcast %8 : vector<128x1xf32> to vector<128x128xf32>
    %10 = arith.addf %7, %9 : vector<128x128xf32>
    %cst_6 = arith.constant 0.000000e+00 : f32
    %11 = vector.broadcast %cst_6 : f32 to vector<128x128xf32>
    %12 = arith.maximumf %10, %11 : vector<128x128xf32>
    %13 = tpu.iota {dimensions = array<i32: 1>} : vector<1x128xi32>
    %c128_i32 = arith.constant 128 : i32
    %14 = arith.muli %arg0, %c128_i32 : i32
    %15 = vector.broadcast %14 : i32 to vector<1x128xi32>
    %16 = arith.addi %13, %15 : vector<1x128xi32>
    %c24_i32 = arith.constant 24 : i32
    %17 = vector.broadcast %c24_i32 : i32 to vector<1x128xi32>
    %18 = arith.cmpi slt, %16, %17 : vector<1x128xi32>
    %cst_7 = arith.constant 0.000000e+00 : f32
    %19 = vector.shape_cast %18 : vector<1x128xi1> to vector<1x128xi1>
    %20 = vector.broadcast %19 : vector<1x128xi1> to vector<128x128xi1>
    %21 = vector.broadcast %cst_7 : f32 to vector<128x128xf32>
    %22 = arith.select %20, %12, %21 : vector<128x128xi1>, vector<128x128xf32>
    %c0_8 = arith.constant 0 : index
    %c0_9 = arith.constant 0 : index
    %23 = vector.load %arg14[%c0_8, %c0_9] : memref<128x1xf32, #tpu.memory_space<vmem>>, vector<128x1xf32>
    %cst_10 = arith.constant dense<0.000000e+00> : vector<128xf32>
    %24 = vector.multi_reduction <add>, %22, %cst_10 [1] : vector<128x128xf32> to vector<128xf32>
    %25 = vector.shape_cast %24 : vector<128xf32> to vector<128x1xf32>
    %26 = arith.addf %23, %25 : vector<128x1xf32>
    %c0_11 = arith.constant 0 : index
    %c0_12 = arith.constant 0 : index
    %27 = vector.load %arg14[%c0_11, %c0_12] : memref<128x1xf32, #tpu.memory_space<vmem>>, vector<128x1xf32>
    tpu.vector_store %arg14[%c0_11, %c0_12], %26 {strides = array<i32>} : memref<128x1xf32, #tpu.memory_space<vmem>>, vector<128x1xf32>,
    %c0_13 = arith.constant 0 : index
    %c0_14 = arith.constant 0 : index
    %28 = vector.load %arg15[%c0_13, %c0_14] : memref<128x1xf32, #tpu.memory_space<vmem>>, vector<128x1xf32>
    %29 = arith.mulf %22, %22 : vector<128x128xf32>
    %cst_15 = arith.constant dense<0.000000e+00> : vector<128xf32>
    %30 = vector.multi_reduction <add>, %29, %cst_15 [1] : vector<128x128xf32> to vector<128xf32>
    %31 = vector.shape_cast %30 : vector<128xf32> to vector<128x1xf32>
    %32 = arith.addf %28, %31 : vector<128x1xf32>
    %c0_16 = arith.constant 0 : index
    %c0_17 = arith.constant 0 : index
    %33 = vector.load %arg15[%c0_16, %c0_17] : memref<128x1xf32, #tpu.memory_space<vmem>>, vector<128x1xf32>
    tpu.vector_store %arg15[%c0_16, %c0_17], %32 {strides = array<i32>} : memref<128x1xf32, #tpu.memory_space<vmem>>, vector<128x1xf32>,
    %c0_i32_18 = arith.constant 0 : i32
    %34 = arith.cmpi eq, %arg0, %c0_i32_18 : i32
    %35 = arith.extui %34 : i1 to i32
    %c0_i32_19 = arith.constant 0 : i32
    %36 = arith.cmpi ne, %35, %c0_i32_19 : i32
    scf.if %36 {
      %c0_20 = arith.constant 0 : index
      %c0_21 = arith.constant 0 : index
      %37 = vector.load %arg14[%c0_20, %c0_21] : memref<128x1xf32, #tpu.memory_space<vmem>>, vector<128x1xf32>
      %cst_22 = arith.constant 0.0416666679 : f32
      %38 = vector.broadcast %cst_22 : f32 to vector<128x1xf32>
      %39 = arith.mulf %37, %38 : vector<128x1xf32>
      %c0_23 = arith.constant 0 : index
      %c0_24 = arith.constant 0 : index
      %40 = vector.load %arg15[%c0_23, %c0_24] : memref<128x1xf32, #tpu.memory_space<vmem>>, vector<128x1xf32>
      %cst_25 = arith.constant 0.0416666679 : f32
      %41 = vector.broadcast %cst_25 : f32 to vector<128x1xf32>
      %42 = arith.mulf %40, %41 : vector<128x1xf32>
      %43 = arith.mulf %39, %39 : vector<128x1xf32>
      %44 = arith.subf %42, %43 : vector<128x1xf32>
      %c0_26 = arith.constant 0 : index
      %c0_27 = arith.constant 0 : index
      %45 = vector.load %arg14[%c0_26, %c0_27] : memref<128x1xf32, #tpu.memory_space<vmem>>, vector<128x1xf32>
      tpu.vector_store %arg14[%c0_26, %c0_27], %39 {strides = array<i32>} : memref<128x1xf32, #tpu.memory_space<vmem>>, vector<128x1xf32>,
      %cst_28 = arith.constant 9.99999974E-6 : f32
      %46 = vector.broadcast %cst_28 : f32 to vector<128x1xf32>
      %47 = arith.addf %44, %46 : vector<128x1xf32>
      %48 = math.rsqrt %47 : vector<128x1xf32>
      %c0_29 = arith.constant 0 : index
      %c0_30 = arith.constant 0 : index
      %49 = vector.load %arg15[%c0_29, %c0_30] : memref<128x1xf32, #tpu.memory_space<vmem>>, vector<128x1xf32>
      tpu.vector_store %arg15[%c0_29, %c0_30], %48 {strides = array<i32>} : memref<128x1xf32, #tpu.memory_space<vmem>>, vector<128x1xf32>,
    } else {
    }
    return
  }
  func.func @transform_0(%arg0: i32) -> (i32, i32) {
    %c0_i32 = arith.constant 0 : i32
    %c0_i32_0 = arith.constant 0 : i32
    return %c0_i32, %arg0 : i32, i32
  }
  func.func @transform_1(%arg0: i32) -> (i32, i32) {
    %c0_i32 = arith.constant 0 : i32
    %c0_i32_0 = arith.constant 0 : i32
    %c0_i32_1 = arith.constant 0 : i32
    return %c0_i32, %c0_i32_0 : i32, i32
  }
  func.func @transform_2(%arg0: i32) -> (i32, i32) {
    %c0_i32 = arith.constant 0 : i32
    %c0_i32_0 = arith.constant 0 : i32
    %c0_i32_1 = arith.constant 0 : i32
    return %c0_i32, %c0_i32_0 : i32, i32
  }
  func.func @transform_3(%arg0: i32) -> (i32, i32) {
    %c0_i32 = arith.constant 0 : i32
    %c0_i32_0 = arith.constant 0 : i32
    %c0_i32_1 = arith.constant 0 : i32
    return %c0_i32, %c0_i32_0 : i32, i32
  }
  func.func @transform_4(%arg0: i32) -> (i32, i32) {
    %c0_i32 = arith.constant 0 : i32
    %c0_i32_0 = arith.constant 0 : i32
    %c0_i32_1 = arith.constant 0 : i32
    return %c0_i32, %c0_i32_0 : i32, i32
  }
  func.func @transform_5(%arg0: i32) -> (i32, i32) {
    %c0_i32 = arith.constant 0 : i32
    %c0_i32_0 = arith.constant 0 : i32
    %c0_i32_1 = arith.constant 0 : i32
    return %c0_i32, %c0_i32_0 : i32, i32
  }
  func.func @transform_6(%arg0: i32) -> (i32, i32) {
    %c0_i32 = arith.constant 0 : i32
    %c0_i32_0 = arith.constant 0 : i32
    %c0_i32_1 = arith.constant 0 : i32
    return %c0_i32, %c0_i32_0 : i32, i32
  }
  func.func @transform_7(%arg0: i32) -> (i32, i32) {
    %c0_i32 = arith.constant 0 : i32
    %c0_i32_0 = arith.constant 0 : i32
    %c0_i32_1 = arith.constant 0 : i32
    return %c0_i32, %c0_i32_0 : i32, i32
  }
  func.func @transform_8(%arg0: i32) -> (i32, i32) {
    %c0_i32 = arith.constant 0 : i32
    %c0_i32_0 = arith.constant 0 : i32
    %c0_i32_1 = arith.constant 0 : i32
    return %c0_i32, %c0_i32_0 : i32, i32
  }
  func.func @transform_9(%arg0: i32) -> (i32, i32) {
    %c0_i32 = arith.constant 0 : i32
    %c0_i32_0 = arith.constant 0 : i32
    %c0_i32_1 = arith.constant 0 : i32
    return %c0_i32, %c0_i32_0 : i32, i32
  }
  func.func @transform_10(%arg0: i32) -> (i32, i32) {
    %c0_i32 = arith.constant 0 : i32
    %c0_i32_0 = arith.constant 0 : i32
    %c0_i32_1 = arith.constant 0 : i32
    return %c0_i32, %c0_i32_0 : i32, i32
  }
  func.func @transform_11(%arg0: i32) -> (i32, i32) {
    %c0_i32 = arith.constant 0 : i32
    %c0_i32_0 = arith.constant 0 : i32
    %c0_i32_1 = arith.constant 0 : i32
    return %c0_i32, %c0_i32_0 : i32, i32
  }
  func.func @transform_12(%arg0: i32) -> (i32, i32) {
    %c0_i32 = arith.constant 0 : i32
    %c0_i32_0 = arith.constant 0 : i32
    %c0_i32_1 = arith.constant 0 : i32
    return %c0_i32, %c0_i32_0 : i32, i32
  }
  func.func @transform_13(%arg0: i32) -> (i32, i32) {
    %c0_i32 = arith.constant 0 : i32
    %c0_i32_0 = arith.constant 0 : i32
    %c0_i32_1 = arith.constant 0 : i32
    return %c0_i32, %c0_i32_0 : i32, i32
  }
  func.func @transform_14(%arg0: i32) -> (i32, i32) {
    %c0_i32 = arith.constant 0 : i32
    %c0_i32_0 = arith.constant 0 : i32
    %c0_i32_1 = arith.constant 0 : i32
    return %c0_i32, %c0_i32_0 : i32, i32
  }
}

module attributes {stable_mosaic.version = 11 : i64} {
  func.func @_pair_kernel(%arg0: i32, %arg1: memref<12x128xf32, #tpu.memory_space<vmem>>, %arg2: memref<2x128xi32, #tpu.memory_space<vmem>>, %arg3: memref<128x12xf32, #tpu.memory_space<vmem>>, %arg4: memref<128x1xf32, #tpu.memory_space<vmem>>, %arg5: memref<128x1xf32, #tpu.memory_space<vmem>>, %arg6: memref<128x1xf32, #tpu.memory_space<vmem>>, %arg7: memref<128x16xbf16, #tpu.memory_space<vmem>>, %arg8: memref<128x16xbf16, #tpu.memory_space<vmem>>, %arg9: memref<128x1xf32, #tpu.memory_space<vmem>>, %arg10: memref<128x1xf32, #tpu.memory_space<vmem>>, %arg11: memref<128x1xf32, #tpu.memory_space<vmem>>, %arg12: memref<128x128xf32, #tpu.memory_space<vmem>>) attributes {dimension_semantics = [#tpu.dimension_semantics<parallel>], iteration_bounds = array<i64: 1>, scalar_prefetch = 0 : i64, scratch_operands = 0 : i64, tpu.core_type = #tpu.core_type<tc>, window_params = [{transform_indices = @transform_0, window_bounds = array<i64: 12, 128>}, {transform_indices = @transform_1, window_bounds = array<i64: 2, 128>}, {pipeline_mode = #tpu.pipeline_mode<synchronous>, transform_indices = @transform_2, window_bounds = array<i64: 128, 12>}, {pipeline_mode = #tpu.pipeline_mode<synchronous>, transform_indices = @transform_3, window_bounds = array<i64: 128, 1>}, {pipeline_mode = #tpu.pipeline_mode<synchronous>, transform_indices = @transform_4, window_bounds = array<i64: 128, 1>}, {pipeline_mode = #tpu.pipeline_mode<synchronous>, transform_indices = @transform_5, window_bounds = array<i64: 128, 1>}, {pipeline_mode = #tpu.pipeline_mode<synchronous>, transform_indices = @transform_6, window_bounds = array<i64: 128, 16>}, {pipeline_mode = #tpu.pipeline_mode<synchronous>, transform_indices = @transform_7, window_bounds = array<i64: 128, 16>}, {pipeline_mode = #tpu.pipeline_mode<synchronous>, transform_indices = @transform_8, window_bounds = array<i64: 128, 1>}, {pipeline_mode = #tpu.pipeline_mode<synchronous>, transform_indices = @transform_9, window_bounds = array<i64: 128, 1>}, {pipeline_mode = #tpu.pipeline_mode<synchronous>, transform_indices = @transform_10, window_bounds = array<i64: 128, 1>}, {transform_indices = @transform_11, window_bounds = array<i64: 128, 128>}]} {
    %c0 = arith.constant 0 : index
    %c0_0 = arith.constant 0 : index
    %0 = vector.load %arg3[%c0, %c0_0] : memref<128x12xf32, #tpu.memory_space<vmem>>, vector<128x12xf32>
    %1 = arith.truncf %0 : vector<128x12xf32> to vector<128x12xbf16>
    %c0_1 = arith.constant 0 : index
    %c0_2 = arith.constant 0 : index
    %2 = vector.load %arg1[%c0_1, %c0_2] : memref<12x128xf32, #tpu.memory_space<vmem>>, vector<12x128xf32>
    %3 = arith.truncf %2 : vector<12x128xf32> to vector<12x128xbf16>
    %cst = arith.constant dense<0.000000e+00> : vector<128x128xf32>
    %4 = tpu.matmul %1, %3, %cst {dimension_numbers = #tpu.dot_dimension_numbers<[1], [0], [0], [1], [0, 0, 1, 1], [], []>} : vector<128x12xbf16>, vector<12x128xbf16>, vector<128x128xf32> -> vector<128x128xf32>
    %c0_3 = arith.constant 0 : index
    %c0_4 = arith.constant 0 : index
    %5 = vector.load %arg4[%c0_3, %c0_4] : memref<128x1xf32, #tpu.memory_space<vmem>>, vector<128x1xf32>
    %6 = vector.broadcast %5 : vector<128x1xf32> to vector<128x128xf32>
    %7 = arith.addf %4, %6 : vector<128x128xf32>
    %cst_5 = arith.constant 0.000000e+00 : f32
    %8 = vector.broadcast %cst_5 : f32 to vector<128x128xf32>
    %9 = arith.maximumf %7, %8 : vector<128x128xf32>
    %c0_6 = arith.constant 0 : index
    %c0_7 = arith.constant 0 : index
    %10 = vector.load %arg10[%c0_6, %c0_7] : memref<128x1xf32, #tpu.memory_space<vmem>>, vector<128x1xf32>
    %11 = vector.broadcast %10 : vector<128x1xf32> to vector<128x128xf32>
    %12 = arith.subf %9, %11 : vector<128x128xf32>
    %c0_8 = arith.constant 0 : index
    %c0_9 = arith.constant 0 : index
    %13 = vector.load %arg11[%c0_8, %c0_9] : memref<128x1xf32, #tpu.memory_space<vmem>>, vector<128x1xf32>
    %14 = vector.broadcast %13 : vector<128x1xf32> to vector<128x128xf32>
    %15 = arith.mulf %12, %14 : vector<128x128xf32>
    %c0_10 = arith.constant 0 : index
    %c0_11 = arith.constant 0 : index
    %16 = vector.load %arg5[%c0_10, %c0_11] : memref<128x1xf32, #tpu.memory_space<vmem>>, vector<128x1xf32>
    %17 = vector.broadcast %16 : vector<128x1xf32> to vector<128x128xf32>
    %18 = arith.mulf %15, %17 : vector<128x128xf32>
    %c0_12 = arith.constant 0 : index
    %c0_13 = arith.constant 0 : index
    %19 = vector.load %arg6[%c0_12, %c0_13] : memref<128x1xf32, #tpu.memory_space<vmem>>, vector<128x1xf32>
    %20 = vector.broadcast %19 : vector<128x1xf32> to vector<128x128xf32>
    %21 = arith.addf %18, %20 : vector<128x128xf32>
    %c0_14 = arith.constant 0 : index
    %c0_15 = arith.constant 0 : index
    %22 = vector.load %arg2[%c0_14, %c0_15] : memref<2x128xi32, #tpu.memory_space<vmem>>, vector<2x128xi32>
    %23 = tpu.iota {dimensions = array<i32: 0>} : vector<16x128xi32>
    %24 = vector.extract_strided_slice %22 {offsets = [0, 0], sizes = [1, 128], strides = [1, 1]} : vector<2x128xi32> to vector<1x128xi32>
    %25 = vector.broadcast %24 : vector<1x128xi32> to vector<16x128xi32>
    %26 = arith.cmpi eq, %23, %25 : vector<16x128xi32>
    %cst_16 = arith.constant 1.000000e+00 : f32
    %cst_17 = arith.constant 0.000000e+00 : f32
    %27 = vector.broadcast %cst_16 : f32 to vector<16x128xf32>
    %28 = vector.broadcast %cst_17 : f32 to vector<16x128xf32>
    %29 = arith.select %26, %27, %28 : vector<16x128xi1>, vector<16x128xf32>
    %30 = arith.truncf %29 : vector<16x128xf32> to vector<16x128xbf16>
    %31 = vector.extract_strided_slice %22 {offsets = [1, 0], sizes = [1, 128], strides = [1, 1]} : vector<2x128xi32> to vector<1x128xi32>
    %32 = vector.broadcast %31 : vector<1x128xi32> to vector<16x128xi32>
    %33 = arith.cmpi eq, %23, %32 : vector<16x128xi32>
    %cst_18 = arith.constant 1.000000e+00 : f32
    %cst_19 = arith.constant 0.000000e+00 : f32
    %34 = vector.broadcast %cst_18 : f32 to vector<16x128xf32>
    %35 = vector.broadcast %cst_19 : f32 to vector<16x128xf32>
    %36 = arith.select %33, %34, %35 : vector<16x128xi1>, vector<16x128xf32>
    %37 = arith.truncf %36 : vector<16x128xf32> to vector<16x128xbf16>
    %c0_20 = arith.constant 0 : index
    %c0_21 = arith.constant 0 : index
    %38 = vector.load %arg7[%c0_20, %c0_21] : memref<128x16xbf16, #tpu.memory_space<vmem>>, vector<128x16xbf16>
    %cst_22 = arith.constant dense<0.000000e+00> : vector<128x128xf32>
    %39 = tpu.matmul %38, %30, %cst_22 {dimension_numbers = #tpu.dot_dimension_numbers<[1], [0], [0], [1], [0, 0, 1, 1], [], []>} : vector<128x16xbf16>, vector<16x128xbf16>, vector<128x128xf32> -> vector<128x128xf32>
    %c0_23 = arith.constant 0 : index
    %c0_24 = arith.constant 0 : index
    %40 = vector.load %arg8[%c0_23, %c0_24] : memref<128x16xbf16, #tpu.memory_space<vmem>>, vector<128x16xbf16>
    %cst_25 = arith.constant dense<0.000000e+00> : vector<128x128xf32>
    %41 = tpu.matmul %40, %37, %cst_25 {dimension_numbers = #tpu.dot_dimension_numbers<[1], [0], [0], [1], [0, 0, 1, 1], [], []>} : vector<128x16xbf16>, vector<16x128xbf16>, vector<128x128xf32> -> vector<128x128xf32>
    %42 = arith.addf %39, %41 : vector<128x128xf32>
    %c0_26 = arith.constant 0 : index
    %c0_27 = arith.constant 0 : index
    %43 = vector.load %arg9[%c0_26, %c0_27] : memref<128x1xf32, #tpu.memory_space<vmem>>, vector<128x1xf32>
    %44 = vector.broadcast %43 : vector<128x1xf32> to vector<128x128xf32>
    %45 = arith.addf %42, %44 : vector<128x128xf32>
    %46 = arith.addf %45, %21 : vector<128x128xf32>
    %c0_28 = arith.constant 0 : index
    %c0_29 = arith.constant 0 : index
    %47 = vector.load %arg12[%c0_28, %c0_29] : memref<128x128xf32, #tpu.memory_space<vmem>>, vector<128x128xf32>
    tpu.vector_store %arg12[%c0_28, %c0_29], %46 {strides = array<i32>} : memref<128x128xf32, #tpu.memory_space<vmem>>, vector<128x128xf32>,
    return
  }
  func.func @transform_0(%arg0: i32) -> (i32, i32) {
    %c0_i32 = arith.constant 0 : i32
    %c0_i32_0 = arith.constant 0 : i32
    return %c0_i32, %arg0 : i32, i32
  }
  func.func @transform_1(%arg0: i32) -> (i32, i32) {
    %c0_i32 = arith.constant 0 : i32
    %c0_i32_0 = arith.constant 0 : i32
    return %c0_i32, %arg0 : i32, i32
  }
  func.func @transform_2(%arg0: i32) -> (i32, i32) {
    %c0_i32 = arith.constant 0 : i32
    %c0_i32_0 = arith.constant 0 : i32
    %c0_i32_1 = arith.constant 0 : i32
    return %c0_i32, %c0_i32_0 : i32, i32
  }
  func.func @transform_3(%arg0: i32) -> (i32, i32) {
    %c0_i32 = arith.constant 0 : i32
    %c0_i32_0 = arith.constant 0 : i32
    %c0_i32_1 = arith.constant 0 : i32
    return %c0_i32, %c0_i32_0 : i32, i32
  }
  func.func @transform_4(%arg0: i32) -> (i32, i32) {
    %c0_i32 = arith.constant 0 : i32
    %c0_i32_0 = arith.constant 0 : i32
    %c0_i32_1 = arith.constant 0 : i32
    return %c0_i32, %c0_i32_0 : i32, i32
  }
  func.func @transform_5(%arg0: i32) -> (i32, i32) {
    %c0_i32 = arith.constant 0 : i32
    %c0_i32_0 = arith.constant 0 : i32
    %c0_i32_1 = arith.constant 0 : i32
    return %c0_i32, %c0_i32_0 : i32, i32
  }
  func.func @transform_6(%arg0: i32) -> (i32, i32) {
    %c0_i32 = arith.constant 0 : i32
    %c0_i32_0 = arith.constant 0 : i32
    %c0_i32_1 = arith.constant 0 : i32
    return %c0_i32, %c0_i32_0 : i32, i32
  }
  func.func @transform_7(%arg0: i32) -> (i32, i32) {
    %c0_i32 = arith.constant 0 : i32
    %c0_i32_0 = arith.constant 0 : i32
    %c0_i32_1 = arith.constant 0 : i32
    return %c0_i32, %c0_i32_0 : i32, i32
  }
  func.func @transform_8(%arg0: i32) -> (i32, i32) {
    %c0_i32 = arith.constant 0 : i32
    %c0_i32_0 = arith.constant 0 : i32
    %c0_i32_1 = arith.constant 0 : i32
    return %c0_i32, %c0_i32_0 : i32, i32
  }
  func.func @transform_9(%arg0: i32) -> (i32, i32) {
    %c0_i32 = arith.constant 0 : i32
    %c0_i32_0 = arith.constant 0 : i32
    %c0_i32_1 = arith.constant 0 : i32
    return %c0_i32, %c0_i32_0 : i32, i32
  }
  func.func @transform_10(%arg0: i32) -> (i32, i32) {
    %c0_i32 = arith.constant 0 : i32
    %c0_i32_0 = arith.constant 0 : i32
    %c0_i32_1 = arith.constant 0 : i32
    return %c0_i32, %c0_i32_0 : i32, i32
  }
  func.func @transform_11(%arg0: i32) -> (i32, i32) {
    %c0_i32 = arith.constant 0 : i32
    %c0_i32_0 = arith.constant 0 : i32
    return %c0_i32, %arg0 : i32, i32
  }
}

</mosaic_0001>

<llo_original>
// kernel: alternate_weave_layer.3
$region0: #{alternate_weave_layer.3}
  #allocation0 [shape = 'u32[]', space=smem, size = 0x4, offset = 0x4, fixed_abs, tag = 'smem constant byte address 0x4 - core index']
  #allocation1 [shape = 'u32[72,128]{1,0:T(1,128)}', space=vmem, size = 0x9000, scoped, tag = 'internal scratch']
  %s0 = inlined_call_operand.vmem [shape: f32[12,128], index: 0, kind: input, shape index: {}]
  %s1 = inlined_call_operand.vmem [shape: s32[2,128], index: 1, kind: input, shape index: {}]
  %s2 = inlined_call_operand.vmem [shape: f32[128,12], index: 2, kind: input, shape index: {}]
  %s3 = inlined_call_operand.vmem [shape: f32[128,1], index: 3, kind: input, shape index: {}]
  %s4 = inlined_call_operand.vmem [shape: f32[128,1], index: 4, kind: input, shape index: {}]
  %s5 = inlined_call_operand.vmem [shape: f32[128,1], index: 5, kind: input, shape index: {}]
  %s6 = inlined_call_operand.vmem [shape: bf16[128,16], index: 6, kind: input, shape index: {}]
  %s7 = inlined_call_operand.vmem [shape: bf16[128,16], index: 7, kind: input, shape index: {}]
  %s8 = inlined_call_operand.vmem [shape: f32[128,1], index: 8, kind: input, shape index: {}]
  %s9 = inlined_call_operand.vmem [shape: f32[128,1], index: 9, kind: input, shape index: {}]
  %s10 = inlined_call_operand.vmem [shape: f32[128,1], index: 10, kind: input, shape index: {}]
  %s11 = inlined_call_operand.vmem [shape: f32[128,128], index: 11, kind: output, shape index: {}]
  %s12 = sld [smem:[#allocation0]]
  $region54: #{alternate_weave_layer.3} parent=0
    _
  %s14 = ssub.s32 1, %s12
  %s15 = scalar_select 0, %s14, %s12
  // Predicated region
  $region2: #{alternate_weave_layer.3} parent=0 // pred_check
    _
  $region3: #{alternate_weave_layer.3} parent=0 // pred_check_branch
    %17 = sbr.rel (0) target = $region5
  $region4: #{alternate_weave_layer.3} parent=0 // pred_region
    _
  $region5: #{alternate_weave_layer.3} parent=0 // pred_fallthru
    _
  // Predicated region
  $region6: #{alternate_weave_layer.3} parent=0 // pred_check
    _
  $region7: #{alternate_weave_layer.3} parent=0 // pred_check_branch
    %19 = sbr.rel (0) target = $region9
  $region8: #{alternate_weave_layer.3} parent=0 // pred_region
    _
  $region9: #{alternate_weave_layer.3} parent=0 // pred_fallthru
    _
  // Predicated region
  $region10: #{alternate_weave_layer.3} parent=0 // pred_check
    _
  $region11: #{alternate_weave_layer.3} parent=0 // pred_check_branch
    %21 = sbr.rel (0) target = $region13
  $region12: #{alternate_weave_layer.3} parent=0 // pred_region
    _
  $region13: #{alternate_weave_layer.3} parent=0 // pred_fallthru
    _
  // Predicated region
  $region14: #{alternate_weave_layer.3} parent=0 // pred_check
    _
  $region15: #{alternate_weave_layer.3} parent=0 // pred_check_branch
    %23 = sbr.rel (0) target = $region17
  $region16: #{alternate_weave_layer.3} parent=0 // pred_region
    _
  $region17: #{alternate_weave_layer.3} parent=0 // pred_fallthru
    _
  // Predicated region
  $region18: #{alternate_weave_layer.3} parent=0 // pred_check
    _
  $region19: #{alternate_weave_layer.3} parent=0 // pred_check_branch
    %25 = sbr.rel (0) target = $region21
  $region20: #{alternate_weave_layer.3} parent=0 // pred_region
    _
  $region21: #{alternate_weave_layer.3} parent=0 // pred_fallthru
    _
  // Predicated region
  $region22: #{alternate_weave_layer.3} parent=0 // pred_check
    _
  $region23: #{alternate_weave_layer.3} parent=0 // pred_check_branch
    %27 = sbr.rel (0) target = $region25
  $region24: #{alternate_weave_layer.3} parent=0 // pred_region
    _
  $region25: #{alternate_weave_layer.3} parent=0 // pred_fallthru
    _
  // Predicated region
  $region26: #{alternate_weave_layer.3} parent=0 // pred_check
    _
  $region27: #{alternate_weave_layer.3} parent=0 // pred_check_branch
    %29 = sbr.rel (0) target = $region29
  $region28: #{alternate_weave_layer.3} parent=0 // pred_region
    _
  $region29: #{alternate_weave_layer.3} parent=0 // pred_fallthru
    _
  // Predicated region
  $region30: #{alternate_weave_layer.3} parent=0 // pred_check
    _
  $region31: #{alternate_weave_layer.3} parent=0 // pred_check_branch
    %31 = sbr.rel (0) target = $region33
  $region32: #{alternate_weave_layer.3} parent=0 // pred_region
    _
  $region33: #{alternate_weave_layer.3} parent=0 // pred_fallthru
    _
  // Predicated region
  $region34: #{alternate_weave_layer.3} parent=0 // pred_check
    _
  $region35: #{alternate_weave_layer.3} parent=0 // pred_check_branch
    %33 = sbr.rel (0) target = $region37
  $region36: #{alternate_weave_layer.3} parent=0 // pred_region
    _
  $region37: #{alternate_weave_layer.3} parent=0 // pred_fallthru
    _
  // Predicated region
  $region38: #{alternate_weave_layer.3} parent=0 // pred_check
    _
  $region39: #{alternate_weave_layer.3} parent=0 // pred_check_branch
    %35 = sbr.rel (0) target = $region41
  $region40: #{alternate_weave_layer.3} parent=0 // pred_region
    _
  $region41: #{alternate_weave_layer.3} parent=0 // pred_fallthru
    _
  // Predicated region
  $region42: #{alternate_weave_layer.3} parent=0 // pred_check
    _
  $region43: #{alternate_weave_layer.3} parent=0 // pred_check_branch
    %37 = sbr.rel (0) target = $region45
  $region44: #{alternate_weave_layer.3} parent=0 // pred_region
    _
  $region45: #{alternate_weave_layer.3} parent=0 // pred_fallthru
    _
  %v39 = vld [vmem:[%s2] sm:$0xff]
  %v40 = vld [vmem:[%s2 + $0x8] sm:$0xff]
  %v41 = vld [vmem:[%s2 + $0x10] sm:$0xff]
  %v42 = vld [vmem:[%s2 + $0x18] sm:$0xff]
  %v43 = vld [vmem:[%s2 + $0x20] sm:$0xff]
  %v44 = vld [vmem:[%s2 + $0x28] sm:$0xff]
  %v45 = vld [vmem:[%s2 + $0x30] sm:$0xff]
  %v46 = vld [vmem:[%s2 + $0x38] sm:$0xff]
  %v47 = vld [vmem:[%s2 + $0x40] sm:$0xff]
  %v48 = vld [vmem:[%s2 + $0x48] sm:$0xff]
  %v49 = vld [vmem:[%s2 + $0x50] sm:$0xff]
  %v50 = vld [vmem:[%s2 + $0x58] sm:$0xff]
  %v51 = vld [vmem:[%s2 + $0x60] sm:$0xff]
  %v52 = vld [vmem:[%s2 + $0x68] sm:$0xff]
  %v53 = vld [vmem:[%s2 + $0x70] sm:$0xff]
  %v54 = vld [vmem:[%s2 + $0x78] sm:$0xff]
  %v55 = vpack.c.bf16 %v40, %v39
  %v56 = vpack.c.bf16 %v42, %v41
  %v57 = vpack.c.bf16 %v44, %v43
  %v58 = vpack.c.bf16 %v46, %v45
  %v59 = vpack.c.bf16 %v48, %v47
  %v60 = vpack.c.bf16 %v50, %v49
  %v61 = vpack.c.bf16 %v52, %v51
  %v62 = vpack.c.bf16 %v54, %v53
  %v63 = vld [vmem:[%s0] sm:$0xff]
  %v64 = vld [vmem:[%s0 + $0x8] sm:$0xf]
  %v65 = vpack.c.bf16 %v64, %v63
  %v66 = vld [vmem:[%s3] sm:$0xff]
  %v67 = vld [vmem:[%s3 + $0x8] sm:$0xff]
  %v68 = vld [vmem:[%s3 + $0x10] sm:$0xff]
  %v69 = vld [vmem:[%s3 + $0x18] sm:$0xff]
  %v70 = vld [vmem:[%s3 + $0x20] sm:$0xff]
  %v71 = vld [vmem:[%s3 + $0x28] sm:$0xff]
  %v72 = vld [vmem:[%s3 + $0x30] sm:$0xff]
  %v73 = vld [vmem:[%s3 + $0x38] sm:$0xff]
  %v74 = vld [vmem:[%s3 + $0x40] sm:$0xff]
  %v75 = vld [vmem:[%s3 + $0x48] sm:$0xff]
  %v76 = vld [vmem:[%s3 + $0x50] sm:$0xff]
  %v77 = vld [vmem:[%s3 + $0x58] sm:$0xff]
  %v78 = vld [vmem:[%s3 + $0x60] sm:$0xff]
  %v79 = vld [vmem:[%s3 + $0x68] sm:$0xff]
  %v80 = vld [vmem:[%s3 + $0x70] sm:$0xff]
  %v81 = vld [vmem:[%s3 + $0x78] sm:$0xff]
  %83 = vset.pattern.permute.xlu0 0
  %84 = vperm.xlu0 %83, %v66
  %v85 = vpop.permute.xlu0 %84
  %88 = vset.pattern.permute.xlu0 0
  %89 = vperm.xlu0 %88, %v67
  %v90 = vpop.permute.xlu0 %89
  %93 = vset.pattern.permute.xlu0 0
  %94 = vperm.xlu0 %93, %v68
  %v95 = vpop.permute.xlu0 %94
  %98 = vset.pattern.permute.xlu0 0
  %99 = vperm.xlu0 %98, %v69
  %v100 = vpop.permute.xlu0 %99
  %103 = vset.pattern.permute.xlu0 0
  %104 = vperm.xlu0 %103, %v70
  %v105 = vpop.permute.xlu0 %104
  %108 = vset.pattern.permute.xlu0 0
  %109 = vperm.xlu0 %108, %v71
  %v110 = vpop.permute.xlu0 %109
  %113 = vset.pattern.permute.xlu0 0
  %114 = vperm.xlu0 %113, %v72
  %v115 = vpop.permute.xlu0 %114
  %118 = vset.pattern.permute.xlu0 0
  %119 = vperm.xlu0 %118, %v73
  %v120 = vpop.permute.xlu0 %119
  %123 = vset.pattern.permute.xlu0 0
  %124 = vperm.xlu0 %123, %v74
  %v125 = vpop.permute.xlu0 %124
  %128 = vset.pattern.permute.xlu0 0
  %129 = vperm.xlu0 %128, %v75
  %v130 = vpop.permute.xlu0 %129
  %133 = vset.pattern.permute.xlu0 0
  %134 = vperm.xlu0 %133, %v76
  %v135 = vpop.permute.xlu0 %134
  %138 = vset.pattern.permute.xlu0 0
  %139 = vperm.xlu0 %138, %v77
  %v140 = vpop.permute.xlu0 %139
  %143 = vset.pattern.permute.xlu0 0
  %144 = vperm.xlu0 %143, %v78
  %v145 = vpop.permute.xlu0 %144
  %148 = vset.pattern.permute.xlu0 0
  %149 = vperm.xlu0 %148, %v79
  %v150 = vpop.permute.xlu0 %149
  %153 = vset.pattern.permute.xlu0 0
  %154 = vperm.xlu0 %153, %v80
  %v155 = vpop.permute.xlu0 %154
  %158 = vset.pattern.permute.xlu0 0
  %159 = vperm.xlu0 %158, %v81
  %v160 = vpop.permute.xlu0 %159
  %vm162 = vcmask 97280
  %v164 = vsel %vm162, %v55, 0
  %v167 = vsel %vm162, %v56, 0
  %v170 = vsel %vm162, %v57, 0
  %v173 = vsel %vm162, %v58, 0
  %v176 = vsel %vm162, %v59, 0
  %v179 = vsel %vm162, %v60, 0
  %v182 = vsel %vm162, %v61, 0
  %v185 = vsel %vm162, %v62, 0
  %vm187 = vcmask 1045504
  %v189 = vsel %vm187, %v65, 0
  %191 = vmatpush.bf16.msra.mxu0 0
  %192 = vmatpush.bf16.msra.mxu0 0
  %193 = vmatpush.bf16.msra.mxu0 0
  %194 = vmatpush.bf16.msra.mxu0 0
  %195 = vmatpush.bf16.msra.mxu0 0
  %196 = vmatpush.bf16.msra.mxu0 0
  %197 = vmatpush.bf16.msra.mxu0 0
  %198 = vmatpush.bf16.msra.mxu0 %v189
  %199 = vmatmul.bf16.gmra.mxu0 %v164
  %v200 = vpop.f32.mrf.mxu0
  %v201 = vadd.f32 %v85, %v200
  %v202 = vpop.f32.mrf.mxu0
  %v203 = vadd.f32 %v90, %v202
  %204 = vmatmul.bf16.gmra.mxu0 %v167
  %v205 = vpop.f32.mrf.mxu0
  %v206 = vadd.f32 %v95, %v205
  %v207 = vpop.f32.mrf.mxu0
  %v208 = vadd.f32 %v100, %v207
  %209 = vmatmul.bf16.gmra.mxu0 %v170
  %v210 = vpop.f32.mrf.mxu0
  %v211 = vadd.f32 %v105, %v210
  %v212 = vpop.f32.mrf.mxu0
  %v213 = vadd.f32 %v110, %v212
  %214 = vmatmul.bf16.gmra.mxu0 %v173
  %v215 = vpop.f32.mrf.mxu0
  %v216 = vadd.f32 %v115, %v215
  %v217 = vpop.f32.mrf.mxu0
  %v218 = vadd.f32 %v120, %v217
  %219 = vmatmul.bf16.gmra.mxu0 %v176
  %v220 = vpop.f32.mrf.mxu0
  %v221 = vadd.f32 %v125, %v220
  %v222 = vpop.f32.mrf.mxu0
  %v223 = vadd.f32 %v130, %v222
  %224 = vmatmul.bf16.gmra.mxu0 %v179
  %v225 = vpop.f32.mrf.mxu0
  %v226 = vadd.f32 %v135, %v225
  %v227 = vpop.f32.mrf.mxu0
  %v228 = vadd.f32 %v140, %v227
  %229 = vmatmul.bf16.gmra.mxu0 %v182
  %v230 = vpop.f32.mrf.mxu0
  %v231 = vadd.f32 %v145, %v230
  %v232 = vpop.f32.mrf.mxu0
  %v233 = vadd.f32 %v150, %v232
  %234 = vmatmul.bf16.gmra.mxu0 %v185
  %v235 = vpop.f32.mrf.mxu0
  %v236 = vadd.f32 %v155, %v235
  %v237 = vpop.f32.mrf.mxu0
  %v238 = vadd.f32 %v160, %v237
  %239 = vdwg.mxu0
  %v240 = vmax.f32 %v201, 0.0
  %v241 = vmax.f32 %v203, 0.0
  %v242 = vmax.f32 %v206, 0.0
  %v243 = vmax.f32 %v208, 0.0
  %v244 = vmax.f32 %v211, 0.0
  %v245 = vmax.f32 %v213, 0.0
  %v246 = vmax.f32 %v216, 0.0
  %v247 = vmax.f32 %v218, 0.0
  %v248 = vmax.f32 %v221, 0.0
  %v249 = vmax.f32 %v223, 0.0
  %v250 = vmax.f32 %v226, 0.0
  %v251 = vmax.f32 %v228, 0.0
  %v252 = vmax.f32 %v231, 0.0
  %v253 = vmax.f32 %v233, 0.0
  %v254 = vmax.f32 %v236, 0.0
  %v255 = vmax.f32 %v238, 0.0
  %v256 = vld [vmem:[%s9] sm:$0xff]
  %v257 = vld [vmem:[%s9 + $0x8] sm:$0xff]
  %v258 = vld [vmem:[%s9 + $0x10] sm:$0xff]
  %v259 = vld [vmem:[%s9 + $0x18] sm:$0xff]
  %v260 = vld [vmem:[%s9 + $0x20] sm:$0xff]
  %v261 = vld [vmem:[%s9 + $0x28] sm:$0xff]
  %v262 = vld [vmem:[%s9 + $0x30] sm:$0xff]
  %v263 = vld [vmem:[%s9 + $0x38] sm:$0xff]
  %v264 = vld [vmem:[%s9 + $0x40] sm:$0xff]
  %v265 = vld [vmem:[%s9 + $0x48] sm:$0xff]
  %v266 = vld [vmem:[%s9 + $0x50] sm:$0xff]
  %v267 = vld [vmem:[%s9 + $0x58] sm:$0xff]
  %v268 = vld [vmem:[%s9 + $0x60] sm:$0xff]
  %v269 = vld [vmem:[%s9 + $0x68] sm:$0xff]
  %v270 = vld [vmem:[%s9 + $0x70] sm:$0xff]
  %v271 = vld [vmem:[%s9 + $0x78] sm:$0xff]
  %273 = vset.pattern.permute.xlu0 0
  %274 = vperm.xlu0 %273, %v256
  %v275 = vpop.permute.xlu0 %274
  %278 = vset.pattern.permute.xlu0 0
  %279 = vperm.xlu0 %278, %v257
  %v280 = vpop.permute.xlu0 %279
  %283 = vset.pattern.permute.xlu0 0
  %284 = vperm.xlu0 %283, %v258
  %v285 = vpop.permute.xlu0 %284
  %288 = vset.pattern.permute.xlu0 0
  %289 = vperm.xlu0 %288, %v259
  %v290 = vpop.permute.xlu0 %289
  %293 = vset.pattern.permute.xlu0 0
  %294 = vperm.xlu0 %293, %v260
  %v295 = vpop.permute.xlu0 %294
  %298 = vset.pattern.permute.xlu0 0
  %299 = vperm.xlu0 %298, %v261
  %v300 = vpop.permute.xlu0 %299
  %303 = vset.pattern.permute.xlu0 0
  %304 = vperm.xlu0 %303, %v262
  %v305 = vpop.permute.xlu0 %304
  %308 = vset.pattern.permute.xlu0 0
  %309 = vperm.xlu0 %308, %v263
  %v310 = vpop.permute.xlu0 %309
  %313 = vset.pattern.permute.xlu0 0
  %314 = vperm.xlu0 %313, %v264
  %v315 = vpop.permute.xlu0 %314
  %318 = vset.pattern.permute.xlu0 0
  %319 = vperm.xlu0 %318, %v265
  %v320 = vpop.permute.xlu0 %319
  %323 = vset.pattern.permute.xlu0 0
  %324 = vperm.xlu0 %323, %v266
  %v325 = vpop.permute.xlu0 %324
  %328 = vset.pattern.permute.xlu0 0
  %329 = vperm.xlu0 %328, %v267
  %v330 = vpop.permute.xlu0 %329
  %333 = vset.pattern.permute.xlu0 0
  %334 = vperm.xlu0 %333, %v268
  %v335 = vpop.permute.xlu0 %334
  %338 = vset.pattern.permute.xlu0 0
  %339 = vperm.xlu0 %338, %v269
  %v340 = vpop.permute.xlu0 %339
  %343 = vset.pattern.permute.xlu0 0
  %344 = vperm.xlu0 %343, %v270
  %v345 = vpop.permute.xlu0 %344
  %348 = vset.pattern.permute.xlu0 0
  %349 = vperm.xlu0 %348, %v271
  %v350 = vpop.permute.xlu0 %349
  %v352 = vsub.f32 %v240, %v275
  %v353 = vsub.f32 %v241, %v280
  %v354 = vsub.f32 %v242, %v285
  %v355 = vsub.f32 %v243, %v290
  %v356 = vsub.f32 %v244, %v295
  %v357 = vsub.f32 %v245, %v300
  %v358 = vsub.f32 %v246, %v305
  %v359 = vsub.f32 %v247, %v310
  %v360 = vsub.f32 %v248, %v315
  %v361 = vsub.f32 %v249, %v320
  %v362 = vsub.f32 %v250, %v325
  %v363 = vsub.f32 %v251, %v330
  %v364 = vsub.f32 %v252, %v335
  %v365 = vsub.f32 %v253, %v340
  %v366 = vsub.f32 %v254, %v345
  %v367 = vsub.f32 %v255, %v350
  %v368 = vld [vmem:[%s10] sm:$0xff]
  %v369 = vld [vmem:[%s10 + $0x8] sm:$0xff]
  %v370 = vld [vmem:[%s10 + $0x10] sm:$0xff]
  %v371 = vld [vmem:[%s10 + $0x18] sm:$0xff]
  %v372 = vld [vmem:[%s10 + $0x20] sm:$0xff]
  %v373 = vld [vmem:[%s10 + $0x28] sm:$0xff]
  %v374 = vld [vmem:[%s10 + $0x30] sm:$0xff]
  %v375 = vld [vmem:[%s10 + $0x38] sm:$0xff]
  %v376 = vld [vmem:[%s10 + $0x40] sm:$0xff]
  %v377 = vld [vmem:[%s10 + $0x48] sm:$0xff]
  %v378 = vld [vmem:[%s10 + $0x50] sm:$0xff]
  %v379 = vld [vmem:[%s10 + $0x58] sm:$0xff]
  %v380 = vld [vmem:[%s10 + $0x60] sm:$0xff]
  %v381 = vld [vmem:[%s10 + $0x68] sm:$0xff]
  %v382 = vld [vmem:[%s10 + $0x70] sm:$0xff]
  %v383 = vld [vmem:[%s10 + $0x78] sm:$0xff]
  %385 = vset.pattern.permute.xlu0 0
  %386 = vperm.xlu0 %385, %v368
  %v387 = vpop.permute.xlu0 %386
  %390 = vset.pattern.permute.xlu0 0
  %391 = vperm.xlu0 %390, %v369
  %v392 = vpop.permute.xlu0 %391
  %395 = vset.pattern.permute.xlu0 0
  %396 = vperm.xlu0 %395, %v370
  %v397 = vpop.permute.xlu0 %396
  %400 = vset.pattern.permute.xlu0 0
  %401 = vperm.xlu0 %400, %v371
  %v402 = vpop.permute.xlu0 %401
  %405 = vset.pattern.permute.xlu0 0
  %406 = vperm.xlu0 %405, %v372
  %v407 = vpop.permute.xlu0 %406
  %410 = vset.pattern.permute.xlu0 0
  %411 = vperm.xlu0 %410, %v373
  %v412 = vpop.permute.xlu0 %411
  %415 = vset.pattern.permute.xlu0 0
  %416 = vperm.xlu0 %415, %v374
  %v417 = vpop.permute.xlu0 %416
  %420 = vset.pattern.permute.xlu0 0
  %421 = vperm.xlu0 %420, %v375
  %v422 = vpop.permute.xlu0 %421
  %425 = vset.pattern.permute.xlu0 0
  %426 = vperm.xlu0 %425, %v376
  %v427 = vpop.permute.xlu0 %426
  %430 = vset.pattern.permute.xlu0 0
  %431 = vperm.xlu0 %430, %v377
  %v432 = vpop.permute.xlu0 %431
  %435 = vset.pattern.permute.xlu0 0
  %436 = vperm.xlu0 %435, %v378
  %v437 = vpop.permute.xlu0 %436
  %440 = vset.pattern.permute.xlu0 0
  %441 = vperm.xlu0 %440, %v379
  %v442 = vpop.permute.xlu0 %441
  %445 = vset.pattern.permute.xlu0 0
  %446 = vperm.xlu0 %445, %v380
  %v447 = vpop.permute.xlu0 %446
  %450 = vset.pattern.permute.xlu0 0
  %451 = vperm.xlu0 %450, %v381
  %v452 = vpop.permute.xlu0 %451
  %455 = vset.pattern.permute.xlu0 0
  %456 = vperm.xlu0 %455, %v382
  %v457 = vpop.permute.xlu0 %456
  %460 = vset.pattern.permute.xlu0 0
  %461 = vperm.xlu0 %460, %v383
  %v462 = vpop.permute.xlu0 %461
  %v464 = vmul.f32 %v352, %v387
  %v465 = vmul.f32 %v353, %v392
  %v466 = vmul.f32 %v354, %v397
  %v467 = vmul.f32 %v355, %v402
  %v468 = vmul.f32 %v356, %v407
  %v469 = vmul.f32 %v357, %v412
  %v470 = vmul.f32 %v358, %v417
  %v471 = vmul.f32 %v359, %v422
  %v472 = vmul.f32 %v360, %v427
  %v473 = vmul.f32 %v361, %v432
  %v474 = vmul.f32 %v362, %v437
  %v475 = vmul.f32 %v363, %v442
  %v476 = vmul.f32 %v364, %v447
  %v477 = vmul.f32 %v365, %v452
  %v478 = vmul.f32 %v366, %v457
  %v479 = vmul.f32 %v367, %v462
  %v480 = vld [vmem:[%s4] sm:$0xff]
  %v481 = vld [vmem:[%s4 + $0x8] sm:$0xff]
  %v482 = vld [vmem:[%s4 + $0x10] sm:$0xff]
  %v483 = vld [vmem:[%s4 + $0x18] sm:$0xff]
  %v484 = vld [vmem:[%s4 + $0x20] sm:$0xff]
  %v485 = vld [vmem:[%s4 + $0x28] sm:$0xff]
  %v486 = vld [vmem:[%s4 + $0x30] sm:$0xff]
  %v487 = vld [vmem:[%s4 + $0x38] sm:$0xff]
  %v488 = vld [vmem:[%s4 + $0x40] sm:$0xff]
  %v489 = vld [vmem:[%s4 + $0x48] sm:$0xff]
  %v490 = vld [vmem:[%s4 + $0x50] sm:$0xff]
  %v491 = vld [vmem:[%s4 + $0x58] sm:$0xff]
  %v492 = vld [vmem:[%s4 + $0x60] sm:$0xff]
  %v493 = vld [vmem:[%s4 + $0x68] sm:$0xff]
  %v494 = vld [vmem:[%s4 + $0x70] sm:$0xff]
  %v495 = vld [vmem:[%s4 + $0x78] sm:$0xff]
  %497 = vset.pattern.permute.xlu0 0
  %498 = vperm.xlu0 %497, %v480
  %v499 = vpop.permute.xlu0 %498
  %502 = vset.pattern.permute.xlu0 0
  %503 = vperm.xlu0 %502, %v481
  %v504 = vpop.permute.xlu0 %503
  %507 = vset.pattern.permute.xlu0 0
  %508 = vperm.xlu0 %507, %v482
  %v509 = vpop.permute.xlu0 %508
  %512 = vset.pattern.permute.xlu0 0
  %513 = vperm.xlu0 %512, %v483
  %v514 = vpop.permute.xlu0 %513
  %517 = vset.pattern.permute.xlu0 0
  %518 = vperm.xlu0 %517, %v484
  %v519 = vpop.permute.xlu0 %518
  %522 = vset.pattern.permute.xlu0 0
  %523 = vperm.xlu0 %522, %v485
  %v524 = vpop.permute.xlu0 %523
  %527 = vset.pattern.permute.xlu0 0
  %528 = vperm.xlu0 %527, %v486
  %v529 = vpop.permute.xlu0 %528
  %532 = vset.pattern.permute.xlu0 0
  %533 = vperm.xlu0 %532, %v487
  %v534 = vpop.permute.xlu0 %533
  %537 = vset.pattern.permute.xlu0 0
  %538 = vperm.xlu0 %537, %v488
  %v539 = vpop.permute.xlu0 %538
  %542 = vset.pattern.permute.xlu0 0
  %543 = vperm.xlu0 %542, %v489
  %v544 = vpop.permute.xlu0 %543
  %547 = vset.pattern.permute.xlu0 0
  %548 = vperm.xlu0 %547, %v490
  %v549 = vpop.permute.xlu0 %548
  %552 = vset.pattern.permute.xlu0 0
  %553 = vperm.xlu0 %552, %v491
  %v554 = vpop.permute.xlu0 %553
  %557 = vset.pattern.permute.xlu0 0
  %558 = vperm.xlu0 %557, %v492
  %v559 = vpop.permute.xlu0 %558
  %562 = vset.pattern.permute.xlu0 0
  %563 = vperm.xlu0 %562, %v493
  %v564 = vpop.permute.xlu0 %563
  %567 = vset.pattern.permute.xlu0 0
  %568 = vperm.xlu0 %567, %v494
  %v569 = vpop.permute.xlu0 %568
  %572 = vset.pattern.permute.xlu0 0
  %573 = vperm.xlu0 %572, %v495
  %v574 = vpop.permute.xlu0 %573
  %v576 = vmul.f32 %v464, %v499
  %v577 = vmul.f32 %v465, %v504
  %v578 = vmul.f32 %v466, %v509
  %v579 = vmul.f32 %v467, %v514
  %v580 = vmul.f32 %v468, %v519
  %v581 = vmul.f32 %v469, %v524
  %v582 = vmul.f32 %v470, %v529
  %v583 = vmul.f32 %v471, %v534
  %v584 = vmul.f32 %v472, %v539
  %v585 = vmul.f32 %v473, %v544
  %v586 = vmul.f32 %v474, %v549
  %v587 = vmul.f32 %v475, %v554
  %v588 = vmul.f32 %v476, %v559
  %v589 = vmul.f32 %v477, %v564
  %v590 = vmul.f32 %v478, %v569
  %v591 = vmul.f32 %v479, %v574
  %v592 = vld [vmem:[%s5] sm:$0xff]
  %v593 = vld [vmem:[%s5 + $0x8] sm:$0xff]
  %v594 = vld [vmem:[%s5 + $0x10] sm:$0xff]
  %v595 = vld [vmem:[%s5 + $0x18] sm:$0xff]
  %v596 = vld [vmem:[%s5 + $0x20] sm:$0xff]
  %v597 = vld [vmem:[%s5 + $0x28] sm:$0xff]
  %v598 = vld [vmem:[%s5 + $0x30] sm:$0xff]
  %v599 = vld [vmem:[%s5 + $0x38] sm:$0xff]
  %v600 = vld [vmem:[%s5 + $0x40] sm:$0xff]
  %v601 = vld [vmem:[%s5 + $0x48] sm:$0xff]
  %v602 = vld [vmem:[%s5 + $0x50] sm:$0xff]
  %v603 = vld [vmem:[%s5 + $0x58] sm:$0xff]
  %v604 = vld [vmem:[%s5 + $0x60] sm:$0xff]
  %v605 = vld [vmem:[%s5 + $0x68] sm:$0xff]
  %v606 = vld [vmem:[%s5 + $0x70] sm:$0xff]
  %v607 = vld [vmem:[%s5 + $0x78] sm:$0xff]
  %609 = vset.pattern.permute.xlu0 0
  %610 = vperm.xlu0 %609, %v592
  %v611 = vpop.permute.xlu0 %610
  %614 = vset.pattern.permute.xlu0 0
  %615 = vperm.xlu0 %614, %v593
  %v616 = vpop.permute.xlu0 %615
  %619 = vset.pattern.permute.xlu0 0
  %620 = vperm.xlu0 %619, %v594
  %v621 = vpop.permute.xlu0 %620
  %624 = vset.pattern.permute.xlu0 0
  %625 = vperm.xlu0 %624, %v595
  %v626 = vpop.permute.xlu0 %625
  %629 = vset.pattern.permute.xlu0 0
  %630 = vperm.xlu0 %629, %v596
  %v631 = vpop.permute.xlu0 %630
  %634 = vset.pattern.permute.xlu0 0
  %635 = vperm.xlu0 %634, %v597
  %v636 = vpop.permute.xlu0 %635
  %639 = vset.pattern.permute.xlu0 0
  %640 = vperm.xlu0 %639, %v598
  %v641 = vpop.permute.xlu0 %640
  %644 = vset.pattern.permute.xlu0 0
  %645 = vperm.xlu0 %644, %v599
  %v646 = vpop.permute.xlu0 %645
  %649 = vset.pattern.permute.xlu0 0
  %650 = vperm.xlu0 %649, %v600
  %v651 = vpop.permute.xlu0 %650
  %654 = vset.pattern.permute.xlu0 0
  %655 = vperm.xlu0 %654, %v601
  %v656 = vpop.permute.xlu0 %655
  %659 = vset.pattern.permute.xlu0 0
  %660 = vperm.xlu0 %659, %v602
  %v661 = vpop.permute.xlu0 %660
  %664 = vset.pattern.permute.xlu0 0
  %665 = vperm.xlu0 %664, %v603
  %v666 = vpop.permute.xlu0 %665
  %669 = vset.pattern.permute.xlu0 0
  %670 = vperm.xlu0 %669, %v604
  %v671 = vpop.permute.xlu0 %670
  %674 = vset.pattern.permute.xlu0 0
  %675 = vperm.xlu0 %674, %v605
  %v676 = vpop.permute.xlu0 %675
  %679 = vset.pattern.permute.xlu0 0
  %680 = vperm.xlu0 %679, %v606
  %v681 = vpop.permute.xlu0 %680
  %684 = vset.pattern.permute.xlu0 0
  %685 = vperm.xlu0 %684, %v607
  %v686 = vpop.permute.xlu0 %685
  %v688 = vadd.f32 %v576, %v611
  %v689 = vadd.f32 %v577, %v616
  %v690 = vadd.f32 %v578, %v621
  %v691 = vadd.f32 %v579, %v626
  %v692 = vadd.f32 %v580, %v631
  %v693 = vadd.f32 %v581, %v636
  %v694 = vadd.f32 %v582, %v641
  %v695 = vadd.f32 %v583, %v646
  %v696 = vadd.f32 %v584, %v651
  %v697 = vadd.f32 %v585, %v656
  %v698 = vadd.f32 %v586, %v661
  %v699 = vadd.f32 %v587, %v666
  %v700 = vadd.f32 %v588, %v671
  %v701 = vadd.f32 %v589, %v676
  %v702 = vadd.f32 %v590, %v681
  %v703 = vadd.f32 %v591, %v686
  %v704 = vld [vmem:[%s1] sm:$0x3]
  %v705 = vlaneseq
  %v706 = vshrl.u32 %v705, 7
  %v707 = vadd.s32 %v706, 8
  %v708 = vperm.slane %v704, 0
  %vm709 = vcmp.eq.s32.totalorder %v706, %v708
  %vm710 = vcmp.eq.s32.totalorder %v707, %v708
  %v711 = vsel %vm709, 1.0, 0.0
  %v712 = vsel %vm710, 1.0, 0.0
  %v713 = vpack.c.bf16 %v712, %v711
  %v714 = vperm.slane %v704, 1
  %vm715 = vcmp.eq.s32.totalorder %v706, %v714
  %vm716 = vcmp.eq.s32.totalorder %v707, %v714
  %v717 = vsel %vm715, 1.0, 0.0
  %v718 = vsel %vm716, 1.0, 0.0
  %v719 = vpack.c.bf16 %v718, %v717
  %v720 = vld [vmem:[%s6] sm:$0xf]
  %v721 = vld [vmem:[%s6 + $0x4] sm:$0xf]
  %v722 = vld [vmem:[%s6 + $0x8] sm:$0xf]
  %v723 = vld [vmem:[%s6 + $0xc] sm:$0xf]
  %v724 = vld [vmem:[%s6 + $0x10] sm:$0xf]
  %v725 = vld [vmem:[%s6 + $0x14] sm:$0xf]
  %v726 = vld [vmem:[%s6 + $0x18] sm:$0xf]
  %v727 = vld [vmem:[%s6 + $0x1c] sm:$0xf]
  %v728 = vld [vmem:[%s6 + $0x20] sm:$0xf]
  %v729 = vld [vmem:[%s6 + $0x24] sm:$0xf]
  %v730 = vld [vmem:[%s6 + $0x28] sm:$0xf]
  %v731 = vld [vmem:[%s6 + $0x2c] sm:$0xf]
  %v732 = vld [vmem:[%s6 + $0x30] sm:$0xf]
  %v733 = vld [vmem:[%s6 + $0x34] sm:$0xf]
  %v734 = vld [vmem:[%s6 + $0x38] sm:$0xf]
  %v735 = vld [vmem:[%s6 + $0x3c] sm:$0xf]
  %v736 = vld [vmem:[%s7] sm:$0xf]
  %v737 = vld [vmem:[%s7 + $0x4] sm:$0xf]
  %v738 = vld [vmem:[%s7 + $0x8] sm:$0xf]
  %v739 = vld [vmem:[%s7 + $0xc] sm:$0xf]
  %v740 = vld [vmem:[%s7 + $0x10] sm:$0xf]
  %v741 = vld [vmem:[%s7 + $0x14] sm:$0xf]
  %v742 = vld [vmem:[%s7 + $0x18] sm:$0xf]
  %v743 = vld [vmem:[%s7 + $0x1c] sm:$0xf]
  %v744 = vld [vmem:[%s7 + $0x20] sm:$0xf]
  %v745 = vld [vmem:[%s7 + $0x24] sm:$0xf]
  %v746 = vld [vmem:[%s7 + $0x28] sm:$0xf]
  %v747 = vld [vmem:[%s7 + $0x2c] sm:$0xf]
  %v748 = vld [vmem:[%s7 + $0x30] sm:$0xf]
  %v749 = vld [vmem:[%s7 + $0x34] sm:$0xf]
  %v750 = vld [vmem:[%s7 + $0x38] sm:$0xf]
  %v751 = vld [vmem:[%s7 + $0x3c] sm:$0xf]
  %v768 = vunpack.c.l.b16 %v736
  %v769 = vunpack.c.l.b16 %v737
  %v770 = vunpack.c.l.b16 %v738
  %v771 = vunpack.c.l.b16 %v739
  %v772 = vunpack.c.l.b16 %v740
  %v773 = vunpack.c.l.b16 %v741
  %v774 = vunpack.c.l.b16 %v742
  %v775 = vunpack.c.l.b16 %v743
  %v776 = vunpack.c.l.b16 %v744
  %v777 = vunpack.c.l.b16 %v745
  %v778 = vunpack.c.l.b16 %v746
  %v779 = vunpack.c.l.b16 %v747
  %v780 = vunpack.c.l.b16 %v748
  %v781 = vunpack.c.l.b16 %v749
  %v782 = vunpack.c.l.b16 %v750
  %v783 = vunpack.c.l.b16 %v751
  %v784 = vpack.c.b16 %v769, %v768
  %v785 = vpack.c.b16 %v771, %v770
  %v786 = vpack.c.b16 %v773, %v772
  %v787 = vpack.c.b16 %v775, %v774
  %v788 = vpack.c.b16 %v777, %v776
  %v789 = vpack.c.b16 %v779, %v778
  %v790 = vpack.c.b16 %v781, %v780
  %v791 = vpack.c.b16 %v783, %v782
  %vm792 = vcmask 130048
  %v794 = vsel %vm792, %v784, 0
  %v797 = vsel %vm792, %v785, 0
  %v800 = vsel %vm792, %v786, 0
  %v803 = vsel %vm792, %v787, 0
  %v806 = vsel %vm792, %v788, 0
  %v809 = vsel %vm792, %v789, 0
  %v812 = vsel %vm792, %v790, 0
  %v815 = vsel %vm792, %v791, 0
  %817 = vmatpush.bf16.msra.mxu0 0
  %818 = vmatpush.bf16.msra.mxu0 0
  %819 = vmatpush.bf16.msra.mxu0 0
  %820 = vmatpush.bf16.msra.mxu0 0
  %821 = vmatpush.bf16.msra.mxu0 0
  %822 = vmatpush.bf16.msra.mxu0 0
  %823 = vmatpush.bf16.msra.mxu0 0
  %824 = vmatpush.bf16.msra.mxu0 %v719
  %825 = vmatmul.bf16.gmra.mxu0 %v794
  %v826 = vpop.f32.mrf.mxu0
  %v827 = vadd.f32 0.0, %v826
  %v828 = vpop.f32.mrf.mxu0
  %v829 = vadd.f32 0.0, %v828
  %830 = vmatmul.bf16.gmra.mxu0 %v797
  %v831 = vpop.f32.mrf.mxu0
  %v832 = vadd.f32 0.0, %v831
  %v833 = vpop.f32.mrf.mxu0
  %v834 = vadd.f32 0.0, %v833
  %835 = vmatmul.bf16.gmra.mxu0 %v800
  %v836 = vpop.f32.mrf.mxu0
  %v837 = vadd.f32 0.0, %v836
  %v838 = vpop.f32.mrf.mxu0
  %v839 = vadd.f32 0.0, %v838
  %840 = vmatmul.bf16.gmra.mxu0 %v803
  %v841 = vpop.f32.mrf.mxu0
  %v842 = vadd.f32 0.0, %v841
  %v843 = vpop.f32.mrf.mxu0
  %v844 = vadd.f32 0.0, %v843
  %845 = vmatmul.bf16.gmra.mxu0 %v806
  %v846 = vpop.f32.mrf.mxu0
  %v847 = vadd.f32 0.0, %v846
  %v848 = vpop.f32.mrf.mxu0
  %v849 = vadd.f32 0.0, %v848
  %850 = vmatmul.bf16.gmra.mxu0 %v809
  %v851 = vpop.f32.mrf.mxu0
  %v852 = vadd.f32 0.0, %v851
  %v853 = vpop.f32.mrf.mxu0
  %v854 = vadd.f32 0.0, %v853
  %855 = vmatmul.bf16.gmra.mxu0 %v812
  %v856 = vpop.f32.mrf.mxu0
  %v857 = vadd.f32 0.0, %v856
  %v858 = vpop.f32.mrf.mxu0
  %v859 = vadd.f32 0.0, %v858
  %860 = vmatmul.bf16.gmra.mxu0 %v815
  %v861 = vpop.f32.mrf.mxu0
  %v862 = vadd.f32 0.0, %v861
  %v863 = vpop.f32.mrf.mxu0
  %v864 = vadd.f32 0.0, %v863
  %865 = vdwg.mxu0
  %v882 = vunpack.c.l.b16 %v720
  %v883 = vunpack.c.l.b16 %v721
  %v884 = vunpack.c.l.b16 %v722
  %v885 = vunpack.c.l.b16 %v723
  %v886 = vunpack.c.l.b16 %v724
  %v887 = vunpack.c.l.b16 %v725
  %v888 = vunpack.c.l.b16 %v726
  %v889 = vunpack.c.l.b16 %v727
  %v890 = vunpack.c.l.b16 %v728
  %v891 = vunpack.c.l.b16 %v729
  %v892 = vunpack.c.l.b16 %v730
  %v893 = vunpack.c.l.b16 %v731
  %v894 = vunpack.c.l.b16 %v732
  %v895 = vunpack.c.l.b16 %v733
  %v896 = vunpack.c.l.b16 %v734
  %v897 = vunpack.c.l.b16 %v735
  %v898 = vpack.c.b16 %v883, %v882
  %v899 = vpack.c.b16 %v885, %v884
  %v900 = vpack.c.b16 %v887, %v886
  %v901 = vpack.c.b16 %v889, %v888
  %v902 = vpack.c.b16 %v891, %v890
  %v903 = vpack.c.b16 %v893, %v892
  %v904 = vpack.c.b16 %v895, %v894
  %v905 = vpack.c.b16 %v897, %v896
  %v907 = vsel %vm792, %v898, 0
  %v910 = vsel %vm792, %v899, 0
  %v913 = vsel %vm792, %v900, 0
  %v916 = vsel %vm792, %v901, 0
  %v919 = vsel %vm792, %v902, 0
  %v922 = vsel %vm792, %v903, 0
  %v925 = vsel %vm792, %v904, 0
  %v928 = vsel %vm792, %v905, 0
  %930 = vmatpush.bf16.msra.mxu0 0
  %931 = vmatpush.bf16.msra.mxu0 0
  %932 = vmatpush.bf16.msra.mxu0 0
  %933 = vmatpush.bf16.msra.mxu0 0
  %934 = vmatpush.bf16.msra.mxu0 0
  %935 = vmatpush.bf16.msra.mxu0 0
  %936 = vmatpush.bf16.msra.mxu0 0
  %937 = vmatpush.bf16.msra.mxu0 %v713
  %938 = vmatmul.bf16.gmra.mxu0 %v907
  %v939 = vpop.f32.mrf.mxu0
  %v940 = vadd.f32 %v827, %v939
  %v941 = vpop.f32.mrf.mxu0
  %v942 = vadd.f32 %v829, %v941
  %943 = vmatmul.bf16.gmra.mxu0 %v910
  %v944 = vpop.f32.mrf.mxu0
  %v945 = vadd.f32 %v832, %v944
  %v946 = vpop.f32.mrf.mxu0
  %v947 = vadd.f32 %v834, %v946
  %948 = vmatmul.bf16.gmra.mxu0 %v913
  %v949 = vpop.f32.mrf.mxu0
  %v950 = vadd.f32 %v837, %v949
  %v951 = vpop.f32.mrf.mxu0
  %v952 = vadd.f32 %v839, %v951
  %953 = vmatmul.bf16.gmra.mxu0 %v916
  %v954 = vpop.f32.mrf.mxu0
  %v955 = vadd.f32 %v842, %v954
  %v956 = vpop.f32.mrf.mxu0
  %v957 = vadd.f32 %v844, %v956
  %958 = vmatmul.bf16.gmra.mxu0 %v919
  %v959 = vpop.f32.mrf.mxu0
  %v960 = vadd.f32 %v847, %v959
  %v961 = vpop.f32.mrf.mxu0
  %v962 = vadd.f32 %v849, %v961
  %963 = vmatmul.bf16.gmra.mxu0 %v922
  %v964 = vpop.f32.mrf.mxu0
  %v965 = vadd.f32 %v852, %v964
  %v966 = vpop.f32.mrf.mxu0
  %v967 = vadd.f32 %v854, %v966
  %968 = vmatmul.bf16.gmra.mxu0 %v925
  %v969 = vpop.f32.mrf.mxu0
  %v970 = vadd.f32 %v857, %v969
  %v971 = vpop.f32.mrf.mxu0
  %v972 = vadd.f32 %v859, %v971
  %973 = vmatmul.bf16.gmra.mxu0 %v928
  %v974 = vpop.f32.mrf.mxu0
  %v975 = vadd.f32 %v862, %v974
  %v976 = vpop.f32.mrf.mxu0
  %v977 = vadd.f32 %v864, %v976
  %978 = vdwg.mxu0
  %v979 = vld [vmem:[%s8] sm:$0xff]
  %v980 = vld [vmem:[%s8 + $0x8] sm:$0xff]
  %v981 = vld [vmem:[%s8 + $0x10] sm:$0xff]
  %v982 = vld [vmem:[%s8 + $0x18] sm:$0xff]
  %v983 = vld [vmem:[%s8 + $0x20] sm:$0xff]
  %v984 = vld [vmem:[%s8 + $0x28] sm:$0xff]
  %v985 = vld [vmem:[%s8 + $0x30] sm:$0xff]
  %v986 = vld [vmem:[%s8 + $0x38] sm:$0xff]
  %v987 = vld [vmem:[%s8 + $0x40] sm:$0xff]
  %v988 = vld [vmem:[%s8 + $0x48] sm:$0xff]
  %v989 = vld [vmem:[%s8 + $0x50] sm:$0xff]
  %v990 = vld [vmem:[%s8 + $0x58] sm:$0xff]
  %v991 = vld [vmem:[%s8 + $0x60] sm:$0xff]
  %v992 = vld [vmem:[%s8 + $0x68] sm:$0xff]
  %v993 = vld [vmem:[%s8 + $0x70] sm:$0xff]
  %v994 = vld [vmem:[%s8 + $0x78] sm:$0xff]
  %996 = vset.pattern.permute.xlu0 0
  %997 = vperm.xlu0 %996, %v979
  %v998 = vpop.permute.xlu0 %997
  %1001 = vset.pattern.permute.xlu0 0
  %1002 = vperm.xlu0 %1001, %v980
  %v1003 = vpop.permute.xlu0 %1002
  %1006 = vset.pattern.permute.xlu0 0
  %1007 = vperm.xlu0 %1006, %v981
  %v1008 = vpop.permute.xlu0 %1007
  %1011 = vset.pattern.permute.xlu0 0
  %1012 = vperm.xlu0 %1011, %v982
  %v1013 = vpop.permute.xlu0 %1012
  %1016 = vset.pattern.permute.xlu0 0
  %1017 = vperm.xlu0 %1016, %v983
  %v1018 = vpop.permute.xlu0 %1017
  %1021 = vset.pattern.permute.xlu0 0
  %1022 = vperm.xlu0 %1021, %v984
  %v1023 = vpop.permute.xlu0 %1022
  %1026 = vset.pattern.permute.xlu0 0
  %1027 = vperm.xlu0 %1026, %v985
  %v1028 = vpop.permute.xlu0 %1027
  %1031 = vset.pattern.permute.xlu0 0
  %1032 = vperm.xlu0 %1031, %v986
  %v1033 = vpop.permute.xlu0 %1032
  %1036 = vset.pattern.permute.xlu0 0
  %1037 = vperm.xlu0 %1036, %v987
  %v1038 = vpop.permute.xlu0 %1037
  %1041 = vset.pattern.permute.xlu0 0
  %1042 = vperm.xlu0 %1041, %v988
  %v1043 = vpop.permute.xlu0 %1042
  %1046 = vset.pattern.permute.xlu0 0
  %1047 = vperm.xlu0 %1046, %v989
  %v1048 = vpop.permute.xlu0 %1047
  %1051 = vset.pattern.permute.xlu0 0
  %1052 = vperm.xlu0 %1051, %v990
  %v1053 = vpop.permute.xlu0 %1052
  %1056 = vset.pattern.permute.xlu0 0
  %1057 = vperm.xlu0 %1056, %v991
  %v1058 = vpop.permute.xlu0 %1057
  %1061 = vset.pattern.permute.xlu0 0
  %1062 = vperm.xlu0 %1061, %v992
  %v1063 = vpop.permute.xlu0 %1062
  %1066 = vset.pattern.permute.xlu0 0
  %1067 = vperm.xlu0 %1066, %v993
  %v1068 = vpop.permute.xlu0 %1067
  %1071 = vset.pattern.permute.xlu0 0
  %1072 = vperm.xlu0 %1071, %v994
  %v1073 = vpop.permute.xlu0 %1072
  %v1075 = vadd.f32 %v940, %v998
  %v1076 = vadd.f32 %v942, %v1003
  %v1077 = vadd.f32 %v945, %v1008
  %v1078 = vadd.f32 %v947, %v1013
  %v1079 = vadd.f32 %v950, %v1018
  %v1080 = vadd.f32 %v952, %v1023
  %v1081 = vadd.f32 %v955, %v1028
  %v1082 = vadd.f32 %v957, %v1033
  %v1083 = vadd.f32 %v960, %v1038
  %v1084 = vadd.f32 %v962, %v1043
  %v1085 = vadd.f32 %v965, %v1048
  %v1086 = vadd.f32 %v967, %v1053
  %v1087 = vadd.f32 %v970, %v1058
  %v1088 = vadd.f32 %v972, %v1063
  %v1089 = vadd.f32 %v975, %v1068
  %v1090 = vadd.f32 %v977, %v1073
  %v1091 = vadd.f32 %v1075, %v688
  %v1092 = vadd.f32 %v1076, %v689
  %v1093 = vadd.f32 %v1077, %v690
  %v1094 = vadd.f32 %v1078, %v691
  %v1095 = vadd.f32 %v1079, %v692
  %v1096 = vadd.f32 %v1080, %v693
  %v1097 = vadd.f32 %v1081, %v694
  %v1098 = vadd.f32 %v1082, %v695
  %v1099 = vadd.f32 %v1083, %v696
  %v1100 = vadd.f32 %v1084, %v697
  %v1101 = vadd.f32 %v1085, %v698
  %v1102 = vadd.f32 %v1086, %v699
  %v1103 = vadd.f32 %v1087, %v700
  %v1104 = vadd.f32 %v1088, %v701
  %v1105 = vadd.f32 %v1089, %v702
  %v1106 = vadd.f32 %v1090, %v703
  %1107 = vst [vmem:[%s11] sm:$0xff] %v1091
  %1108 = vst [vmem:[%s11 + $0x8] sm:$0xff] %v1092
  %1109 = vst [vmem:[%s11 + $0x10] sm:$0xff] %v1093
  %1110 = vst [vmem:[%s11 + $0x18] sm:$0xff] %v1094
  %1111 = vst [vmem:[%s11 + $0x20] sm:$0xff] %v1095
  %1112 = vst [vmem:[%s11 + $0x28] sm:$0xff] %v1096
  %1113 = vst [vmem:[%s11 + $0x30] sm:$0xff] %v1097
  %1114 = vst [vmem:[%s11 + $0x38] sm:$0xff] %v1098
  %1115 = vst [vmem:[%s11 + $0x40] sm:$0xff] %v1099
  %1116 = vst [vmem:[%s11 + $0x48] sm:$0xff] %v1100
  %1117 = vst [vmem:[%s11 + $0x50] sm:$0xff] %v1101
  %1118 = vst [vmem:[%s11 + $0x58] sm:$0xff] %v1102
  %1119 = vst [vmem:[%s11 + $0x60] sm:$0xff] %v1103
  %1120 = vst [vmem:[%s11 + $0x68] sm:$0xff] %v1104
  %1121 = vst [vmem:[%s11 + $0x70] sm:$0xff] %v1105
  %1122 = vst [vmem:[%s11 + $0x78] sm:$0xff] %v1106
  // Predicated region
  $region46: #{alternate_weave_layer.3} parent=0 // pred_check
    _
  $region47: #{alternate_weave_layer.3} parent=0 // pred_check_branch
    %1124 = sbr.rel (0) target = $region49
  $region48: #{alternate_weave_layer.3} parent=0 // pred_region
    _
  $region49: #{alternate_weave_layer.3} parent=0 // pred_fallthru
    _
  // Predicated region
  $region50: #{alternate_weave_layer.3} parent=0 // pred_check
    _
  $region51: #{alternate_weave_layer.3} parent=0 // pred_check_branch
    %1126 = sbr.rel (0) target = $region53
  $region52: #{alternate_weave_layer.3} parent=0 // pred_region
    _
  $region53: #{alternate_weave_layer.3} parent=0 // pred_fallthru
    _

// kernel: alternate_weave_layer.2
$region0: #{alternate_weave_layer.2}
  #allocation0 [shape = 'u32[]', space=smem, size = 0x4, offset = 0x4, fixed_abs, tag = 'smem constant byte address 0x4 - core index']
  #allocation1 [shape = 'u32[72,128]{1,0:T(1,128)}', space=vmem, size = 0x9000, scoped, tag = 'internal scratch']
  %s0 = inlined_call_operand.vmem [shape: f32[12,128], index: 0, kind: input, shape index: {}]
  %s1 = inlined_call_operand.vmem [shape: f32[8,16], index: 1, kind: input, shape index: {}]
  %s2 = inlined_call_operand.vmem [shape: f32[128,8], index: 2, kind: input, shape index: {}]
  %s3 = inlined_call_operand.vmem [shape: f32[128,1], index: 3, kind: input, shape index: {}]
  %s4 = inlined_call_operand.vmem [shape: f32[128,1], index: 4, kind: input, shape index: {}]
  %s5 = inlined_call_operand.vmem [shape: f32[128,1], index: 5, kind: input, shape index: {}]
  %s6 = inlined_call_operand.vmem [shape: f32[128,12], index: 6, kind: input, shape index: {}]
  %s7 = inlined_call_operand.vmem [shape: f32[128,1], index: 7, kind: input, shape index: {}]
  %s8 = inlined_call_operand.vmem [shape: f32[128,8], index: 8, kind: input, shape index: {}]
  %s9 = inlined_call_operand.vmem [shape: f32[128,8], index: 9, kind: input, shape index: {}]
  %s10 = inlined_call_operand.vmem [shape: f32[128,16], index: 10, kind: output, shape index: {0}]
  %s11 = inlined_call_operand.vmem [shape: bf16[128,16], index: 11, kind: output, shape index: {1}]
  %s12 = inlined_call_operand.vmem [shape: bf16[128,16], index: 12, kind: output, shape index: {2}]
  %s13 = inlined_call_operand.vmem [shape: f32[128,1], index: 13, kind: output, shape index: {3}]
  %s14 = inlined_call_operand.vmem [shape: f32[128,1], index: 14, kind: output, shape index: {4}]
  %15 = xla_tuple %s10, %s11, %s12, %s13, %s14
  %s16 = sld [smem:[#allocation0]]
  $region90: #{alternate_weave_layer.2} parent=0
    _
  %s18 = ssub.s32 1, %s16
  %s19 = scalar_select 0, %s18, %s16
  // Predicated region
  $region2: #{alternate_weave_layer.2} parent=0 // pred_check
    _
  $region3: #{alternate_weave_layer.2} parent=0 // pred_check_branch
    %21 = sbr.rel (0) target = $region5
  $region4: #{alternate_weave_layer.2} parent=0 // pred_region
    _
  $region5: #{alternate_weave_layer.2} parent=0 // pred_fallthru
    _
  // Predicated region
  $region6: #{alternate_weave_layer.2} parent=0 // pred_check
    _
  $region7: #{alternate_weave_layer.2} parent=0 // pred_check_branch
    %23 = sbr.rel (0) target = $region9
  $region8: #{alternate_weave_layer.2} parent=0 // pred_region
    _
  $region9: #{alternate_weave_layer.2} parent=0 // pred_fallthru
    _
  // Predicated region
  $region10: #{alternate_weave_layer.2} parent=0 // pred_check
    _
  $region11: #{alternate_weave_layer.2} parent=0 // pred_check_branch
    %25 = sbr.rel (0) target = $region13
  $region12: #{alternate_weave_layer.2} parent=0 // pred_region
    _
  $region13: #{alternate_weave_layer.2} parent=0 // pred_fallthru
    _
  // Predicated region
  $region14: #{alternate_weave_layer.2} parent=0 // pred_check
    _
  $region15: #{alternate_weave_layer.2} parent=0 // pred_check_branch
    %27 = sbr.rel (0) target = $region17
  $region16: #{alternate_weave_layer.2} parent=0 // pred_region
    _
  $region17: #{alternate_weave_layer.2} parent=0 // pred_fallthru
    _
  // Predicated region
  $region18: #{alternate_weave_layer.2} parent=0 // pred_check
    _
  $region19: #{alternate_weave_layer.2} parent=0 // pred_check_branch
    %29 = sbr.rel (0) target = $region21
  $region20: #{alternate_weave_layer.2} parent=0 // pred_region
    _
  $region21: #{alternate_weave_layer.2} parent=0 // pred_fallthru
    _
  // Predicated region
  $region22: #{alternate_weave_layer.2} parent=0 // pred_check
    _
  $region23: #{alternate_weave_layer.2} parent=0 // pred_check_branch
    %31 = sbr.rel (0) target = $region25
  $region24: #{alternate_weave_layer.2} parent=0 // pred_region
    _
  $region25: #{alternate_weave_layer.2} parent=0 // pred_fallthru
    _
  // Predicated region
  $region26: #{alternate_weave_layer.2} parent=0 // pred_check
    _
  $region27: #{alternate_weave_layer.2} parent=0 // pred_check_branch
    %33 = sbr.rel (0) target = $region29
  $region28: #{alternate_weave_layer.2} parent=0 // pred_region
    _
  $region29: #{alternate_weave_layer.2} parent=0 // pred_fallthru
    _
  // Predicated region
  $region30: #{alternate_weave_layer.2} parent=0 // pred_check
    _
  $region31: #{alternate_weave_layer.2} parent=0 // pred_check_branch
    %35 = sbr.rel (0) target = $region33
  $region32: #{alternate_weave_layer.2} parent=0 // pred_region
    _
  $region33: #{alternate_weave_layer.2} parent=0 // pred_fallthru
    _
  // Predicated region
  $region34: #{alternate_weave_layer.2} parent=0 // pred_check
    _
  $region35: #{alternate_weave_layer.2} parent=0 // pred_check_branch
    %37 = sbr.rel (0) target = $region37
  $region36: #{alternate_weave_layer.2} parent=0 // pred_region
    _
  $region37: #{alternate_weave_layer.2} parent=0 // pred_fallthru
    _
  // Predicated region
  $region38: #{alternate_weave_layer.2} parent=0 // pred_check
    _
  $region39: #{alternate_weave_layer.2} parent=0 // pred_check_branch
    %39 = sbr.rel (0) target = $region41
  $region40: #{alternate_weave_layer.2} parent=0 // pred_region
    _
  $region41: #{alternate_weave_layer.2} parent=0 // pred_fallthru
    _
  %p41 = scmp.eq.s32.totalorder 0, 0
  // Predicated region
  $region42: #{alternate_weave_layer.2} parent=0 // pred_check
    %p42 = pneg %p41
  $region43: #{alternate_weave_layer.2} parent=0 // pred_check_branch
    %44 = sbr.rel (%p42) target = $region45
  $region44: #{alternate_weave_layer.2} parent=0 // pred_region
    %v45 = vld [vmem:[%s1] sm:$0xff]
    %v46 = vpack.c.bf16 %v45, %v45
    %v47 = vld [vmem:[%s2] sm:$0xff]
    %v48 = vld [vmem:[%s2 + $0x8] sm:$0xff]
    %v49 = vld [vmem:[%s2 + $0x10] sm:$0xff]
    %v50 = vld [vmem:[%s2 + $0x18] sm:$0xff]
    %v51 = vld [vmem:[%s2 + $0x20] sm:$0xff]
    %v52 = vld [vmem:[%s2 + $0x28] sm:$0xff]
    %v53 = vld [vmem:[%s2 + $0x30] sm:$0xff]
    %v54 = vld [vmem:[%s2 + $0x38] sm:$0xff]
    %v55 = vld [vmem:[%s2 + $0x40] sm:$0xff]
    %v56 = vld [vmem:[%s2 + $0x48] sm:$0xff]
    %v57 = vld [vmem:[%s2 + $0x50] sm:$0xff]
    %v58 = vld [vmem:[%s2 + $0x58] sm:$0xff]
    %v59 = vld [vmem:[%s2 + $0x60] sm:$0xff]
    %v60 = vld [vmem:[%s2 + $0x68] sm:$0xff]
    %v61 = vld [vmem:[%s2 + $0x70] sm:$0xff]
    %v62 = vld [vmem:[%s2 + $0x78] sm:$0xff]
    %v63 = vpack.c.bf16 %v48, %v47
    %v64 = vpack.c.bf16 %v50, %v49
    %v65 = vpack.c.bf16 %v52, %v51
    %v66 = vpack.c.bf16 %v54, %v53
    %v67 = vpack.c.bf16 %v56, %v55
    %v68 = vpack.c.bf16 %v58, %v57
    %v69 = vpack.c.bf16 %v60, %v59
    %v70 = vpack.c.bf16 %v62, %v61
    %v71 = vld [vmem:[%s3] sm:$0xff]
    %v72 = vld [vmem:[%s3 + $0x8] sm:$0xff]
    %v73 = vld [vmem:[%s3 + $0x10] sm:$0xff]
    %v74 = vld [vmem:[%s3 + $0x18] sm:$0xff]
    %v75 = vld [vmem:[%s3 + $0x20] sm:$0xff]
    %v76 = vld [vmem:[%s3 + $0x28] sm:$0xff]
    %v77 = vld [vmem:[%s3 + $0x30] sm:$0xff]
    %v78 = vld [vmem:[%s3 + $0x38] sm:$0xff]
    %v79 = vld [vmem:[%s3 + $0x40] sm:$0xff]
    %v80 = vld [vmem:[%s3 + $0x48] sm:$0xff]
    %v81 = vld [vmem:[%s3 + $0x50] sm:$0xff]
    %v82 = vld [vmem:[%s3 + $0x58] sm:$0xff]
    %v83 = vld [vmem:[%s3 + $0x60] sm:$0xff]
    %v84 = vld [vmem:[%s3 + $0x68] sm:$0xff]
    %v85 = vld [vmem:[%s3 + $0x70] sm:$0xff]
    %v86 = vld [vmem:[%s3 + $0x78] sm:$0xff]
    %88 = vset.pattern.permute.xlu0 0
    %89 = vperm.xlu0 %88, %v71
    %v90 = vpop.permute.xlu0 %89
    %93 = vset.pattern.permute.xlu0 0
    %94 = vperm.xlu0 %93, %v72
    %v95 = vpop.permute.xlu0 %94
    %98 = vset.pattern.permute.xlu0 0
    %99 = vperm.xlu0 %98, %v73
    %v100 = vpop.permute.xlu0 %99
    %103 = vset.pattern.permute.xlu0 0
    %104 = vperm.xlu0 %103, %v74
    %v105 = vpop.permute.xlu0 %104
    %108 = vset.pattern.permute.xlu0 0
    %109 = vperm.xlu0 %108, %v75
    %v110 = vpop.permute.xlu0 %109
    %113 = vset.pattern.permute.xlu0 0
    %114 = vperm.xlu0 %113, %v76
    %v115 = vpop.permute.xlu0 %114
    %118 = vset.pattern.permute.xlu0 0
    %119 = vperm.xlu0 %118, %v77
    %v120 = vpop.permute.xlu0 %119
    %123 = vset.pattern.permute.xlu0 0
    %124 = vperm.xlu0 %123, %v78
    %v125 = vpop.permute.xlu0 %124
    %128 = vset.pattern.permute.xlu0 0
    %129 = vperm.xlu0 %128, %v79
    %v130 = vpop.permute.xlu0 %129
    %133 = vset.pattern.permute.xlu0 0
    %134 = vperm.xlu0 %133, %v80
    %v135 = vpop.permute.xlu0 %134
    %138 = vset.pattern.permute.xlu0 0
    %139 = vperm.xlu0 %138, %v81
    %v140 = vpop.permute.xlu0 %139
    %143 = vset.pattern.permute.xlu0 0
    %144 = vperm.xlu0 %143, %v82
    %v145 = vpop.permute.xlu0 %144
    %148 = vset.pattern.permute.xlu0 0
    %149 = vperm.xlu0 %148, %v83
    %v150 = vpop.permute.xlu0 %149
    %153 = vset.pattern.permute.xlu0 0
    %154 = vperm.xlu0 %153, %v84
    %v155 = vpop.permute.xlu0 %154
    %158 = vset.pattern.permute.xlu0 0
    %159 = vperm.xlu0 %158, %v85
    %v160 = vpop.permute.xlu0 %159
    %163 = vset.pattern.permute.xlu0 0
    %164 = vperm.xlu0 %163, %v86
    %v165 = vpop.permute.xlu0 %164
    %vm167 = vcmask 64512
    %v169 = vsel %vm167, %v63, 0
    %v172 = vsel %vm167, %v64, 0
    %v175 = vsel %vm167, %v65, 0
    %v178 = vsel %vm167, %v66, 0
    %v181 = vsel %vm167, %v67, 0
    %v184 = vsel %vm167, %v68, 0
    %v187 = vsel %vm167, %v69, 0
    %v190 = vsel %vm167, %v70, 0
    %vm192 = vcmask 1043456
    %v194 = vsel %vm192, %v46, 0
    %196 = vmatpush.bf16.msra.mxu0 0
    %197 = vmatpush.bf16.msra.mxu0 0
    %198 = vmatpush.bf16.msra.mxu0 0
    %199 = vmatpush.bf16.msra.mxu0 0
    %200 = vmatpush.bf16.msra.mxu0 0
    %201 = vmatpush.bf16.msra.mxu0 0
    %202 = vmatpush.bf16.msra.mxu0 0
    %203 = vmatpush.bf16.msra.mxu0 %v194
    %204 = vmatmul.bf16.gmra.mxu0 %v169
    %v205 = vpop.f32.mrf.mxu0
    %v206 = vadd.f32 %v90, %v205
    %v207 = vpop.f32.mrf.mxu0
    %v208 = vadd.f32 %v95, %v207
    %209 = vmatmul.bf16.gmra.mxu0 %v172
    %v210 = vpop.f32.mrf.mxu0
    %v211 = vadd.f32 %v100, %v210
    %v212 = vpop.f32.mrf.mxu0
    %v213 = vadd.f32 %v105, %v212
    %214 = vmatmul.bf16.gmra.mxu0 %v175
    %v215 = vpop.f32.mrf.mxu0
    %v216 = vadd.f32 %v110, %v215
    %v217 = vpop.f32.mrf.mxu0
    %v218 = vadd.f32 %v115, %v217
    %219 = vmatmul.bf16.gmra.mxu0 %v178
    %v220 = vpop.f32.mrf.mxu0
    %v221 = vadd.f32 %v120, %v220
    %v222 = vpop.f32.mrf.mxu0
    %v223 = vadd.f32 %v125, %v222
    %224 = vmatmul.bf16.gmra.mxu0 %v181
    %v225 = vpop.f32.mrf.mxu0
    %v226 = vadd.f32 %v130, %v225
    %v227 = vpop.f32.mrf.mxu0
    %v228 = vadd.f32 %v135, %v227
    %229 = vmatmul.bf16.gmra.mxu0 %v184
    %v230 = vpop.f32.mrf.mxu0
    %v231 = vadd.f32 %v140, %v230
    %v232 = vpop.f32.mrf.mxu0
    %v233 = vadd.f32 %v145, %v232
    %234 = vmatmul.bf16.gmra.mxu0 %v187
    %v235 = vpop.f32.mrf.mxu0
    %v236 = vadd.f32 %v150, %v235
    %v237 = vpop.f32.mrf.mxu0
    %v238 = vadd.f32 %v155, %v237
    %239 = vmatmul.bf16.gmra.mxu0 %v190
    %v240 = vpop.f32.mrf.mxu0
    %v241 = vadd.f32 %v160, %v240
    %v242 = vpop.f32.mrf.mxu0
    %v243 = vadd.f32 %v165, %v242
    %244 = vdwg.mxu0
    %v245 = vmax.f32 %v206, 0.0
    %v246 = vmax.f32 %v208, 0.0
    %v247 = vmax.f32 %v211, 0.0
    %v248 = vmax.f32 %v213, 0.0
    %v249 = vmax.f32 %v216, 0.0
    %v250 = vmax.f32 %v218, 0.0
    %v251 = vmax.f32 %v221, 0.0
    %v252 = vmax.f32 %v223, 0.0
    %v253 = vmax.f32 %v226, 0.0
    %v254 = vmax.f32 %v228, 0.0
    %v255 = vmax.f32 %v231, 0.0
    %v256 = vmax.f32 %v233, 0.0
    %v257 = vmax.f32 %v236, 0.0
    %v258 = vmax.f32 %v238, 0.0
    %v259 = vmax.f32 %v241, 0.0
    %v260 = vmax.f32 %v243, 0.0
    %vm261 = vcmask 130048
    %v262 = vsel %vm261, %v245, 0.0
    %263 = vadd.xlane.f32.xlu0 %v262
    %v264 = vpop.xlane.xlu0 %263
    %v265 = vsel %vm261, %v246, 0.0
    %266 = vadd.xlane.f32.xlu0 %v265
    %v267 = vpop.xlane.xlu0 %266
    %v268 = vsel %vm261, %v247, 0.0
    %269 = vadd.xlane.f32.xlu0 %v268
    %v270 = vpop.xlane.xlu0 %269
    %v271 = vsel %vm261, %v248, 0.0
    %272 = vadd.xlane.f32.xlu0 %v271
    %v273 = vpop.xlane.xlu0 %272
    %v274 = vsel %vm261, %v249, 0.0
    %275 = vadd.xlane.f32.xlu0 %v274
    %v276 = vpop.xlane.xlu0 %275
    %v277 = vsel %vm261, %v250, 0.0
    %278 = vadd.xlane.f32.xlu0 %v277
    %v279 = vpop.xlane.xlu0 %278
    %v280 = vsel %vm261, %v251, 0.0
    %281 = vadd.xlane.f32.xlu0 %v280
    %v282 = vpop.xlane.xlu0 %281
    %v283 = vsel %vm261, %v252, 0.0
    %284 = vadd.xlane.f32.xlu0 %v283
    %v285 = vpop.xlane.xlu0 %284
    %v286 = vsel %vm261, %v253, 0.0
    %287 = vadd.xlane.f32.xlu0 %v286
    %v288 = vpop.xlane.xlu0 %287
    %v289 = vsel %vm261, %v254, 0.0
    %290 = vadd.xlane.f32.xlu0 %v289
    %v291 = vpop.xlane.xlu0 %290
    %v292 = vsel %vm261, %v255, 0.0
    %293 = vadd.xlane.f32.xlu0 %v292
    %v294 = vpop.xlane.xlu0 %293
    %v295 = vsel %vm261, %v256, 0.0
    %296 = vadd.xlane.f32.xlu0 %v295
    %v297 = vpop.xlane.xlu0 %296
    %v298 = vsel %vm261, %v257, 0.0
    %299 = vadd.xlane.f32.xlu0 %v298
    %v300 = vpop.xlane.xlu0 %299
    %v301 = vsel %vm261, %v258, 0.0
    %302 = vadd.xlane.f32.xlu0 %v301
    %v303 = vpop.xlane.xlu0 %302
    %v304 = vsel %vm261, %v259, 0.0
    %305 = vadd.xlane.f32.xlu0 %v304
    %v306 = vpop.xlane.xlu0 %305
    %v307 = vsel %vm261, %v260, 0.0
    %308 = vadd.xlane.f32.xlu0 %v307
    %v309 = vpop.xlane.xlu0 %308
    %v310 = vrcp.pop 16.0
    %v311 = vmul.f32 16.0, %v310
    %v312 = vsub.f32 1.0, %v311
    %v313 = vmul.f32 %v310, %v312
    %v314 = vadd.f32 %v310, %v313
    %vm315 = vweird.f32 %v310
    %v316 = vsel %vm315, %v310, %v314
    %v317 = vmul.f32 %v264, %v316
    %v318 = vmul.f32 %v267, %v316
    %v319 = vmul.f32 %v270, %v316
    %v320 = vmul.f32 %v273, %v316
    %v321 = vmul.f32 %v276, %v316
    %v322 = vmul.f32 %v279, %v316
    %v323 = vmul.f32 %v282, %v316
    %v324 = vmul.f32 %v285, %v316
    %v325 = vmul.f32 %v288, %v316
    %v326 = vmul.f32 %v291, %v316
    %v327 = vmul.f32 %v294, %v316
    %v328 = vmul.f32 %v297, %v316
    %v329 = vmul.f32 %v300, %v316
    %v330 = vmul.f32 %v303, %v316
    %v331 = vmul.f32 %v306, %v316
    %v332 = vmul.f32 %v309, %v316
    %v333 = vmul.f32 %v245, %v245
    %v334 = vmul.f32 %v246, %v246
    %v335 = vmul.f32 %v247, %v247
    %v336 = vmul.f32 %v248, %v248
    %v337 = vmul.f32 %v249, %v249
    %v338 = vmul.f32 %v250, %v250
    %v339 = vmul.f32 %v251, %v251
    %v340 = vmul.f32 %v252, %v252
    %v341 = vmul.f32 %v253, %v253
    %v342 = vmul.f32 %v254, %v254
    %v343 = vmul.f32 %v255, %v255
    %v344 = vmul.f32 %v256, %v256
    %v345 = vmul.f32 %v257, %v257
    %v346 = vmul.f32 %v258, %v258
    %v347 = vmul.f32 %v259, %v259
    %v348 = vmul.f32 %v260, %v260
    %v349 = vsel %vm261, %v333, 0.0
    %350 = vadd.xlane.f32.xlu0 %v349
    %v351 = vpop.xlane.xlu0 %350
    %v352 = vsel %vm261, %v334, 0.0
    %353 = vadd.xlane.f32.xlu0 %v352
    %v354 = vpop.xlane.xlu0 %353
    %v355 = vsel %vm261, %v335, 0.0
    %356 = vadd.xlane.f32.xlu0 %v355
    %v357 = vpop.xlane.xlu0 %356
    %v358 = vsel %vm261, %v336, 0.0
    %359 = vadd.xlane.f32.xlu0 %v358
    %v360 = vpop.xlane.xlu0 %359
    %v361 = vsel %vm261, %v337, 0.0
    %362 = vadd.xlane.f32.xlu0 %v361
    %v363 = vpop.xlane.xlu0 %362
    %v364 = vsel %vm261, %v338, 0.0
    %365 = vadd.xlane.f32.xlu0 %v364
    %v366 = vpop.xlane.xlu0 %365
    %v367 = vsel %vm261, %v339, 0.0
    %368 = vadd.xlane.f32.xlu0 %v367
    %v369 = vpop.xlane.xlu0 %368
    %v370 = vsel %vm261, %v340, 0.0
    %371 = vadd.xlane.f32.xlu0 %v370
    %v372 = vpop.xlane.xlu0 %371
    %v373 = vsel %vm261, %v341, 0.0
    %374 = vadd.xlane.f32.xlu0 %v373
    %v375 = vpop.xlane.xlu0 %374
    %v376 = vsel %vm261, %v342, 0.0
    %377 = vadd.xlane.f32.xlu0 %v376
    %v378 = vpop.xlane.xlu0 %377
    %v379 = vsel %vm261, %v343, 0.0
    %380 = vadd.xlane.f32.xlu0 %v379
    %v381 = vpop.xlane.xlu0 %380
    %v382 = vsel %vm261, %v344, 0.0
    %383 = vadd.xlane.f32.xlu0 %v382
    %v384 = vpop.xlane.xlu0 %383
    %v385 = vsel %vm261, %v345, 0.0
    %386 = vadd.xlane.f32.xlu0 %v385
    %v387 = vpop.xlane.xlu0 %386
    %v388 = vsel %vm261, %v346, 0.0
    %389 = vadd.xlane.f32.xlu0 %v388
    %v390 = vpop.xlane.xlu0 %389
    %v391 = vsel %vm261, %v347, 0.0
    %392 = vadd.xlane.f32.xlu0 %v391
    %v393 = vpop.xlane.xlu0 %392
    %v394 = vsel %vm261, %v348, 0.0
    %395 = vadd.xlane.f32.xlu0 %v394
    %v396 = vpop.xlane.xlu0 %395
    %v397 = vmul.f32 %v351, %v316
    %v398 = vmul.f32 %v354, %v316
    %v399 = vmul.f32 %v357, %v316
    %v400 = vmul.f32 %v360, %v316
    %v401 = vmul.f32 %v363, %v316
    %v402 = vmul.f32 %v366, %v316
    %v403 = vmul.f32 %v369, %v316
    %v404 = vmul.f32 %v372, %v316
    %v405 = vmul.f32 %v375, %v316
    %v406 = vmul.f32 %v378, %v316
    %v407 = vmul.f32 %v381, %v316
    %v408 = vmul.f32 %v384, %v316
    %v409 = vmul.f32 %v387, %v316
    %v410 = vmul.f32 %v390, %v316
    %v411 = vmul.f32 %v393, %v316
    %v412 = vmul.f32 %v396, %v316
    %v413 = vmul.f32 %v317, %v317
    %v414 = vmul.f32 %v318, %v318
    %v415 = vmul.f32 %v319, %v319
    %v416 = vmul.f32 %v320, %v320
    %v417 = vmul.f32 %v321, %v321
    %v418 = vmul.f32 %v322, %v322
    %v419 = vmul.f32 %v323, %v323
    %v420 = vmul.f32 %v324, %v324
    %v421 = vmul.f32 %v325, %v325
    %v422 = vmul.f32 %v326, %v326
    %v423 = vmul.f32 %v327, %v327
    %v424 = vmul.f32 %v328, %v328
    %v425 = vmul.f32 %v329, %v329
    %v426 = vmul.f32 %v330, %v330
    %v427 = vmul.f32 %v331, %v331
    %v428 = vmul.f32 %v332, %v332
    %v429 = vsub.f32 %v397, %v413
    %v430 = vsub.f32 %v398, %v414
    %v431 = vsub.f32 %v399, %v415
    %v432 = vsub.f32 %v400, %v416
    %v433 = vsub.f32 %v401, %v417
    %v434 = vsub.f32 %v402, %v418
    %v435 = vsub.f32 %v403, %v419
    %v436 = vsub.f32 %v404, %v420
    %v437 = vsub.f32 %v405, %v421
    %v438 = vsub.f32 %v406, %v422
    %v439 = vsub.f32 %v407, %v423
    %v440 = vsub.f32 %v408, %v424
    %v441 = vsub.f32 %v409, %v425
    %v442 = vsub.f32 %v410, %v426
    %v443 = vsub.f32 %v411, %v427
    %v444 = vsub.f32 %v412, %v428
    %v445 = vsub.f32 %v245, %v317
    %v446 = vsub.f32 %v246, %v318
    %v447 = vsub.f32 %v247, %v319
    %v448 = vsub.f32 %v248, %v320
    %v449 = vsub.f32 %v249, %v321
    %v450 = vsub.f32 %v250, %v322
    %v451 = vsub.f32 %v251, %v323
    %v452 = vsub.f32 %v252, %v324
    %v453 = vsub.f32 %v253, %v325
    %v454 = vsub.f32 %v254, %v326
    %v455 = vsub.f32 %v255, %v327
    %v456 = vsub.f32 %v256, %v328
    %v457 = vsub.f32 %v257, %v329
    %v458 = vsub.f32 %v258, %v330
    %v459 = vsub.f32 %v259, %v331
    %v460 = vsub.f32 %v260, %v332
    %v461 = vadd.f32 %v429, 1e-05
    %v462 = vadd.f32 %v430, 1e-05
    %v463 = vadd.f32 %v431, 1e-05
    %v464 = vadd.f32 %v432, 1e-05
    %v465 = vadd.f32 %v433, 1e-05
    %v466 = vadd.f32 %v434, 1e-05
    %v467 = vadd.f32 %v435, 1e-05
    %v468 = vadd.f32 %v436, 1e-05
    %v469 = vadd.f32 %v437, 1e-05
    %v470 = vadd.f32 %v438, 1e-05
    %v471 = vadd.f32 %v439, 1e-05
    %v472 = vadd.f32 %v440, 1e-05
    %v473 = vadd.f32 %v441, 1e-05
    %v474 = vadd.f32 %v442, 1e-05
    %v475 = vadd.f32 %v443, 1e-05
    %v476 = vadd.f32 %v444, 1e-05
    %v477 = vrsqrt.pop %v461
    %v478 = vmul.f32 %v477, %v461
    %v479 = vmul.f32 %v478, %v477
    %v480 = vmul.f32 0.5, %v479
    %v481 = vsub.f32 1.5, %v480
    %v482 = vmul.f32 %v477, %v481
    %vm483 = vweird.f32 %v461
    %vm484 = vweird.f32 %v477
    %vm485 = vmor %vm483, %vm484
    %v486 = vsel %vm485, %v477, %v482
    %v487 = vrsqrt.pop %v462
    %v488 = vmul.f32 %v487, %v462
    %v489 = vmul.f32 %v488, %v487
    %v490 = vmul.f32 0.5, %v489
    %v491 = vsub.f32 1.5, %v490
    %v492 = vmul.f32 %v487, %v491
    %vm493 = vweird.f32 %v462
    %vm494 = vweird.f32 %v487
    %vm495 = vmor %vm493, %vm494
    %v496 = vsel %vm495, %v487, %v492
    %v497 = vrsqrt.pop %v463
    %v498 = vmul.f32 %v497, %v463
    %v499 = vmul.f32 %v498, %v497
    %v500 = vmul.f32 0.5, %v499
    %v501 = vsub.f32 1.5, %v500
    %v502 = vmul.f32 %v497, %v501
    %vm503 = vweird.f32 %v463
    %vm504 = vweird.f32 %v497
    %vm505 = vmor %vm503, %vm504
    %v506 = vsel %vm505, %v497, %v502
    %v507 = vrsqrt.pop %v464
    %v508 = vmul.f32 %v507, %v464
    %v509 = vmul.f32 %v508, %v507
    %v510 = vmul.f32 0.5, %v509
    %v511 = vsub.f32 1.5, %v510
    %v512 = vmul.f32 %v507, %v511
    %vm513 = vweird.f32 %v464
    %vm514 = vweird.f32 %v507
    %vm515 = vmor %vm513, %vm514
    %v516 = vsel %vm515, %v507, %v512
    %v517 = vrsqrt.pop %v465
    %v518 = vmul.f32 %v517, %v465
    %v519 = vmul.f32 %v518, %v517
    %v520 = vmul.f32 0.5, %v519
    %v521 = vsub.f32 1.5, %v520
    %v522 = vmul.f32 %v517, %v521
    %vm523 = vweird.f32 %v465
    %vm524 = vweird.f32 %v517
    %vm525 = vmor %vm523, %vm524
    %v526 = vsel %vm525, %v517, %v522
    %v527 = vrsqrt.pop %v466
    %v528 = vmul.f32 %v527, %v466
    %v529 = vmul.f32 %v528, %v527
    %v530 = vmul.f32 0.5, %v529
    %v531 = vsub.f32 1.5, %v530
    %v532 = vmul.f32 %v527, %v531
    %vm533 = vweird.f32 %v466
    %vm534 = vweird.f32 %v527
    %vm535 = vmor %vm533, %vm534
    %v536 = vsel %vm535, %v527, %v532
    %v537 = vrsqrt.pop %v467
    %v538 = vmul.f32 %v537, %v467
    %v539 = vmul.f32 %v538, %v537
    %v540 = vmul.f32 0.5, %v539
    %v541 = vsub.f32 1.5, %v540
    %v542 = vmul.f32 %v537, %v541
    %vm543 = vweird.f32 %v467
    %vm544 = vweird.f32 %v537
    %vm545 = vmor %vm543, %vm544
    %v546 = vsel %vm545, %v537, %v542
    %v547 = vrsqrt.pop %v468
    %v548 = vmul.f32 %v547, %v468
    %v549 = vmul.f32 %v548, %v547
    %v550 = vmul.f32 0.5, %v549
    %v551 = vsub.f32 1.5, %v550
    %v552 = vmul.f32 %v547, %v551
    %vm553 = vweird.f32 %v468
    %vm554 = vweird.f32 %v547
    %vm555 = vmor %vm553, %vm554
    %v556 = vsel %vm555, %v547, %v552
    %v557 = vrsqrt.pop %v469
    %v558 = vmul.f32 %v557, %v469
    %v559 = vmul.f32 %v558, %v557
    %v560 = vmul.f32 0.5, %v559
    %v561 = vsub.f32 1.5, %v560
    %v562 = vmul.f32 %v557, %v561
    %vm563 = vweird.f32 %v469
    %vm564 = vweird.f32 %v557
    %vm565 = vmor %vm563, %vm564
    %v566 = vsel %vm565, %v557, %v562
    %v567 = vrsqrt.pop %v470
    %v568 = vmul.f32 %v567, %v470
    %v569 = vmul.f32 %v568, %v567
    %v570 = vmul.f32 0.5, %v569
    %v571 = vsub.f32 1.5, %v570
    %v572 = vmul.f32 %v567, %v571
    %vm573 = vweird.f32 %v470
    %vm574 = vweird.f32 %v567
    %vm575 = vmor %vm573, %vm574
    %v576 = vsel %vm575, %v567, %v572
    %v577 = vrsqrt.pop %v471
    %v578 = vmul.f32 %v577, %v471
    %v579 = vmul.f32 %v578, %v577
    %v580 = vmul.f32 0.5, %v579
    %v581 = vsub.f32 1.5, %v580
    %v582 = vmul.f32 %v577, %v581
    %vm583 = vweird.f32 %v471
    %vm584 = vweird.f32 %v577
    %vm585 = vmor %vm583, %vm584
    %v586 = vsel %vm585, %v577, %v582
    %v587 = vrsqrt.pop %v472
    %v588 = vmul.f32 %v587, %v472
    %v589 = vmul.f32 %v588, %v587
    %v590 = vmul.f32 0.5, %v589
    %v591 = vsub.f32 1.5, %v590
    %v592 = vmul.f32 %v587, %v591
    %vm593 = vweird.f32 %v472
    %vm594 = vweird.f32 %v587
    %vm595 = vmor %vm593, %vm594
    %v596 = vsel %vm595, %v587, %v592
    %v597 = vrsqrt.pop %v473
    %v598 = vmul.f32 %v597, %v473
    %v599 = vmul.f32 %v598, %v597
    %v600 = vmul.f32 0.5, %v599
    %v601 = vsub.f32 1.5, %v600
    %v602 = vmul.f32 %v597, %v601
    %vm603 = vweird.f32 %v473
    %vm604 = vweird.f32 %v597
    %vm605 = vmor %vm603, %vm604
    %v606 = vsel %vm605, %v597, %v602
    %v607 = vrsqrt.pop %v474
    %v608 = vmul.f32 %v607, %v474
    %v609 = vmul.f32 %v608, %v607
    %v610 = vmul.f32 0.5, %v609
    %v611 = vsub.f32 1.5, %v610
    %v612 = vmul.f32 %v607, %v611
    %vm613 = vweird.f32 %v474
    %vm614 = vweird.f32 %v607
    %vm615 = vmor %vm613, %vm614
    %v616 = vsel %vm615, %v607, %v612
    %v617 = vrsqrt.pop %v475
    %v618 = vmul.f32 %v617, %v475
    %v619 = vmul.f32 %v618, %v617
    %v620 = vmul.f32 0.5, %v619
    %v621 = vsub.f32 1.5, %v620
    %v622 = vmul.f32 %v617, %v621
    %vm623 = vweird.f32 %v475
    %vm624 = vweird.f32 %v617
    %vm625 = vmor %vm623, %vm624
    %v626 = vsel %vm625, %v617, %v622
    %v627 = vrsqrt.pop %v476
    %v628 = vmul.f32 %v627, %v476
    %v629 = vmul.f32 %v628, %v627
    %v630 = vmul.f32 0.5, %v629
    %v631 = vsub.f32 1.5, %v630
    %v632 = vmul.f32 %v627, %v631
    %vm633 = vweird.f32 %v476
    %vm634 = vweird.f32 %v627
    %vm635 = vmor %vm633, %vm634
    %v636 = vsel %vm635, %v627, %v632
    %v637 = vmul.f32 %v445, %v486
    %v638 = vmul.f32 %v446, %v496
    %v639 = vmul.f32 %v447, %v506
    %v640 = vmul.f32 %v448, %v516
    %v641 = vmul.f32 %v449, %v526
    %v642 = vmul.f32 %v450, %v536
    %v643 = vmul.f32 %v451, %v546
    %v644 = vmul.f32 %v452, %v556
    %v645 = vmul.f32 %v453, %v566
    %v646 = vmul.f32 %v454, %v576
    %v647 = vmul.f32 %v455, %v586
    %v648 = vmul.f32 %v456, %v596
    %v649 = vmul.f32 %v457, %v606
    %v650 = vmul.f32 %v458, %v616
    %v651 = vmul.f32 %v459, %v626
    %v652 = vmul.f32 %v460, %v636
    %v653 = vld [vmem:[%s4] sm:$0xff]
    %v654 = vld [vmem:[%s4 + $0x8] sm:$0xff]
    %v655 = vld [vmem:[%s4 + $0x10] sm:$0xff]
    %v656 = vld [vmem:[%s4 + $0x18] sm:$0xff]
    %v657 = vld [vmem:[%s4 + $0x20] sm:$0xff]
    %v658 = vld [vmem:[%s4 + $0x28] sm:$0xff]
    %v659 = vld [vmem:[%s4 + $0x30] sm:$0xff]
    %v660 = vld [vmem:[%s4 + $0x38] sm:$0xff]
    %v661 = vld [vmem:[%s4 + $0x40] sm:$0xff]
    %v662 = vld [vmem:[%s4 + $0x48] sm:$0xff]
    %v663 = vld [vmem:[%s4 + $0x50] sm:$0xff]
    %v664 = vld [vmem:[%s4 + $0x58] sm:$0xff]
    %v665 = vld [vmem:[%s4 + $0x60] sm:$0xff]
    %v666 = vld [vmem:[%s4 + $0x68] sm:$0xff]
    %v667 = vld [vmem:[%s4 + $0x70] sm:$0xff]
    %v668 = vld [vmem:[%s4 + $0x78] sm:$0xff]
    %670 = vset.pattern.permute.xlu0 0
    %671 = vperm.xlu0 %670, %v653
    %v672 = vpop.permute.xlu0 %671
    %675 = vset.pattern.permute.xlu0 0
    %676 = vperm.xlu0 %675, %v654
    %v677 = vpop.permute.xlu0 %676
    %680 = vset.pattern.permute.xlu0 0
    %681 = vperm.xlu0 %680, %v655
    %v682 = vpop.permute.xlu0 %681
    %685 = vset.pattern.permute.xlu0 0
    %686 = vperm.xlu0 %685, %v656
    %v687 = vpop.permute.xlu0 %686
    %690 = vset.pattern.permute.xlu0 0
    %691 = vperm.xlu0 %690, %v657
    %v692 = vpop.permute.xlu0 %691
    %695 = vset.pattern.permute.xlu0 0
    %696 = vperm.xlu0 %695, %v658
    %v697 = vpop.permute.xlu0 %696
    %700 = vset.pattern.permute.xlu0 0
    %701 = vperm.xlu0 %700, %v659
    %v702 = vpop.permute.xlu0 %701
    %705 = vset.pattern.permute.xlu0 0
    %706 = vperm.xlu0 %705, %v660
    %v707 = vpop.permute.xlu0 %706
    %710 = vset.pattern.permute.xlu0 0
    %711 = vperm.xlu0 %710, %v661
    %v712 = vpop.permute.xlu0 %711
    %715 = vset.pattern.permute.xlu0 0
    %716 = vperm.xlu0 %715, %v662
    %v717 = vpop.permute.xlu0 %716
    %720 = vset.pattern.permute.xlu0 0
    %721 = vperm.xlu0 %720, %v663
    %v722 = vpop.permute.xlu0 %721
    %725 = vset.pattern.permute.xlu0 0
    %726 = vperm.xlu0 %725, %v664
    %v727 = vpop.permute.xlu0 %726
    %730 = vset.pattern.permute.xlu0 0
    %731 = vperm.xlu0 %730, %v665
    %v732 = vpop.permute.xlu0 %731
    %735 = vset.pattern.permute.xlu0 0
    %736 = vperm.xlu0 %735, %v666
    %v737 = vpop.permute.xlu0 %736
    %740 = vset.pattern.permute.xlu0 0
    %741 = vperm.xlu0 %740, %v667
    %v742 = vpop.permute.xlu0 %741
    %745 = vset.pattern.permute.xlu0 0
    %746 = vperm.xlu0 %745, %v668
    %v747 = vpop.permute.xlu0 %746
    %v749 = vmul.f32 %v637, %v672
    %v750 = vmul.f32 %v638, %v677
    %v751 = vmul.f32 %v639, %v682
    %v752 = vmul.f32 %v640, %v687
    %v753 = vmul.f32 %v641, %v692
    %v754 = vmul.f32 %v642, %v697
    %v755 = vmul.f32 %v643, %v702
    %v756 = vmul.f32 %v644, %v707
    %v757 = vmul.f32 %v645, %v712
    %v758 = vmul.f32 %v646, %v717
    %v759 = vmul.f32 %v647, %v722
    %v760 = vmul.f32 %v648, %v727
    %v761 = vmul.f32 %v649, %v732
    %v762 = vmul.f32 %v650, %v737
    %v763 = vmul.f32 %v651, %v742
    %v764 = vmul.f32 %v652, %v747
    %v765 = vld [vmem:[%s5] sm:$0xff]
    %v766 = vld [vmem:[%s5 + $0x8] sm:$0xff]
    %v767 = vld [vmem:[%s5 + $0x10] sm:$0xff]
    %v768 = vld [vmem:[%s5 + $0x18] sm:$0xff]
    %v769 = vld [vmem:[%s5 + $0x20] sm:$0xff]
    %v770 = vld [vmem:[%s5 + $0x28] sm:$0xff]
    %v771 = vld [vmem:[%s5 + $0x30] sm:$0xff]
    %v772 = vld [vmem:[%s5 + $0x38] sm:$0xff]
    %v773 = vld [vmem:[%s5 + $0x40] sm:$0xff]
    %v774 = vld [vmem:[%s5 + $0x48] sm:$0xff]
    %v775 = vld [vmem:[%s5 + $0x50] sm:$0xff]
    %v776 = vld [vmem:[%s5 + $0x58] sm:$0xff]
    %v777 = vld [vmem:[%s5 + $0x60] sm:$0xff]
    %v778 = vld [vmem:[%s5 + $0x68] sm:$0xff]
    %v779 = vld [vmem:[%s5 + $0x70] sm:$0xff]
    %v780 = vld [vmem:[%s5 + $0x78] sm:$0xff]
    %782 = vset.pattern.permute.xlu0 0
    %783 = vperm.xlu0 %782, %v765
    %v784 = vpop.permute.xlu0 %783
    %787 = vset.pattern.permute.xlu0 0
    %788 = vperm.xlu0 %787, %v766
    %v789 = vpop.permute.xlu0 %788
    %792 = vset.pattern.permute.xlu0 0
    %793 = vperm.xlu0 %792, %v767
    %v794 = vpop.permute.xlu0 %793
    %797 = vset.pattern.permute.xlu0 0
    %798 = vperm.xlu0 %797, %v768
    %v799 = vpop.permute.xlu0 %798
    %802 = vset.pattern.permute.xlu0 0
    %803 = vperm.xlu0 %802, %v769
    %v804 = vpop.permute.xlu0 %803
    %807 = vset.pattern.permute.xlu0 0
    %808 = vperm.xlu0 %807, %v770
    %v809 = vpop.permute.xlu0 %808
    %812 = vset.pattern.permute.xlu0 0
    %813 = vperm.xlu0 %812, %v771
    %v814 = vpop.permute.xlu0 %813
    %817 = vset.pattern.permute.xlu0 0
    %818 = vperm.xlu0 %817, %v772
    %v819 = vpop.permute.xlu0 %818
    %822 = vset.pattern.permute.xlu0 0
    %823 = vperm.xlu0 %822, %v773
    %v824 = vpop.permute.xlu0 %823
    %827 = vset.pattern.permute.xlu0 0
    %828 = vperm.xlu0 %827, %v774
    %v829 = vpop.permute.xlu0 %828
    %832 = vset.pattern.permute.xlu0 0
    %833 = vperm.xlu0 %832, %v775
    %v834 = vpop.permute.xlu0 %833
    %837 = vset.pattern.permute.xlu0 0
    %838 = vperm.xlu0 %837, %v776
    %v839 = vpop.permute.xlu0 %838
    %842 = vset.pattern.permute.xlu0 0
    %843 = vperm.xlu0 %842, %v777
    %v844 = vpop.permute.xlu0 %843
    %847 = vset.pattern.permute.xlu0 0
    %848 = vperm.xlu0 %847, %v778
    %v849 = vpop.permute.xlu0 %848
    %852 = vset.pattern.permute.xlu0 0
    %853 = vperm.xlu0 %852, %v779
    %v854 = vpop.permute.xlu0 %853
    %857 = vset.pattern.permute.xlu0 0
    %858 = vperm.xlu0 %857, %v780
    %v859 = vpop.permute.xlu0 %858
    %v861 = vadd.f32 %v749, %v784
    %v862 = vadd.f32 %v750, %v789
    %v863 = vadd.f32 %v751, %v794
    %v864 = vadd.f32 %v752, %v799
    %v865 = vadd.f32 %v753, %v804
    %v866 = vadd.f32 %v754, %v809
    %v867 = vadd.f32 %v755, %v814
    %v868 = vadd.f32 %v756, %v819
    %v869 = vadd.f32 %v757, %v824
    %v870 = vadd.f32 %v758, %v829
    %v871 = vadd.f32 %v759, %v834
    %v872 = vadd.f32 %v760, %v839
    %v873 = vadd.f32 %v761, %v844
    %v874 = vadd.f32 %v762, %v849
    %v875 = vadd.f32 %v763, %v854
    %v876 = vadd.f32 %v764, %v859
    %877 = vst.msk [vmem:[%s10] sm:$0xff] %vm261, %v861
    %878 = vst.msk [vmem:[%s10 + $0x8] sm:$0xff] %vm261, %v862
    %879 = vst.msk [vmem:[%s10 + $0x10] sm:$0xff] %vm261, %v863
    %880 = vst.msk [vmem:[%s10 + $0x18] sm:$0xff] %vm261, %v864
    %881 = vst.msk [vmem:[%s10 + $0x20] sm:$0xff] %vm261, %v865
    %882 = vst.msk [vmem:[%s10 + $0x28] sm:$0xff] %vm261, %v866
    %883 = vst.msk [vmem:[%s10 + $0x30] sm:$0xff] %vm261, %v867
    %884 = vst.msk [vmem:[%s10 + $0x38] sm:$0xff] %vm261, %v868
    %885 = vst.msk [vmem:[%s10 + $0x40] sm:$0xff] %vm261, %v869
    %886 = vst.msk [vmem:[%s10 + $0x48] sm:$0xff] %vm261, %v870
    %887 = vst.msk [vmem:[%s10 + $0x50] sm:$0xff] %vm261, %v871
    %888 = vst.msk [vmem:[%s10 + $0x58] sm:$0xff] %vm261, %v872
    %889 = vst.msk [vmem:[%s10 + $0x60] sm:$0xff] %vm261, %v873
    %890 = vst.msk [vmem:[%s10 + $0x68] sm:$0xff] %vm261, %v874
    %891 = vst.msk [vmem:[%s10 + $0x70] sm:$0xff] %vm261, %v875
    %892 = vst.msk [vmem:[%s10 + $0x78] sm:$0xff] %vm261, %v876
    %v893 = vld [vmem:[%s8] sm:$0xff]
    %v894 = vld [vmem:[%s8 + $0x8] sm:$0xff]
    %v895 = vld [vmem:[%s8 + $0x10] sm:$0xff]
    %v896 = vld [vmem:[%s8 + $0x18] sm:$0xff]
    %v897 = vld [vmem:[%s8 + $0x20] sm:$0xff]
    %v898 = vld [vmem:[%s8 + $0x28] sm:$0xff]
    %v899 = vld [vmem:[%s8 + $0x30] sm:$0xff]
    %v900 = vld [vmem:[%s8 + $0x38] sm:$0xff]
    %v901 = vld [vmem:[%s8 + $0x40] sm:$0xff]
    %v902 = vld [vmem:[%s8 + $0x48] sm:$0xff]
    %v903 = vld [vmem:[%s8 + $0x50] sm:$0xff]
    %v904 = vld [vmem:[%s8 + $0x58] sm:$0xff]
    %v905 = vld [vmem:[%s8 + $0x60] sm:$0xff]
    %v906 = vld [vmem:[%s8 + $0x68] sm:$0xff]
    %v907 = vld [vmem:[%s8 + $0x70] sm:$0xff]
    %v908 = vld [vmem:[%s8 + $0x78] sm:$0xff]
    %v909 = vpack.c.bf16 %v894, %v893
    %v910 = vpack.c.bf16 %v896, %v895
    %v911 = vpack.c.bf16 %v898, %v897
    %v912 = vpack.c.bf16 %v900, %v899
    %v913 = vpack.c.bf16 %v902, %v901
    %v914 = vpack.c.bf16 %v904, %v903
    %v915 = vpack.c.bf16 %v906, %v905
    %v916 = vpack.c.bf16 %v908, %v907
    %v918 = vsel %vm167, %v909, 0
    %v921 = vsel %vm167, %v910, 0
    %v924 = vsel %vm167, %v911, 0
    %v927 = vsel %vm167, %v912, 0
    %v930 = vsel %vm167, %v913, 0
    %v933 = vsel %vm167, %v914, 0
    %v936 = vsel %vm167, %v915, 0
    %v939 = vsel %vm167, %v916, 0
    %941 = vmatpush.bf16.msra.mxu0 0
    %942 = vmatpush.bf16.msra.mxu0 0
    %943 = vmatpush.bf16.msra.mxu0 0
    %944 = vmatpush.bf16.msra.mxu0 0
    %945 = vmatpush.bf16.msra.mxu0 0
    %946 = vmatpush.bf16.msra.mxu0 0
    %947 = vmatpush.bf16.msra.mxu0 0
    %948 = vmatpush.bf16.msra.mxu0 %v194
    %949 = vmatmul.bf16.gmra.mxu0 %v918
    %v950 = vpop.f32.mrf.mxu0
    %v951 = vadd.f32 0.0, %v950
    %v952 = vpop.f32.mrf.mxu0
    %v953 = vadd.f32 0.0, %v952
    %954 = vmatmul.bf16.gmra.mxu0 %v921
    %v955 = vpop.f32.mrf.mxu0
    %v956 = vadd.f32 0.0, %v955
    %v957 = vpop.f32.mrf.mxu0
    %v958 = vadd.f32 0.0, %v957
    %959 = vmatmul.bf16.gmra.mxu0 %v924
    %v960 = vpop.f32.mrf.mxu0
    %v961 = vadd.f32 0.0, %v960
    %v962 = vpop.f32.mrf.mxu0
    %v963 = vadd.f32 0.0, %v962
    %964 = vmatmul.bf16.gmra.mxu0 %v927
    %v965 = vpop.f32.mrf.mxu0
    %v966 = vadd.f32 0.0, %v965
    %v967 = vpop.f32.mrf.mxu0
    %v968 = vadd.f32 0.0, %v967
    %969 = vmatmul.bf16.gmra.mxu0 %v930
    %v970 = vpop.f32.mrf.mxu0
    %v971 = vadd.f32 0.0, %v970
    %v972 = vpop.f32.mrf.mxu0
    %v973 = vadd.f32 0.0, %v972
    %974 = vmatmul.bf16.gmra.mxu0 %v933
    %v975 = vpop.f32.mrf.mxu0
    %v976 = vadd.f32 0.0, %v975
    %v977 = vpop.f32.mrf.mxu0
    %v978 = vadd.f32 0.0, %v977
    %979 = vmatmul.bf16.gmra.mxu0 %v936
    %v980 = vpop.f32.mrf.mxu0
    %v981 = vadd.f32 0.0, %v980
    %v982 = vpop.f32.mrf.mxu0
    %v983 = vadd.f32 0.0, %v982
    %984 = vmatmul.bf16.gmra.mxu0 %v939
    %v985 = vpop.f32.mrf.mxu0
    %v986 = vadd.f32 0.0, %v985
    %v987 = vpop.f32.mrf.mxu0
    %v988 = vadd.f32 0.0, %v987
    %989 = vdwg.mxu0
    %v990 = vpack.c.bf16 %v951, %v951
    %v991 = vpack.c.bf16 %v953, %v953
    %v992 = vpack.c.bf16 %v956, %v956
    %v993 = vpack.c.bf16 %v958, %v958
    %v994 = vpack.c.bf16 %v961, %v961
    %v995 = vpack.c.bf16 %v963, %v963
    %v996 = vpack.c.bf16 %v966, %v966
    %v997 = vpack.c.bf16 %v968, %v968
    %v998 = vpack.c.bf16 %v971, %v971
    %v999 = vpack.c.bf16 %v973, %v973
    %v1000 = vpack.c.bf16 %v976, %v976
    %v1001 = vpack.c.bf16 %v978, %v978
    %v1002 = vpack.c.bf16 %v981, %v981
    %v1003 = vpack.c.bf16 %v983, %v983
    %v1004 = vpack.c.bf16 %v986, %v986
    %v1005 = vpack.c.bf16 %v988, %v988
    %vm1006 = vcmask 125952
    %1007 = vst.msk [vmem:[%s11] sm:$0xf] %vm1006, %v990
    %1008 = vst.msk [vmem:[%s11 + $0x4] sm:$0xf] %vm1006, %v991
    %1009 = vst.msk [vmem:[%s11 + $0x8] sm:$0xf] %vm1006, %v992
    %1010 = vst.msk [vmem:[%s11 + $0xc] sm:$0xf] %vm1006, %v993
    %1011 = vst.msk [vmem:[%s11 + $0x10] sm:$0xf] %vm1006, %v994
    %1012 = vst.msk [vmem:[%s11 + $0x14] sm:$0xf] %vm1006, %v995
    %1013 = vst.msk [vmem:[%s11 + $0x18] sm:$0xf] %vm1006, %v996
    %1014 = vst.msk [vmem:[%s11 + $0x1c] sm:$0xf] %vm1006, %v997
    %1015 = vst.msk [vmem:[%s11 + $0x20] sm:$0xf] %vm1006, %v998
    %1016 = vst.msk [vmem:[%s11 + $0x24] sm:$0xf] %vm1006, %v999
    %1017 = vst.msk [vmem:[%s11 + $0x28] sm:$0xf] %vm1006, %v1000
    %1018 = vst.msk [vmem:[%s11 + $0x2c] sm:$0xf] %vm1006, %v1001
    %1019 = vst.msk [vmem:[%s11 + $0x30] sm:$0xf] %vm1006, %v1002
    %1020 = vst.msk [vmem:[%s11 + $0x34] sm:$0xf] %vm1006, %v1003
    %1021 = vst.msk [vmem:[%s11 + $0x38] sm:$0xf] %vm1006, %v1004
    %1022 = vst.msk [vmem:[%s11 + $0x3c] sm:$0xf] %vm1006, %v1005
    %v1023 = vld [vmem:[%s9] sm:$0xff]
    %v1024 = vld [vmem:[%s9 + $0x8] sm:$0xff]
    %v1025 = vld [vmem:[%s9 + $0x10] sm:$0xff]
    %v1026 = vld [vmem:[%s9 + $0x18] sm:$0xff]
    %v1027 = vld [vmem:[%s9 + $0x20] sm:$0xff]
    %v1028 = vld [vmem:[%s9 + $0x28] sm:$0xff]
    %v1029 = vld [vmem:[%s9 + $0x30] sm:$0xff]
    %v1030 = vld [vmem:[%s9 + $0x38] sm:$0xff]
    %v1031 = vld [vmem:[%s9 + $0x40] sm:$0xff]
    %v1032 = vld [vmem:[%s9 + $0x48] sm:$0xff]
    %v1033 = vld [vmem:[%s9 + $0x50] sm:$0xff]
    %v1034 = vld [vmem:[%s9 + $0x58] sm:$0xff]
    %v1035 = vld [vmem:[%s9 + $0x60] sm:$0xff]
    %v1036 = vld [vmem:[%s9 + $0x68] sm:$0xff]
    %v1037 = vld [vmem:[%s9 + $0x70] sm:$0xff]
    %v1038 = vld [vmem:[%s9 + $0x78] sm:$0xff]
    %v1039 = vpack.c.bf16 %v1024, %v1023
    %v1040 = vpack.c.bf16 %v1026, %v1025
    %v1041 = vpack.c.bf16 %v1028, %v1027
    %v1042 = vpack.c.bf16 %v1030, %v1029
    %v1043 = vpack.c.bf16 %v1032, %v1031
    %v1044 = vpack.c.bf16 %v1034, %v1033
    %v1045 = vpack.c.bf16 %v1036, %v1035
    %v1046 = vpack.c.bf16 %v1038, %v1037
    %v1048 = vsel %vm167, %v1039, 0
    %v1051 = vsel %vm167, %v1040, 0
    %v1054 = vsel %vm167, %v1041, 0
    %v1057 = vsel %vm167, %v1042, 0
    %v1060 = vsel %vm167, %v1043, 0
    %v1063 = vsel %vm167, %v1044, 0
    %v1066 = vsel %vm167, %v1045, 0
    %v1069 = vsel %vm167, %v1046, 0
    %1071 = vmatpush.bf16.msra.mxu0 0
    %1072 = vmatpush.bf16.msra.mxu0 0
    %1073 = vmatpush.bf16.msra.mxu0 0
    %1074 = vmatpush.bf16.msra.mxu0 0
    %1075 = vmatpush.bf16.msra.mxu0 0
    %1076 = vmatpush.bf16.msra.mxu0 0
    %1077 = vmatpush.bf16.msra.mxu0 0
    %1078 = vmatpush.bf16.msra.mxu0 %v194
    %1079 = vmatmul.bf16.gmra.mxu0 %v1048
    %v1080 = vpop.f32.mrf.mxu0
    %v1081 = vadd.f32 0.0, %v1080
    %v1082 = vpop.f32.mrf.mxu0
    %v1083 = vadd.f32 0.0, %v1082
    %1084 = vmatmul.bf16.gmra.mxu0 %v1051
    %v1085 = vpop.f32.mrf.mxu0
    %v1086 = vadd.f32 0.0, %v1085
    %v1087 = vpop.f32.mrf.mxu0
    %v1088 = vadd.f32 0.0, %v1087
    %1089 = vmatmul.bf16.gmra.mxu0 %v1054
    %v1090 = vpop.f32.mrf.mxu0
    %v1091 = vadd.f32 0.0, %v1090
    %v1092 = vpop.f32.mrf.mxu0
    %v1093 = vadd.f32 0.0, %v1092
    %1094 = vmatmul.bf16.gmra.mxu0 %v1057
    %v1095 = vpop.f32.mrf.mxu0
    %v1096 = vadd.f32 0.0, %v1095
    %v1097 = vpop.f32.mrf.mxu0
    %v1098 = vadd.f32 0.0, %v1097
    %1099 = vmatmul.bf16.gmra.mxu0 %v1060
    %v1100 = vpop.f32.mrf.mxu0
    %v1101 = vadd.f32 0.0, %v1100
    %v1102 = vpop.f32.mrf.mxu0
    %v1103 = vadd.f32 0.0, %v1102
    %1104 = vmatmul.bf16.gmra.mxu0 %v1063
    %v1105 = vpop.f32.mrf.mxu0
    %v1106 = vadd.f32 0.0, %v1105
    %v1107 = vpop.f32.mrf.mxu0
    %v1108 = vadd.f32 0.0, %v1107
    %1109 = vmatmul.bf16.gmra.mxu0 %v1066
    %v1110 = vpop.f32.mrf.mxu0
    %v1111 = vadd.f32 0.0, %v1110
    %v1112 = vpop.f32.mrf.mxu0
    %v1113 = vadd.f32 0.0, %v1112
    %1114 = vmatmul.bf16.gmra.mxu0 %v1069
    %v1115 = vpop.f32.mrf.mxu0
    %v1116 = vadd.f32 0.0, %v1115
    %v1117 = vpop.f32.mrf.mxu0
    %v1118 = vadd.f32 0.0, %v1117
    %1119 = vdwg.mxu0
    %v1120 = vpack.c.bf16 %v1081, %v1081
    %v1121 = vpack.c.bf16 %v1083, %v1083
    %v1122 = vpack.c.bf16 %v1086, %v1086
    %v1123 = vpack.c.bf16 %v1088, %v1088
    %v1124 = vpack.c.bf16 %v1091, %v1091
    %v1125 = vpack.c.bf16 %v1093, %v1093
    %v1126 = vpack.c.bf16 %v1096, %v1096
    %v1127 = vpack.c.bf16 %v1098, %v1098
    %v1128 = vpack.c.bf16 %v1101, %v1101
    %v1129 = vpack.c.bf16 %v1103, %v1103
    %v1130 = vpack.c.bf16 %v1106, %v1106
    %v1131 = vpack.c.bf16 %v1108, %v1108
    %v1132 = vpack.c.bf16 %v1111, %v1111
    %v1133 = vpack.c.bf16 %v1113, %v1113
    %v1134 = vpack.c.bf16 %v1116, %v1116
    %v1135 = vpack.c.bf16 %v1118, %v1118
    %1136 = vst.msk [vmem:[%s12] sm:$0xf] %vm1006, %v1120
    %1137 = vst.msk [vmem:[%s12 + $0x4] sm:$0xf] %vm1006, %v1121
    %1138 = vst.msk [vmem:[%s12 + $0x8] sm:$0xf] %vm1006, %v1122
    %1139 = vst.msk [vmem:[%s12 + $0xc] sm:$0xf] %vm1006, %v1123
    %1140 = vst.msk [vmem:[%s12 + $0x10] sm:$0xf] %vm1006, %v1124
    %1141 = vst.msk [vmem:[%s12 + $0x14] sm:$0xf] %vm1006, %v1125
    %1142 = vst.msk [vmem:[%s12 + $0x18] sm:$0xf] %vm1006, %v1126
    %1143 = vst.msk [vmem:[%s12 + $0x1c] sm:$0xf] %vm1006, %v1127
    %1144 = vst.msk [vmem:[%s12 + $0x20] sm:$0xf] %vm1006, %v1128
    %1145 = vst.msk [vmem:[%s12 + $0x24] sm:$0xf] %vm1006, %v1129
    %1146 = vst.msk [vmem:[%s12 + $0x28] sm:$0xf] %vm1006, %v1130
    %1147 = vst.msk [vmem:[%s12 + $0x2c] sm:$0xf] %vm1006, %v1131
    %1148 = vst.msk [vmem:[%s12 + $0x30] sm:$0xf] %vm1006, %v1132
    %1149 = vst.msk [vmem:[%s12 + $0x34] sm:$0xf] %vm1006, %v1133
    %1150 = vst.msk [vmem:[%s12 + $0x38] sm:$0xf] %vm1006, %v1134
    %1151 = vst.msk [vmem:[%s12 + $0x3c] sm:$0xf] %vm1006, %v1135
    %vm1152 = vcmask 7168
    %1153 = vst.msk [vmem:[%s13] sm:$0xff] %vm1152, 0.0
    %1154 = vst.msk [vmem:[%s13 + $0x8] sm:$0xff] %vm1152, 0.0
    %1155 = vst.msk [vmem:[%s13 + $0x10] sm:$0xff] %vm1152, 0.0
    %1156 = vst.msk [vmem:[%s13 + $0x18] sm:$0xff] %vm1152, 0.0
    %1157 = vst.msk [vmem:[%s13 + $0x20] sm:$0xff] %vm1152, 0.0
    %1158 = vst.msk [vmem:[%s13 + $0x28] sm:$0xff] %vm1152, 0.0
    %1159 = vst.msk [vmem:[%s13 + $0x30] sm:$0xff] %vm1152, 0.0
    %1160 = vst.msk [vmem:[%s13 + $0x38] sm:$0xff] %vm1152, 0.0
    %1161 = vst.msk [vmem:[%s13 + $0x40] sm:$0xff] %vm1152, 0.0
    %1162 = vst.msk [vmem:[%s13 + $0x48] sm:$0xff] %vm1152, 0.0
    %1163 = vst.msk [vmem:[%s13 + $0x50] sm:$0xff] %vm1152, 0.0
    %1164 = vst.msk [vmem:[%s13 + $0x58] sm:$0xff] %vm1152, 0.0
    %1165 = vst.msk [vmem:[%s13 + $0x60] sm:$0xff] %vm1152, 0.0
    %1166 = vst.msk [vmem:[%s13 + $0x68] sm:$0xff] %vm1152, 0.0
    %1167 = vst.msk [vmem:[%s13 + $0x70] sm:$0xff] %vm1152, 0.0
    %1168 = vst.msk [vmem:[%s13 + $0x78] sm:$0xff] %vm1152, 0.0
    %1169 = vst.msk [vmem:[%s14] sm:$0xff] %vm1152, 0.0
    %1170 = vst.msk [vmem:[%s14 + $0x8] sm:$0xff] %vm1152, 0.0
    %1171 = vst.msk [vmem:[%s14 + $0x10] sm:$0xff] %vm1152, 0.0
    %1172 = vst.msk [vmem:[%s14 + $0x18] sm:$0xff] %vm1152, 0.0
    %1173 = vst.msk [vmem:[%s14 + $0x20] sm:$0xff] %vm1152, 0.0
    %1174 = vst.msk [vmem:[%s14 + $0x28] sm:$0xff] %vm1152, 0.0
    %1175 = vst.msk [vmem:[%s14 + $0x30] sm:$0xff] %vm1152, 0.0
    %1176 = vst.msk [vmem:[%s14 + $0x38] sm:$0xff] %vm1152, 0.0
    %1177 = vst.msk [vmem:[%s14 + $0x40] sm:$0xff] %vm1152, 0.0
    %1178 = vst.msk [vmem:[%s14 + $0x48] sm:$0xff] %vm1152, 0.0
    %1179 = vst.msk [vmem:[%s14 + $0x50] sm:$0xff] %vm1152, 0.0
    %1180 = vst.msk [vmem:[%s14 + $0x58] sm:$0xff] %vm1152, 0.0
    %1181 = vst.msk [vmem:[%s14 + $0x60] sm:$0xff] %vm1152, 0.0
    %1182 = vst.msk [vmem:[%s14 + $0x68] sm:$0xff] %vm1152, 0.0
    %1183 = vst.msk [vmem:[%s14 + $0x70] sm:$0xff] %vm1152, 0.0
    %1184 = vst.msk [vmem:[%s14 + $0x78] sm:$0xff] %vm1152, 0.0
  $region45: #{alternate_weave_layer.2} parent=0 // pred_fallthru
    _
  %v1185 = vld [vmem:[%s6] sm:$0xff]
  %v1186 = vld [vmem:[%s6 + $0x8] sm:$0xff]
  %v1187 = vld [vmem:[%s6 + $0x10] sm:$0xff]
  %v1188 = vld [vmem:[%s6 + $0x18] sm:$0xff]
  %v1189 = vld [vmem:[%s6 + $0x20] sm:$0xff]
  %v1190 = vld [vmem:[%s6 + $0x28] sm:$0xff]
  %v1191 = vld [vmem:[%s6 + $0x30] sm:$0xff]
  %v1192 = vld [vmem:[%s6 + $0x38] sm:$0xff]
  %v1193 = vld [vmem:[%s6 + $0x40] sm:$0xff]
  %v1194 = vld [vmem:[%s6 + $0x48] sm:$0xff]
  %v1195 = vld [vmem:[%s6 + $0x50] sm:$0xff]
  %v1196 = vld [vmem:[%s6 + $0x58] sm:$0xff]
  %v1197 = vld [vmem:[%s6 + $0x60] sm:$0xff]
  %v1198 = vld [vmem:[%s6 + $0x68] sm:$0xff]
  %v1199 = vld [vmem:[%s6 + $0x70] sm:$0xff]
  %v1200 = vld [vmem:[%s6 + $0x78] sm:$0xff]
  %v1201 = vpack.c.bf16 %v1186, %v1185
  %v1202 = vpack.c.bf16 %v1188, %v1187
  %v1203 = vpack.c.bf16 %v1190, %v1189
  %v1204 = vpack.c.bf16 %v1192, %v1191
  %v1205 = vpack.c.bf16 %v1194, %v1193
  %v1206 = vpack.c.bf16 %v1196, %v1195
  %v1207 = vpack.c.bf16 %v1198, %v1197
  %v1208 = vpack.c.bf16 %v1200, %v1199
  %v1209 = vld [vmem:[%s0] sm:$0xff]
  %v1210 = vld [vmem:[%s0 + $0x8] sm:$0xf]
  %v1211 = vpack.c.bf16 %v1210, %v1209
  %v1212 = vld [vmem:[%s7] sm:$0xff]
  %v1213 = vld [vmem:[%s7 + $0x8] sm:$0xff]
  %v1214 = vld [vmem:[%s7 + $0x10] sm:$0xff]
  %v1215 = vld [vmem:[%s7 + $0x18] sm:$0xff]
  %v1216 = vld [vmem:[%s7 + $0x20] sm:$0xff]
  %v1217 = vld [vmem:[%s7 + $0x28] sm:$0xff]
  %v1218 = vld [vmem:[%s7 + $0x30] sm:$0xff]
  %v1219 = vld [vmem:[%s7 + $0x38] sm:$0xff]
  %v1220 = vld [vmem:[%s7 + $0x40] sm:$0xff]
  %v1221 = vld [vmem:[%s7 + $0x48] sm:$0xff]
  %v1222 = vld [vmem:[%s7 + $0x50] sm:$0xff]
  %v1223 = vld [vmem:[%s7 + $0x58] sm:$0xff]
  %v1224 = vld [vmem:[%s7 + $0x60] sm:$0xff]
  %v1225 = vld [vmem:[%s7 + $0x68] sm:$0xff]
  %v1226 = vld [vmem:[%s7 + $0x70] sm:$0xff]
  %v1227 = vld [vmem:[%s7 + $0x78] sm:$0xff]
  %1229 = vset.pattern.permute.xlu0 0
  %1230 = vperm.xlu0 %1229, %v1212
  %v1231 = vpop.permute.xlu0 %1230
  %1234 = vset.pattern.permute.xlu0 0
  %1235 = vperm.xlu0 %1234, %v1213
  %v1236 = vpop.permute.xlu0 %1235
  %1239 = vset.pattern.permute.xlu0 0
  %1240 = vperm.xlu0 %1239, %v1214
  %v1241 = vpop.permute.xlu0 %1240
  %1244 = vset.pattern.permute.xlu0 0
  %1245 = vperm.xlu0 %1244, %v1215
  %v1246 = vpop.permute.xlu0 %1245
  %1249 = vset.pattern.permute.xlu0 0
  %1250 = vperm.xlu0 %1249, %v1216
  %v1251 = vpop.permute.xlu0 %1250
  %1254 = vset.pattern.permute.xlu0 0
  %1255 = vperm.xlu0 %1254, %v1217
  %v1256 = vpop.permute.xlu0 %1255
  %1259 = vset.pattern.permute.xlu0 0
  %1260 = vperm.xlu0 %1259, %v1218
  %v1261 = vpop.permute.xlu0 %1260
  %1264 = vset.pattern.permute.xlu0 0
  %1265 = vperm.xlu0 %1264, %v1219
  %v1266 = vpop.permute.xlu0 %1265
  %1269 = vset.pattern.permute.xlu0 0
  %1270 = vperm.xlu0 %1269, %v1220
  %v1271 = vpop.permute.xlu0 %1270
  %1274 = vset.pattern.permute.xlu0 0
  %1275 = vperm.xlu0 %1274, %v1221
  %v1276 = vpop.permute.xlu0 %1275
  %1279 = vset.pattern.permute.xlu0 0
  %1280 = vperm.xlu0 %1279, %v1222
  %v1281 = vpop.permute.xlu0 %1280
  %1284 = vset.pattern.permute.xlu0 0
  %1285 = vperm.xlu0 %1284, %v1223
  %v1286 = vpop.permute.xlu0 %1285
  %1289 = vset.pattern.permute.xlu0 0
  %1290 = vperm.xlu0 %1289, %v1224
  %v1291 = vpop.permute.xlu0 %1290
  %1294 = vset.pattern.permute.xlu0 0
  %1295 = vperm.xlu0 %1294, %v1225
  %v1296 = vpop.permute.xlu0 %1295
  %1299 = vset.pattern.permute.xlu0 0
  %1300 = vperm.xlu0 %1299, %v1226
  %v1301 = vpop.permute.xlu0 %1300
  %1304 = vset.pattern.permute.xlu0 0
  %1305 = vperm.xlu0 %1304, %v1227
  %v1306 = vpop.permute.xlu0 %1305
  %vm1308 = vcmask 97280
  %v1310 = vsel %vm1308, %v1201, 0
  %v1313 = vsel %vm1308, %v1202, 0
  %v1316 = vsel %vm1308, %v1203, 0
  %v1319 = vsel %vm1308, %v1204, 0
  %v1322 = vsel %vm1308, %v1205, 0
  %v1325 = vsel %vm1308, %v1206, 0
  %v1328 = vsel %vm1308, %v1207, 0
  %v1331 = vsel %vm1308, %v1208, 0
  %vm1333 = vcmask 1045504
  %v1335 = vsel %vm1333, %v1211, 0
  %1337 = vmatpush.bf16.msra.mxu0 0
  %1338 = vmatpush.bf16.msra.mxu0 0
  %1339 = vmatpush.bf16.msra.mxu0 0
  %1340 = vmatpush.bf16.msra.mxu0 0
  %1341 = vmatpush.bf16.msra.mxu0 0
  %1342 = vmatpush.bf16.msra.mxu0 0
  %1343 = vmatpush.bf16.msra.mxu0 0
  %1344 = vmatpush.bf16.msra.mxu0 %v1335
  %1345 = vmatmul.bf16.gmra.mxu0 %v1310
  %v1346 = vpop.f32.mrf.mxu0
  %v1347 = vadd.f32 %v1231, %v1346
  %v1348 = vpop.f32.mrf.mxu0
  %v1349 = vadd.f32 %v1236, %v1348
  %1350 = vmatmul.bf16.gmra.mxu0 %v1313
  %v1351 = vpop.f32.mrf.mxu0
  %v1352 = vadd.f32 %v1241, %v1351
  %v1353 = vpop.f32.mrf.mxu0
  %v1354 = vadd.f32 %v1246, %v1353
  %1355 = vmatmul.bf16.gmra.mxu0 %v1316
  %v1356 = vpop.f32.mrf.mxu0
  %v1357 = vadd.f32 %v1251, %v1356
  %v1358 = vpop.f32.mrf.mxu0
  %v1359 = vadd.f32 %v1256, %v1358
  %1360 = vmatmul.bf16.gmra.mxu0 %v1319
  %v1361 = vpop.f32.mrf.mxu0
  %v1362 = vadd.f32 %v1261, %v1361
  %v1363 = vpop.f32.mrf.mxu0
  %v1364 = vadd.f32 %v1266, %v1363
  %1365 = vmatmul.bf16.gmra.mxu0 %v1322
  %v1366 = vpop.f32.mrf.mxu0
  %v1367 = vadd.f32 %v1271, %v1366
  %v1368 = vpop.f32.mrf.mxu0
  %v1369 = vadd.f32 %v1276, %v1368
  %1370 = vmatmul.bf16.gmra.mxu0 %v1325
  %v1371 = vpop.f32.mrf.mxu0
  %v1372 = vadd.f32 %v1281, %v1371
  %v1373 = vpop.f32.mrf.mxu0
  %v1374 = vadd.f32 %v1286, %v1373
  %1375 = vmatmul.bf16.gmra.mxu0 %v1328
  %v1376 = vpop.f32.mrf.mxu0
  %v1377 = vadd.f32 %v1291, %v1376
  %v1378 = vpop.f32.mrf.mxu0
  %v1379 = vadd.f32 %v1296, %v1378
  %1380 = vmatmul.bf16.gmra.mxu0 %v1331
  %v1381 = vpop.f32.mrf.mxu0
  %v1382 = vadd.f32 %v1301, %v1381
  %v1383 = vpop.f32.mrf.mxu0
  %v1384 = vadd.f32 %v1306, %v1383
  %1385 = vdwg.mxu0
  %v1386 = vmax.f32 %v1347, 0.0
  %v1387 = vmax.f32 %v1349, 0.0
  %v1388 = vmax.f32 %v1352, 0.0
  %v1389 = vmax.f32 %v1354, 0.0
  %v1390 = vmax.f32 %v1357, 0.0
  %v1391 = vmax.f32 %v1359, 0.0
  %v1392 = vmax.f32 %v1362, 0.0
  %v1393 = vmax.f32 %v1364, 0.0
  %v1394 = vmax.f32 %v1367, 0.0
  %v1395 = vmax.f32 %v1369, 0.0
  %v1396 = vmax.f32 %v1372, 0.0
  %v1397 = vmax.f32 %v1374, 0.0
  %v1398 = vmax.f32 %v1377, 0.0
  %v1399 = vmax.f32 %v1379, 0.0
  %v1400 = vmax.f32 %v1382, 0.0
  %v1401 = vmax.f32 %v1384, 0.0
  %v1402 = vlaneseq
  %v1403 = vand.u32 %v1402, 127
  %s1404 = smul.u32 0, 128
  %v1405 = vstv %s1404
  %v1406 = vadd.s32 %v1403, %v1405
  %vm1407 = vcmp.lt.s32.totalorder %v1406, 24
  %v1408 = vsel %vm1407, 1, 0
  %vm1409 = vcmp.eq.s32.totalorder %v1408, 1
  %v1410 = vsel %vm1409, %v1386, 0.0
  %v1411 = vsel %vm1409, %v1387, 0.0
  %v1412 = vsel %vm1409, %v1388, 0.0
  %v1413 = vsel %vm1409, %v1389, 0.0
  %v1414 = vsel %vm1409, %v1390, 0.0
  %v1415 = vsel %vm1409, %v1391, 0.0
  %v1416 = vsel %vm1409, %v1392, 0.0
  %v1417 = vsel %vm1409, %v1393, 0.0
  %v1418 = vsel %vm1409, %v1394, 0.0
  %v1419 = vsel %vm1409, %v1395, 0.0
  %v1420 = vsel %vm1409, %v1396, 0.0
  %v1421 = vsel %vm1409, %v1397, 0.0
  %v1422 = vsel %vm1409, %v1398, 0.0
  %v1423 = vsel %vm1409, %v1399, 0.0
  %v1424 = vsel %vm1409, %v1400, 0.0
  %v1425 = vsel %vm1409, %v1401, 0.0
  %v1426 = vld [vmem:[%s13] sm:$0xff]
  %v1427 = vld [vmem:[%s13 + $0x8] sm:$0xff]
  %v1428 = vld [vmem:[%s13 + $0x10] sm:$0xff]
  %v1429 = vld [vmem:[%s13 + $0x18] sm:$0xff]
  %v1430 = vld [vmem:[%s13 + $0x20] sm:$0xff]
  %v1431 = vld [vmem:[%s13 + $0x28] sm:$0xff]
  %v1432 = vld [vmem:[%s13 + $0x30] sm:$0xff]
  %v1433 = vld [vmem:[%s13 + $0x38] sm:$0xff]
  %v1434 = vld [vmem:[%s13 + $0x40] sm:$0xff]
  %v1435 = vld [vmem:[%s13 + $0x48] sm:$0xff]
  %v1436 = vld [vmem:[%s13 + $0x50] sm:$0xff]
  %v1437 = vld [vmem:[%s13 + $0x58] sm:$0xff]
  %v1438 = vld [vmem:[%s13 + $0x60] sm:$0xff]
  %v1439 = vld [vmem:[%s13 + $0x68] sm:$0xff]
  %v1440 = vld [vmem:[%s13 + $0x70] sm:$0xff]
  %v1441 = vld [vmem:[%s13 + $0x78] sm:$0xff]
  %1442 = vadd.xlane.f32.xlu0 %v1410
  %v1443 = vpop.xlane.xlu0 %1442
  %1444 = vadd.xlane.f32.xlu0 %v1411
  %v1445 = vpop.xlane.xlu0 %1444
  %1446 = vadd.xlane.f32.xlu0 %v1412
  %v1447 = vpop.xlane.xlu0 %1446
  %1448 = vadd.xlane.f32.xlu0 %v1413
  %v1449 = vpop.xlane.xlu0 %1448
  %1450 = vadd.xlane.f32.xlu0 %v1414
  %v1451 = vpop.xlane.xlu0 %1450
  %1452 = vadd.xlane.f32.xlu0 %v1415
  %v1453 = vpop.xlane.xlu0 %1452
  %1454 = vadd.xlane.f32.xlu0 %v1416
  %v1455 = vpop.xlane.xlu0 %1454
  %1456 = vadd.xlane.f32.xlu0 %v1417
  %v1457 = vpop.xlane.xlu0 %1456
  %1458 = vadd.xlane.f32.xlu0 %v1418
  %v1459 = vpop.xlane.xlu0 %1458
  %1460 = vadd.xlane.f32.xlu0 %v1419
  %v1461 = vpop.xlane.xlu0 %1460
  %1462 = vadd.xlane.f32.xlu0 %v1420
  %v1463 = vpop.xlane.xlu0 %1462
  %1464 = vadd.xlane.f32.xlu0 %v1421
  %v1465 = vpop.xlane.xlu0 %1464
  %1466 = vadd.xlane.f32.xlu0 %v1422
  %v1467 = vpop.xlane.xlu0 %1466
  %1468 = vadd.xlane.f32.xlu0 %v1423
  %v1469 = vpop.xlane.xlu0 %1468
  %1470 = vadd.xlane.f32.xlu0 %v1424
  %v1471 = vpop.xlane.xlu0 %1470
  %1472 = vadd.xlane.f32.xlu0 %v1425
  %v1473 = vpop.xlane.xlu0 %1472
  %v1474 = vadd.f32 %v1426, %v1443
  %v1475 = vadd.f32 %v1427, %v1445
  %v1476 = vadd.f32 %v1428, %v1447
  %v1477 = vadd.f32 %v1429, %v1449
  %v1478 = vadd.f32 %v1430, %v1451
  %v1479 = vadd.f32 %v1431, %v1453
  %v1480 = vadd.f32 %v1432, %v1455
  %v1481 = vadd.f32 %v1433, %v1457
  %v1482 = vadd.f32 %v1434, %v1459
  %v1483 = vadd.f32 %v1435, %v1461
  %v1484 = vadd.f32 %v1436, %v1463
  %v1485 = vadd.f32 %v1437, %v1465
  %v1486 = vadd.f32 %v1438, %v1467
  %v1487 = vadd.f32 %v1439, %v1469
  %v1488 = vadd.f32 %v1440, %v1471
  %v1489 = vadd.f32 %v1441, %v1473
  %vm1490 = vcmask 7168
  %1491 = vst.msk [vmem:[%s13] sm:$0xff] %vm1490, %v1474
  %1492 = vst.msk [vmem:[%s13 + $0x8] sm:$0xff] %vm1490, %v1475
  %1493 = vst.msk [vmem:[%s13 + $0x10] sm:$0xff] %vm1490, %v1476
  %1494 = vst.msk [vmem:[%s13 + $0x18] sm:$0xff] %vm1490, %v1477
  %1495 = vst.msk [vmem:[%s13 + $0x20] sm:$0xff] %vm1490, %v1478
  %1496 = vst.msk [vmem:[%s13 + $0x28] sm:$0xff] %vm1490, %v1479
  %1497 = vst.msk [vmem:[%s13 + $0x30] sm:$0xff] %vm1490, %v1480
  %1498 = vst.msk [vmem:[%s13 + $0x38] sm:$0xff] %vm1490, %v1481
  %1499 = vst.msk [vmem:[%s13 + $0x40] sm:$0xff] %vm1490, %v1482
  %1500 = vst.msk [vmem:[%s13 + $0x48] sm:$0xff] %vm1490, %v1483
  %1501 = vst.msk [vmem:[%s13 + $0x50] sm:$0xff] %vm1490, %v1484
  %1502 = vst.msk [vmem:[%s13 + $0x58] sm:$0xff] %vm1490, %v1485
  %1503 = vst.msk [vmem:[%s13 + $0x60] sm:$0xff] %vm1490, %v1486
  %1504 = vst.msk [vmem:[%s13 + $0x68] sm:$0xff] %vm1490, %v1487
  %1505 = vst.msk [vmem:[%s13 + $0x70] sm:$0xff] %vm1490, %v1488
  %1506 = vst.msk [vmem:[%s13 + $0x78] sm:$0xff] %vm1490, %v1489
  %v1507 = vld [vmem:[%s14] sm:$0xff]
  %v1508 = vld [vmem:[%s14 + $0x8] sm:$0xff]
  %v1509 = vld [vmem:[%s14 + $0x10] sm:$0xff]
  %v1510 = vld [vmem:[%s14 + $0x18] sm:$0xff]
  %v1511 = vld [vmem:[%s14 + $0x20] sm:$0xff]
  %v1512 = vld [vmem:[%s14 + $0x28] sm:$0xff]
  %v1513 = vld [vmem:[%s14 + $0x30] sm:$0xff]
  %v1514 = vld [vmem:[%s14 + $0x38] sm:$0xff]
  %v1515 = vld [vmem:[%s14 + $0x40] sm:$0xff]
  %v1516 = vld [vmem:[%s14 + $0x48] sm:$0xff]
  %v1517 = vld [vmem:[%s14 + $0x50] sm:$0xff]
  %v1518 = vld [vmem:[%s14 + $0x58] sm:$0xff]
  %v1519 = vld [vmem:[%s14 + $0x60] sm:$0xff]
  %v1520 = vld [vmem:[%s14 + $0x68] sm:$0xff]
  %v1521 = vld [vmem:[%s14 + $0x70] sm:$0xff]
  %v1522 = vld [vmem:[%s14 + $0x78] sm:$0xff]
  %v1523 = vmul.f32 %v1410, %v1410
  %v1524 = vmul.f32 %v1411, %v1411
  %v1525 = vmul.f32 %v1412, %v1412
  %v1526 = vmul.f32 %v1413, %v1413
  %v1527 = vmul.f32 %v1414, %v1414
  %v1528 = vmul.f32 %v1415, %v1415
  %v1529 = vmul.f32 %v1416, %v1416
  %v1530 = vmul.f32 %v1417, %v1417
  %v1531 = vmul.f32 %v1418, %v1418
  %v1532 = vmul.f32 %v1419, %v1419
  %v1533 = vmul.f32 %v1420, %v1420
  %v1534 = vmul.f32 %v1421, %v1421
  %v1535 = vmul.f32 %v1422, %v1422
  %v1536 = vmul.f32 %v1423, %v1423
  %v1537 = vmul.f32 %v1424, %v1424
  %v1538 = vmul.f32 %v1425, %v1425
  %1539 = vadd.xlane.f32.xlu0 %v1523
  %v1540 = vpop.xlane.xlu0 %1539
  %1541 = vadd.xlane.f32.xlu0 %v1524
  %v1542 = vpop.xlane.xlu0 %1541
  %1543 = vadd.xlane.f32.xlu0 %v1525
  %v1544 = vpop.xlane.xlu0 %1543
  %1545 = vadd.xlane.f32.xlu0 %v1526
  %v1546 = vpop.xlane.xlu0 %1545
  %1547 = vadd.xlane.f32.xlu0 %v1527
  %v1548 = vpop.xlane.xlu0 %1547
  %1549 = vadd.xlane.f32.xlu0 %v1528
  %v1550 = vpop.xlane.xlu0 %1549
  %1551 = vadd.xlane.f32.xlu0 %v1529
  %v1552 = vpop.xlane.xlu0 %1551
  %1553 = vadd.xlane.f32.xlu0 %v1530
  %v1554 = vpop.xlane.xlu0 %1553
  %1555 = vadd.xlane.f32.xlu0 %v1531
  %v1556 = vpop.xlane.xlu0 %1555
  %1557 = vadd.xlane.f32.xlu0 %v1532
  %v1558 = vpop.xlane.xlu0 %1557
  %1559 = vadd.xlane.f32.xlu0 %v1533
  %v1560 = vpop.xlane.xlu0 %1559
  %1561 = vadd.xlane.f32.xlu0 %v1534
  %v1562 = vpop.xlane.xlu0 %1561
  %1563 = vadd.xlane.f32.xlu0 %v1535
  %v1564 = vpop.xlane.xlu0 %1563
  %1565 = vadd.xlane.f32.xlu0 %v1536
  %v1566 = vpop.xlane.xlu0 %1565
  %1567 = vadd.xlane.f32.xlu0 %v1537
  %v1568 = vpop.xlane.xlu0 %1567
  %1569 = vadd.xlane.f32.xlu0 %v1538
  %v1570 = vpop.xlane.xlu0 %1569
  %v1571 = vadd.f32 %v1507, %v1540
  %v1572 = vadd.f32 %v1508, %v1542
  %v1573 = vadd.f32 %v1509, %v1544
  %v1574 = vadd.f32 %v1510, %v1546
  %v1575 = vadd.f32 %v1511, %v1548
  %v1576 = vadd.f32 %v1512, %v1550
  %v1577 = vadd.f32 %v1513, %v1552
  %v1578 = vadd.f32 %v1514, %v1554
  %v1579 = vadd.f32 %v1515, %v1556
  %v1580 = vadd.f32 %v1516, %v1558
  %v1581 = vadd.f32 %v1517, %v1560
  %v1582 = vadd.f32 %v1518, %v1562
  %v1583 = vadd.f32 %v1519, %v1564
  %v1584 = vadd.f32 %v1520, %v1566
  %v1585 = vadd.f32 %v1521, %v1568
  %v1586 = vadd.f32 %v1522, %v1570
  %1587 = vst.msk [vmem:[%s14] sm:$0xff] %vm1490, %v1571
  %1588 = vst.msk [vmem:[%s14 + $0x8] sm:$0xff] %vm1490, %v1572
  %1589 = vst.msk [vmem:[%s14 + $0x10] sm:$0xff] %vm1490, %v1573
  %1590 = vst.msk [vmem:[%s14 + $0x18] sm:$0xff] %vm1490, %v1574
  %1591 = vst.msk [vmem:[%s14 + $0x20] sm:$0xff] %vm1490, %v1575
  %1592 = vst.msk [vmem:[%s14 + $0x28] sm:$0xff] %vm1490, %v1576
  %1593 = vst.msk [vmem:[%s14 + $0x30] sm:$0xff] %vm1490, %v1577
  %1594 = vst.msk [vmem:[%s14 + $0x38] sm:$0xff] %vm1490, %v1578
  %1595 = vst.msk [vmem:[%s14 + $0x40] sm:$0xff] %vm1490, %v1579
  %1596 = vst.msk [vmem:[%s14 + $0x48] sm:$0xff] %vm1490, %v1580
  %1597 = vst.msk [vmem:[%s14 + $0x50] sm:$0xff] %vm1490, %v1581
  %1598 = vst.msk [vmem:[%s14 + $0x58] sm:$0xff] %vm1490, %v1582
  %1599 = vst.msk [vmem:[%s14 + $0x60] sm:$0xff] %vm1490, %v1583
  %1600 = vst.msk [vmem:[%s14 + $0x68] sm:$0xff] %vm1490, %v1584
  %1601 = vst.msk [vmem:[%s14 + $0x70] sm:$0xff] %vm1490, %v1585
  %1602 = vst.msk [vmem:[%s14 + $0x78] sm:$0xff] %vm1490, %v1586
  // Predicated region
  $region46: #{alternate_weave_layer.2} parent=0 // pred_check
    %p1603 = pneg %p41
  $region47: #{alternate_weave_layer.2} parent=0 // pred_check_branch
    %1605 = sbr.rel (%p1603) target = $region49
  $region48: #{alternate_weave_layer.2} parent=0 // pred_region
    %v1606 = vld [vmem:[%s13] sm:$0xff]
    %v1607 = vld [vmem:[%s13 + $0x8] sm:$0xff]
    %v1608 = vld [vmem:[%s13 + $0x10] sm:$0xff]
    %v1609 = vld [vmem:[%s13 + $0x18] sm:$0xff]
    %v1610 = vld [vmem:[%s13 + $0x20] sm:$0xff]
    %v1611 = vld [vmem:[%s13 + $0x28] sm:$0xff]
    %v1612 = vld [vmem:[%s13 + $0x30] sm:$0xff]
    %v1613 = vld [vmem:[%s13 + $0x38] sm:$0xff]
    %v1614 = vld [vmem:[%s13 + $0x40] sm:$0xff]
    %v1615 = vld [vmem:[%s13 + $0x48] sm:$0xff]
    %v1616 = vld [vmem:[%s13 + $0x50] sm:$0xff]
    %v1617 = vld [vmem:[%s13 + $0x58] sm:$0xff]
    %v1618 = vld [vmem:[%s13 + $0x60] sm:$0xff]
    %v1619 = vld [vmem:[%s13 + $0x68] sm:$0xff]
    %v1620 = vld [vmem:[%s13 + $0x70] sm:$0xff]
    %v1621 = vld [vmem:[%s13 + $0x78] sm:$0xff]
    %v1622 = vmul.f32 %v1606, 0.041666668
    %v1623 = vmul.f32 %v1607, 0.041666668
    %v1624 = vmul.f32 %v1608, 0.041666668
    %v1625 = vmul.f32 %v1609, 0.041666668
    %v1626 = vmul.f32 %v1610, 0.041666668
    %v1627 = vmul.f32 %v1611, 0.041666668
    %v1628 = vmul.f32 %v1612, 0.041666668
    %v1629 = vmul.f32 %v1613, 0.041666668
    %v1630 = vmul.f32 %v1614, 0.041666668
    %v1631 = vmul.f32 %v1615, 0.041666668
    %v1632 = vmul.f32 %v1616, 0.041666668
    %v1633 = vmul.f32 %v1617, 0.041666668
    %v1634 = vmul.f32 %v1618, 0.041666668
    %v1635 = vmul.f32 %v1619, 0.041666668
    %v1636 = vmul.f32 %v1620, 0.041666668
    %v1637 = vmul.f32 %v1621, 0.041666668
    %v1638 = vld [vmem:[%s14] sm:$0xff]
    %v1639 = vld [vmem:[%s14 + $0x8] sm:$0xff]
    %v1640 = vld [vmem:[%s14 + $0x10] sm:$0xff]
    %v1641 = vld [vmem:[%s14 + $0x18] sm:$0xff]
    %v1642 = vld [vmem:[%s14 + $0x20] sm:$0xff]
    %v1643 = vld [vmem:[%s14 + $0x28] sm:$0xff]
    %v1644 = vld [vmem:[%s14 + $0x30] sm:$0xff]
    %v1645 = vld [vmem:[%s14 + $0x38] sm:$0xff]
    %v1646 = vld [vmem:[%s14 + $0x40] sm:$0xff]
    %v1647 = vld [vmem:[%s14 + $0x48] sm:$0xff]
    %v1648 = vld [vmem:[%s14 + $0x50] sm:$0xff]
    %v1649 = vld [vmem:[%s14 + $0x58] sm:$0xff]
    %v1650 = vld [vmem:[%s14 + $0x60] sm:$0xff]
    %v1651 = vld [vmem:[%s14 + $0x68] sm:$0xff]
    %v1652 = vld [vmem:[%s14 + $0x70] sm:$0xff]
    %v1653 = vld [vmem:[%s14 + $0x78] sm:$0xff]
    %v1654 = vmul.f32 %v1638, 0.041666668
    %v1655 = vmul.f32 %v1639, 0.041666668
    %v1656 = vmul.f32 %v1640, 0.041666668
    %v1657 = vmul.f32 %v1641, 0.041666668
    %v1658 = vmul.f32 %v1642, 0.041666668
    %v1659 = vmul.f32 %v1643, 0.041666668
    %v1660 = vmul.f32 %v1644, 0.041666668
    %v1661 = vmul.f32 %v1645, 0.041666668
    %v1662 = vmul.f32 %v1646, 0.041666668
    %v1663 = vmul.f32 %v1647, 0.041666668
    %v1664 = vmul.f32 %v1648, 0.041666668
    %v1665 = vmul.f32 %v1649, 0.041666668
    %v1666 = vmul.f32 %v1650, 0.041666668
    %v1667 = vmul.f32 %v1651, 0.041666668
    %v1668 = vmul.f32 %v1652, 0.041666668
    %v1669 = vmul.f32 %v1653, 0.041666668
    %v1670 = vmul.f32 %v1622, %v1622
    %v1671 = vmul.f32 %v1623, %v1623
    %v1672 = vmul.f32 %v1624, %v1624
    %v1673 = vmul.f32 %v1625, %v1625
    %v1674 = vmul.f32 %v1626, %v1626
    %v1675 = vmul.f32 %v1627, %v1627
    %v1676 = vmul.f32 %v1628, %v1628
    %v1677 = vmul.f32 %v1629, %v1629
    %v1678 = vmul.f32 %v1630, %v1630
    %v1679 = vmul.f32 %v1631, %v1631
    %v1680 = vmul.f32 %v1632, %v1632
    %v1681 = vmul.f32 %v1633, %v1633
    %v1682 = vmul.f32 %v1634, %v1634
    %v1683 = vmul.f32 %v1635, %v1635
    %v1684 = vmul.f32 %v1636, %v1636
    %v1685 = vmul.f32 %v1637, %v1637
    %v1686 = vsub.f32 %v1654, %v1670
    %v1687 = vsub.f32 %v1655, %v1671
    %v1688 = vsub.f32 %v1656, %v1672
    %v1689 = vsub.f32 %v1657, %v1673
    %v1690 = vsub.f32 %v1658, %v1674
    %v1691 = vsub.f32 %v1659, %v1675
    %v1692 = vsub.f32 %v1660, %v1676
    %v1693 = vsub.f32 %v1661, %v1677
    %v1694 = vsub.f32 %v1662, %v1678
    %v1695 = vsub.f32 %v1663, %v1679
    %v1696 = vsub.f32 %v1664, %v1680
    %v1697 = vsub.f32 %v1665, %v1681
    %v1698 = vsub.f32 %v1666, %v1682
    %v1699 = vsub.f32 %v1667, %v1683
    %v1700 = vsub.f32 %v1668, %v1684
    %v1701 = vsub.f32 %v1669, %v1685
    %1702 = vst.msk [vmem:[%s13] sm:$0xff] %vm1490, %v1622
    %1703 = vst.msk [vmem:[%s13 + $0x8] sm:$0xff] %vm1490, %v1623
    %1704 = vst.msk [vmem:[%s13 + $0x10] sm:$0xff] %vm1490, %v1624
    %1705 = vst.msk [vmem:[%s13 + $0x18] sm:$0xff] %vm1490, %v1625
    %1706 = vst.msk [vmem:[%s13 + $0x20] sm:$0xff] %vm1490, %v1626
    %1707 = vst.msk [vmem:[%s13 + $0x28] sm:$0xff] %vm1490, %v1627
    %1708 = vst.msk [vmem:[%s13 + $0x30] sm:$0xff] %vm1490, %v1628
    %1709 = vst.msk [vmem:[%s13 + $0x38] sm:$0xff] %vm1490, %v1629
    %1710 = vst.msk [vmem:[%s13 + $0x40] sm:$0xff] %vm1490, %v1630
    %1711 = vst.msk [vmem:[%s13 + $0x48] sm:$0xff] %vm1490, %v1631
    %1712 = vst.msk [vmem:[%s13 + $0x50] sm:$0xff] %vm1490, %v1632
    %1713 = vst.msk [vmem:[%s13 + $0x58] sm:$0xff] %vm1490, %v1633
    %1714 = vst.msk [vmem:[%s13 + $0x60] sm:$0xff] %vm1490, %v1634
    %1715 = vst.msk [vmem:[%s13 + $0x68] sm:$0xff] %vm1490, %v1635
    %1716 = vst.msk [vmem:[%s13 + $0x70] sm:$0xff] %vm1490, %v1636
    %1717 = vst.msk [vmem:[%s13 + $0x78] sm:$0xff] %vm1490, %v1637
    %v1718 = vadd.f32 %v1686, 1e-05
    %v1719 = vadd.f32 %v1687, 1e-05
    %v1720 = vadd.f32 %v1688, 1e-05
    %v1721 = vadd.f32 %v1689, 1e-05
    %v1722 = vadd.f32 %v1690, 1e-05
    %v1723 = vadd.f32 %v1691, 1e-05
    %v1724 = vadd.f32 %v1692, 1e-05
    %v1725 = vadd.f32 %v1693, 1e-05
    %v1726 = vadd.f32 %v1694, 1e-05
    %v1727 = vadd.f32 %v1695, 1e-05
    %v1728 = vadd.f32 %v1696, 1e-05
    %v1729 = vadd.f32 %v1697, 1e-05
    %v1730 = vadd.f32 %v1698, 1e-05
    %v1731 = vadd.f32 %v1699, 1e-05
    %v1732 = vadd.f32 %v1700, 1e-05
    %v1733 = vadd.f32 %v1701, 1e-05
    %v1734 = vrsqrt.pop %v1718
    %v1735 = vmul.f32 %v1734, %v1718
    %v1736 = vmul.f32 %v1735, %v1734
    %v1737 = vmul.f32 0.5, %v1736
    %v1738 = vsub.f32 1.5, %v1737
    %v1739 = vmul.f32 %v1734, %v1738
    %vm1740 = vweird.f32 %v1718
    %vm1741 = vweird.f32 %v1734
    %vm1742 = vmor %vm1740, %vm1741
    %v1743 = vsel %vm1742, %v1734, %v1739
    %v1744 = vrsqrt.pop %v1719
    %v1745 = vmul.f32 %v1744, %v1719
    %v1746 = vmul.f32 %v1745, %v1744
    %v1747 = vmul.f32 0.5, %v1746
    %v1748 = vsub.f32 1.5, %v1747
    %v1749 = vmul.f32 %v1744, %v1748
    %vm1750 = vweird.f32 %v1719
    %vm1751 = vweird.f32 %v1744
    %vm1752 = vmor %vm1750, %vm1751
    %v1753 = vsel %vm1752, %v1744, %v1749
    %v1754 = vrsqrt.pop %v1720
    %v1755 = vmul.f32 %v1754, %v1720
    %v1756 = vmul.f32 %v1755, %v1754
    %v1757 = vmul.f32 0.5, %v1756
    %v1758 = vsub.f32 1.5, %v1757
    %v1759 = vmul.f32 %v1754, %v1758
    %vm1760 = vweird.f32 %v1720
    %vm1761 = vweird.f32 %v1754
    %vm1762 = vmor %vm1760, %vm1761
    %v1763 = vsel %vm1762, %v1754, %v1759
    %v1764 = vrsqrt.pop %v1721
    %v1765 = vmul.f32 %v1764, %v1721
    %v1766 = vmul.f32 %v1765, %v1764
    %v1767 = vmul.f32 0.5, %v1766
    %v1768 = vsub.f32 1.5, %v1767
    %v1769 = vmul.f32 %v1764, %v1768
    %vm1770 = vweird.f32 %v1721
    %vm1771 = vweird.f32 %v1764
    %vm1772 = vmor %vm1770, %vm1771
    %v1773 = vsel %vm1772, %v1764, %v1769
    %v1774 = vrsqrt.pop %v1722
    %v1775 = vmul.f32 %v1774, %v1722
    %v1776 = vmul.f32 %v1775, %v1774
    %v1777 = vmul.f32 0.5, %v1776
    %v1778 = vsub.f32 1.5, %v1777
    %v1779 = vmul.f32 %v1774, %v1778
    %vm1780 = vweird.f32 %v1722
    %vm1781 = vweird.f32 %v1774
    %vm1782 = vmor %vm1780, %vm1781
    %v1783 = vsel %vm1782, %v1774, %v1779
    %v1784 = vrsqrt.pop %v1723
    %v1785 = vmul.f32 %v1784, %v1723
    %v1786 = vmul.f32 %v1785, %v1784
    %v1787 = vmul.f32 0.5, %v1786
    %v1788 = vsub.f32 1.5, %v1787
    %v1789 = vmul.f32 %v1784, %v1788
    %vm1790 = vweird.f32 %v1723
    %vm1791 = vweird.f32 %v1784
    %vm1792 = vmor %vm1790, %vm1791
    %v1793 = vsel %vm1792, %v1784, %v1789
    %v1794 = vrsqrt.pop %v1724
    %v1795 = vmul.f32 %v1794, %v1724
    %v1796 = vmul.f32 %v1795, %v1794
    %v1797 = vmul.f32 0.5, %v1796
    %v1798 = vsub.f32 1.5, %v1797
    %v1799 = vmul.f32 %v1794, %v1798
    %vm1800 = vweird.f32 %v1724
    %vm1801 = vweird.f32 %v1794
    %vm1802 = vmor %vm1800, %vm1801
    %v1803 = vsel %vm1802, %v1794, %v1799
    %v1804 = vrsqrt.pop %v1725
    %v1805 = vmul.f32 %v1804, %v1725
    %v1806 = vmul.f32 %v1805, %v1804
    %v1807 = vmul.f32 0.5, %v1806
    %v1808 = vsub.f32 1.5, %v1807
    %v1809 = vmul.f32 %v1804, %v1808
    %vm1810 = vweird.f32 %v1725
    %vm1811 = vweird.f32 %v1804
    %vm1812 = vmor %vm1810, %vm1811
    %v1813 = vsel %vm1812, %v1804, %v1809
    %v1814 = vrsqrt.pop %v1726
    %v1815 = vmul.f32 %v1814, %v1726
    %v1816 = vmul.f32 %v1815, %v1814
    %v1817 = vmul.f32 0.5, %v1816
    %v1818 = vsub.f32 1.5, %v1817
    %v1819 = vmul.f32 %v1814, %v1818
    %vm1820 = vweird.f32 %v1726
    %vm1821 = vweird.f32 %v1814
    %vm1822 = vmor %vm1820, %vm1821
    %v1823 = vsel %vm1822, %v1814, %v1819
    %v1824 = vrsqrt.pop %v1727
    %v1825 = vmul.f32 %v1824, %v1727
    %v1826 = vmul.f32 %v1825, %v1824
    %v1827 = vmul.f32 0.5, %v1826
    %v1828 = vsub.f32 1.5, %v1827
    %v1829 = vmul.f32 %v1824, %v1828
    %vm1830 = vweird.f32 %v1727
    %vm1831 = vweird.f32 %v1824
    %vm1832 = vmor %vm1830, %vm1831
    %v1833 = vsel %vm1832, %v1824, %v1829
    %v1834 = vrsqrt.pop %v1728
    %v1835 = vmul.f32 %v1834, %v1728
    %v1836 = vmul.f32 %v1835, %v1834
    %v1837 = vmul.f32 0.5, %v1836
    %v1838 = vsub.f32 1.5, %v1837
    %v1839 = vmul.f32 %v1834, %v1838
    %vm1840 = vweird.f32 %v1728
    %vm1841 = vweird.f32 %v1834
    %vm1842 = vmor %vm1840, %vm1841
    %v1843 = vsel %vm1842, %v1834, %v1839
    %v1844 = vrsqrt.pop %v1729
    %v1845 = vmul.f32 %v1844, %v1729
    %v1846 = vmul.f32 %v1845, %v1844
    %v1847 = vmul.f32 0.5, %v1846
    %v1848 = vsub.f32 1.5, %v1847
    %v1849 = vmul.f32 %v1844, %v1848
    %vm1850 = vweird.f32 %v1729
    %vm1851 = vweird.f32 %v1844
    %vm1852 = vmor %vm1850, %vm1851
    %v1853 = vsel %vm1852, %v1844, %v1849
    %v1854 = vrsqrt.pop %v1730
    %v1855 = vmul.f32 %v1854, %v1730
    %v1856 = vmul.f32 %v1855, %v1854
    %v1857 = vmul.f32 0.5, %v1856
    %v1858 = vsub.f32 1.5, %v1857
    %v1859 = vmul.f32 %v1854, %v1858
    %vm1860 = vweird.f32 %v1730
    %vm1861 = vweird.f32 %v1854
    %vm1862 = vmor %vm1860, %vm1861
    %v1863 = vsel %vm1862, %v1854, %v1859
    %v1864 = vrsqrt.pop %v1731
    %v1865 = vmul.f32 %v1864, %v1731
    %v1866 = vmul.f32 %v1865, %v1864
    %v1867 = vmul.f32 0.5, %v1866
    %v1868 = vsub.f32 1.5, %v1867
    %v1869 = vmul.f32 %v1864, %v1868
    %vm1870 = vweird.f32 %v1731
    %vm1871 = vweird.f32 %v1864
    %vm1872 = vmor %vm1870, %vm1871
    %v1873 = vsel %vm1872, %v1864, %v1869
    %v1874 = vrsqrt.pop %v1732
    %v1875 = vmul.f32 %v1874, %v1732
    %v1876 = vmul.f32 %v1875, %v1874
    %v1877 = vmul.f32 0.5, %v1876
    %v1878 = vsub.f32 1.5, %v1877
    %v1879 = vmul.f32 %v1874, %v1878
    %vm1880 = vweird.f32 %v1732
    %vm1881 = vweird.f32 %v1874
    %vm1882 = vmor %vm1880, %vm1881
    %v1883 = vsel %vm1882, %v1874, %v1879
    %v1884 = vrsqrt.pop %v1733
    %v1885 = vmul.f32 %v1884, %v1733
    %v1886 = vmul.f32 %v1885, %v1884
    %v1887 = vmul.f32 0.5, %v1886
    %v1888 = vsub.f32 1.5, %v1887
    %v1889 = vmul.f32 %v1884, %v1888
    %vm1890 = vweird.f32 %v1733
    %vm1891 = vweird.f32 %v1884
    %vm1892 = vmor %vm1890, %vm1891
    %v1893 = vsel %vm1892, %v1884, %v1889
    %1894 = vst.msk [vmem:[%s14] sm:$0xff] %vm1490, %v1743
    %1895 = vst.msk [vmem:[%s14 + $0x8] sm:$0xff] %vm1490, %v1753
    %1896 = vst.msk [vmem:[%s14 + $0x10] sm:$0xff] %vm1490, %v1763
    %1897 = vst.msk [vmem:[%s14 + $0x18] sm:$0xff] %vm1490, %v1773
    %1898 = vst.msk [vmem:[%s14 + $0x20] sm:$0xff] %vm1490, %v1783
    %1899 = vst.msk [vmem:[%s14 + $0x28] sm:$0xff] %vm1490, %v1793
    %1900 = vst.msk [vmem:[%s14 + $0x30] sm:$0xff] %vm1490, %v1803
    %1901 = vst.msk [vmem:[%s14 + $0x38] sm:$0xff] %vm1490, %v1813
    %1902 = vst.msk [vmem:[%s14 + $0x40] sm:$0xff] %vm1490, %v1823
    %1903 = vst.msk [vmem:[%s14 + $0x48] sm:$0xff] %vm1490, %v1833
    %1904 = vst.msk [vmem:[%s14 + $0x50] sm:$0xff] %vm1490, %v1843
    %1905 = vst.msk [vmem:[%s14 + $0x58] sm:$0xff] %vm1490, %v1853
    %1906 = vst.msk [vmem:[%s14 + $0x60] sm:$0xff] %vm1490, %v1863
    %1907 = vst.msk [vmem:[%s14 + $0x68] sm:$0xff] %vm1490, %v1873
    %1908 = vst.msk [vmem:[%s14 + $0x70] sm:$0xff] %vm1490, %v1883
    %1909 = vst.msk [vmem:[%s14 + $0x78] sm:$0xff] %vm1490, %v1893
  $region49: #{alternate_weave_layer.2} parent=0 // pred_fallthru
    _
  // Predicated region
  $region50: #{alternate_weave_layer.2} parent=0 // pred_check
    _
  $region51: #{alternate_weave_layer.2} parent=0 // pred_check_branch
    %1911 = sbr.rel (0) target = $region53
  $region52: #{alternate_weave_layer.2} parent=0 // pred_region
    _
  $region53: #{alternate_weave_layer.2} parent=0 // pred_fallthru
    _
  // Predicated region
  $region54: #{alternate_weave_layer.2} parent=0 // pred_check
    _
  $region55: #{alternate_weave_layer.2} parent=0 // pred_check_branch
    %1913 = sbr.rel (0) target = $region57
  $region56: #{alternate_weave_layer.2} parent=0 // pred_region
    _
  $region57: #{alternate_weave_layer.2} parent=0 // pred_fallthru
    _
  // Predicated region
  $region58: #{alternate_weave_layer.2} parent=0 // pred_check
    _
  $region59: #{alternate_weave_layer.2} parent=0 // pred_check_branch
    %1915 = sbr.rel (0) target = $region61
  $region60: #{alternate_weave_layer.2} parent=0 // pred_region
    _
  $region61: #{alternate_weave_layer.2} parent=0 // pred_fallthru
    _
  // Predicated region
  $region62: #{alternate_weave_layer.2} parent=0 // pred_check
    _
  $region63: #{alternate_weave_layer.2} parent=0 // pred_check_branch
    %1917 = sbr.rel (0) target = $region65
  $region64: #{alternate_weave_layer.2} parent=0 // pred_region
    _
  $region65: #{alternate_weave_layer.2} parent=0 // pred_fallthru
    _
  // Predicated region
  $region66: #{alternate_weave_layer.2} parent=0 // pred_check
    _
  $region67: #{alternate_weave_layer.2} parent=0 // pred_check_branch
    %1919 = sbr.rel (0) target = $region69
  $region68: #{alternate_weave_layer.2} parent=0 // pred_region
    _
  $region69: #{alternate_weave_layer.2} parent=0 // pred_fallthru
    _
  // Predicated region
  $region70: #{alternate_weave_layer.2} parent=0 // pred_check
    _
  $region71: #{alternate_weave_layer.2} parent=0 // pred_check_branch
    %1921 = sbr.rel (0) target = $region73
  $region72: #{alternate_weave_layer.2} parent=0 // pred_region
    _
  $region73: #{alternate_weave_layer.2} parent=0 // pred_fallthru
    _
  // Predicated region
  $region74: #{alternate_weave_layer.2} parent=0 // pred_check
    _
  $region75: #{alternate_weave_layer.2} parent=0 // pred_check_branch
    %1923 = sbr.rel (0) target = $region77
  $region76: #{alternate_weave_layer.2} parent=0 // pred_region
    _
  $region77: #{alternate_weave_layer.2} parent=0 // pred_fallthru
    _
  // Predicated region
  $region78: #{alternate_weave_layer.2} parent=0 // pred_check
    _
  $region79: #{alternate_weave_layer.2} parent=0 // pred_check_branch
    %1925 = sbr.rel (0) target = $region81
  $region80: #{alternate_weave_layer.2} parent=0 // pred_region
    _
  $region81: #{alternate_weave_layer.2} parent=0 // pred_fallthru
    _
  // Predicated region
  $region82: #{alternate_weave_layer.2} parent=0 // pred_check
    _
  $region83: #{alternate_weave_layer.2} parent=0 // pred_check_branch
    %1927 = sbr.rel (0) target = $region85
  $region84: #{alternate_weave_layer.2} parent=0 // pred_region
    _
  $region85: #{alternate_weave_layer.2} parent=0 // pred_fallthru
    _
  // Predicated region
  $region86: #{alternate_weave_layer.2} parent=0 // pred_check
    _
  $region87: #{alternate_weave_layer.2} parent=0 // pred_check_branch
    %1929 = sbr.rel (0) target = $region89
  $region88: #{alternate_weave_layer.2} parent=0 // pred_region
    _
  $region89: #{alternate_weave_layer.2} parent=0 // pred_fallthru
    _

</llo_original>
